<compile_context>
chip_gen: v7x
topology: tpu7x:2x2x1
jax: 0.10.0
libtpu: 0.0.40
codegen_flags: <defaults>
</compile_context>

<pallas_src>
import math

import numpy as np
import jax
import jax.numpy as jnp
from jax.experimental import pallas as pl
from jax.experimental.pallas import tpu as pltpu

# -----------------------------------------------------------------------------
# Model configuration (synthetic, deterministic parameters)
# -----------------------------------------------------------------------------
IMG_SIZE = (32, 32)
NUM_CLASSES = 3                       # background + 2 classes
NUM_REJECTION_CLASSES = 2
ASPECT_RATIOS = [[2], [2, 3]]         # -> anchors per location = [4, 6]
NUM_ANCHORS = [2 + 2 * len(r) for r in ASPECT_RATIOS]
OUT_CHANNELS = [16, 32]

_PACK_ORDER = ("s1", "w1", "b1", "s2", "w2", "b2",
               "sh1", "wc1", "bc1", "wr1", "br1",
               "sh2", "wc2", "bc2", "wr2", "br2",
               "prow", "wrej", "brej")


# -----------------------------------------------------------------------------
# The fused Pallas kernel: whole forward in one invocation, all operands in VMEM
# -----------------------------------------------------------------------------
def _cfssd_fused_kernel(
        x0_ref,
        s1_ref, w1_ref, b1_ref,
        s2_ref, w2_ref, b2_ref,
        sh1_ref, wc1_ref, bc1_ref, wr1_ref, br1_ref,
        sh2_ref, wc2_ref, bc2_ref, wr2_ref, br2_ref,
        prow_ref, wrej_ref, brej_ref,
        cls1_ref, reg1_ref, cls2_ref, reg2_ref, rej_ref):
    f32 = jnp.float32
    bf16 = jnp.bfloat16

    def conv_layer(x_b, s_ref, w_ref, b_ref, relu):
        rows = s_ref.shape[1]
        cols = w_ref.shape[2]
        acc = jnp.zeros((rows, cols), f32)
        for ky in range(3):                      # unrolled, 3 tap rows
            t = jnp.dot(s_ref[ky], x_b, preferred_element_type=f32)
            acc = acc + jnp.dot(t.astype(bf16), w_ref[ky],
                                preferred_element_type=f32)
        acc = acc + b_ref[...]
        if relu:
            acc = jnp.maximum(acc, 0.0)
        return acc

    def head_layer(x_b, s_ref, wc_ref, bc_ref, wr_ref, br_ref):
        rows = s_ref.shape[1]
        c_acc = jnp.zeros((rows, wc_ref.shape[2]), f32)
        r_acc = jnp.zeros((rows, wr_ref.shape[2]), f32)
        for ky in range(3):
            t = jnp.dot(s_ref[ky], x_b, preferred_element_type=f32).astype(bf16)
            c_acc = c_acc + jnp.dot(t, wc_ref[ky], preferred_element_type=f32)
            r_acc = r_acc + jnp.dot(t, wr_ref[ky], preferred_element_type=f32)
        return c_acc + bc_ref[...], r_acc + br_ref[...]

    # ---- backbone (f1, f2 stay resident in VMEM/vregs) ----------------------
    x0 = x0_ref[...]                                       # (N*32, 32*3) bf16
    f1 = conv_layer(x0, s1_ref, w1_ref, b1_ref, relu=True)    # (N*16, 16*16) f32
    f1b = f1.astype(bf16)
    f2 = conv_layer(f1b, s2_ref, w2_ref, b2_ref, relu=True)   # (N*8, 8*32) f32
    f2b = f2.astype(bf16)

    # ---- SSD head: cls + reg for both feature maps ---------------------------
    c1, r1 = head_layer(f1b, sh1_ref, wc1_ref, bc1_ref, wr1_ref, br1_ref)
    cls1_ref[...] = c1
    reg1_ref[...] = r1

    c2, r2 = head_layer(f2b, sh2_ref, wc2_ref, bc2_ref, wr2_ref, br2_ref)
    cls2_ref[...] = c2
    reg2_ref[...] = r2

    # ---- rejection head: GAP (pooling matmul) + linear -----------------------
    pooled = jnp.dot(prow_ref[...], f2b, preferred_element_type=f32)  # (N, 8*32)
    rej = jnp.dot(pooled.astype(bf16), wrej_ref[...],
                  preferred_element_type=f32) + brej_ref[...]
    rej_ref[...] = rej


# -----------------------------------------------------------------------------
# One-time parameter packing (setup cost, NOT per-forward glue)
# -----------------------------------------------------------------------------
def pack_params(params, batch_size):
    """Pack conv weights into the (row-selection, banded-weight, bias-row)
    matrices consumed by the fused kernel.  Depends on the batch size (the row
    selection matrices are block-diagonal over images)."""

    def to_np(a):
        return np.asarray(a, dtype=np.float32)

    def row_select(n, h_out, h_in, stride):
        # s[ky, n*h_out+yo, n*h_in+yi] = 1  iff  yi == stride*yo + ky - 1 (pad=1)
        s = np.zeros((3, n * h_out, n * h_in), np.float32)
        for ky in range(3):
            for b in range(n):
                for yo in range(h_out):
                    yi = stride * yo + ky - 1
                    if 0 <= yi < h_in:
                        s[ky, b * h_out + yo, b * h_in + yi] = 1.0
        return s

    def col_weight(w, w_out, w_in, stride):
        # banded matrix: block w[ky,kx] at rows xi*cin, cols xo*cout, xi=s*xo+kx-1
        w = to_np(w)                                   # (3, 3, cin, cout)
        cin, cout = w.shape[2], w.shape[3]
        m = np.zeros((3, w_in * cin, w_out * cout), np.float32)
        for ky in range(3):
            for xo in range(w_out):
                for kx in range(3):
                    xi = stride * xo + kx - 1
                    if 0 <= xi < w_in:
                        m[ky, xi * cin:(xi + 1) * cin,
                          xo * cout:(xo + 1) * cout] += w[ky, kx]
        return m

    def bias_row(b, w_out):
        return np.tile(to_np(b), w_out).reshape(1, -1)

    H0, W0 = IMG_SIZE
    H1, W1 = H0 // 2, W0 // 2
    H2, W2 = H1 // 2, W1 // 2
    n = batch_size

    packed = {
        # backbone
        "s1": row_select(n, H1, H0, 2),
        "w1": col_weight(params["conv1_w"], W1, W0, 2),
        "b1": bias_row(params["conv1_b"], W1),
        "s2": row_select(n, H2, H1, 2),
        "w2": col_weight(params["conv2_w"], W2, W1, 2),
        "b2": bias_row(params["conv2_b"], W2),
        # SSD head, feature map 1
        "sh1": row_select(n, H1, H1, 1),
        "wc1": col_weight(params["cls_w"][0], W1, W1, 1),
        "bc1": bias_row(params["cls_b"][0], W1),
        "wr1": col_weight(params["reg_w"][0], W1, W1, 1),
        "br1": bias_row(params["reg_b"][0], W1),
        # SSD head, feature map 2
        "sh2": row_select(n, H2, H2, 1),
        "wc2": col_weight(params["cls_w"][1], W2, W2, 1),
        "bc2": bias_row(params["cls_b"][1], W2),
        "wr2": col_weight(params["reg_w"][1], W2, W2, 1),
        "br2": bias_row(params["reg_b"][1], W2),
    }

    # rejection head: GAP as (per-image row mean) then (column-group mean fused
    # into the pre-tiled rejection weight).
    prow = np.zeros((n, n * H2), np.float32)
    for b in range(n):
        prow[b, b * H2:(b + 1) * H2] = 1.0 / H2
    wrej = np.tile(to_np(params["rej_w"]), (W2, 1)) / W2       # (W2*C2, R)
    packed["prow"] = prow
    packed["wrej"] = wrej
    packed["brej"] = to_np(params["rej_b"]).reshape(1, -1)

    out = {}
    for k, v in packed.items():
        if k.startswith("b"):                                  # bias rows stay f32
            out[k] = jnp.asarray(v, dtype=jnp.float32)
        else:                                                  # matmul operands bf16
            out[k] = jnp.asarray(v, dtype=jnp.bfloat16)
    return out


# -----------------------------------------------------------------------------
# Anchors: torchvision-style DefaultBoxGenerator (pure constant math)
# -----------------------------------------------------------------------------
def generate_default_boxes(feature_sizes, aspect_ratios, img_size):
    k = len(feature_sizes)
    min_r, max_r = 0.15, 0.9
    if k > 1:
        scales = [min_r + (max_r - min_r) * i / (k - 1) for i in range(k)] + [1.0]
    else:
        scales = [min_r, max_r, 1.0]

    H, W = img_size
    all_boxes = []
    for idx, ((fh, fw), ars) in enumerate(zip(feature_sizes, aspect_ratios)):
        sk = scales[idx]
        sk_prime = math.sqrt(sk * scales[idx + 1])
        wh = [(sk, sk), (sk_prime, sk_prime)]
        for ar in ars:
            sq = math.sqrt(ar)
            wh.append((sk * sq, sk / sq))
            wh.append((sk / sq, sk * sq))
        wh = np.clip(np.array(wh, dtype=np.float32), 0.0, 1.0)
        cx = (np.arange(fw, dtype=np.float32) + 0.5) / fw
        cy = (np.arange(fh, dtype=np.float32) + 0.5) / fh
        cyv, cxv = np.meshgrid(cy, cx, indexing="ij")
        centers = np.stack([cxv.ravel(), cyv.ravel()], axis=-1)     # (fh*fw, 2)
        A = wh.shape[0]
        centers = np.repeat(centers, A, axis=0)
        whs = np.tile(wh, (fh * fw, 1))
        boxes = np.concatenate([centers, whs], axis=-1)             # cxcywh, rel
        all_boxes.append(boxes)
    dboxes = np.concatenate(all_boxes, axis=0)
    x1 = (dboxes[:, 0] - 0.5 * dboxes[:, 2]) * W
    y1 = (dboxes[:, 1] - 0.5 * dboxes[:, 3]) * H
    x2 = (dboxes[:, 0] + 0.5 * dboxes[:, 2]) * W
    y2 = (dboxes[:, 1] + 0.5 * dboxes[:, 3]) * H
    return jnp.asarray(np.stack([x1, y1, x2, y2], axis=-1), dtype=jnp.float32)


# -----------------------------------------------------------------------------
# Parameters
# -----------------------------------------------------------------------------
def init_params(key):
    def w_init(k, shape, scale=0.05):
        return scale * jax.random.normal(k, shape, dtype=jnp.float32)

    ks = jax.random.split(key, 16)
    A1, A2 = NUM_ANCHORS
    return {
        "conv1_w": w_init(ks[0], (3, 3, 3, OUT_CHANNELS[0])),
        "conv1_b": w_init(ks[1], (OUT_CHANNELS[0],), 0.02),
        "conv2_w": w_init(ks[2], (3, 3, OUT_CHANNELS[0], OUT_CHANNELS[1])),
        "conv2_b": w_init(ks[3], (OUT_CHANNELS[1],), 0.02),
        "cls_w": [w_init(ks[4], (3, 3, OUT_CHANNELS[0], A1 * NUM_CLASSES)),
                  w_init(ks[5], (3, 3, OUT_CHANNELS[1], A2 * NUM_CLASSES))],
        "cls_b": [w_init(ks[6], (A1 * NUM_CLASSES,), 0.02),
                  w_init(ks[7], (A2 * NUM_CLASSES,), 0.02)],
        "reg_w": [w_init(ks[8], (3, 3, OUT_CHANNELS[0], A1 * 4)),
                  w_init(ks[9], (3, 3, OUT_CHANNELS[1], A2 * 4))],
        "reg_b": [w_init(ks[10], (A1 * 4,), 0.02),
                  w_init(ks[11], (A2 * 4,), 0.02)],
        "rej_w": w_init(ks[12], (OUT_CHANNELS[1], NUM_REJECTION_CLASSES)),
        "rej_b": w_init(ks[13], (NUM_REJECTION_CLASSES,), 0.02),
    }


# -----------------------------------------------------------------------------
# Forward (targets=None): one pallas_call + minimal input/output glue
# -----------------------------------------------------------------------------
def cfssd_forward(images_nchw, packed):
    N = images_nchw.shape[0]
    H0, W0 = IMG_SIZE
    H1, W1 = H0 // 2, W0 // 2
    H2, W2 = H1 // 2, W1 // 2
    A1, A2 = NUM_ANCHORS
    C = NUM_CLASSES

    # image to (N*H0, W0*3) bf16 (rows=(n,y), cols=(x,c))
    x0 = jnp.transpose(images_nchw, (0, 2, 3, 1)).reshape(N * H0, W0 * 3)
    x0 = x0.astype(jnp.bfloat16)

    out_shape = (
        jax.ShapeDtypeStruct((N * H1, W1 * A1 * C), jnp.float32),   # cls map 1
        jax.ShapeDtypeStruct((N * H1, W1 * A1 * 4), jnp.float32),   # reg map 1
        jax.ShapeDtypeStruct((N * H2, W2 * A2 * C), jnp.float32),   # cls map 2
        jax.ShapeDtypeStruct((N * H2, W2 * A2 * 4), jnp.float32),   # reg map 2
        jax.ShapeDtypeStruct((N, NUM_REJECTION_CLASSES), jnp.float32),
    )
    operands = [x0] + [packed[k] for k in _PACK_ORDER]
    cls1, reg1, cls2, reg2, rejection_logits = pl.pallas_call(
        _cfssd_fused_kernel,
        out_shape=out_shape,
        compiler_params=pltpu.CompilerParams(vmem_limit_bytes=32 * 1024 * 1024),
    )(*operands)

    # final layouts: (N, H*W*A, C) per map, concatenated across maps
    cls_logits = jnp.concatenate(
        [cls1.reshape(N, H1 * W1 * A1, C), cls2.reshape(N, H2 * W2 * A2, C)], axis=1)
    bbox_regression = jnp.concatenate(
        [reg1.reshape(N, H1 * W1 * A1, 4), reg2.reshape(N, H2 * W2 * A2, 4)], axis=1)

    anchors_single = generate_default_boxes([(H1, W1), (H2, W2)],
                                            ASPECT_RATIOS, IMG_SIZE)
    anchors = [anchors_single for _ in range(N)]

    # forward(images, targets=None) -> (bbox_regression, cls_logits,
    #                                   rejection_logits, anchors)
    return bbox_regression, cls_logits, rejection_logits, anchors

# TODO(synk): compute_loss / SSDMatcher / predict-time softmax+NMS are only
# used when targets are provided or in .predict(); not part of this forward.


# -----------------------------------------------------------------------------
# Pure-JAX f32 reference (for numerical validation of the fused kernel)
# -----------------------------------------------------------------------------
def reference_forward(images_nchw, params):
    x = jnp.transpose(images_nchw, (0, 2, 3, 1)).astype(jnp.float32)

    def conv(x, w, b, s):
        y = jax.lax.conv_general_dilated(
            x, w, (s, s), ((1, 1), (1, 1)),
            dimension_numbers=("NHWC", "HWIO", "NHWC"))
        return y + b

    n = x.shape[0]
    f1 = jax.nn.relu(conv(x, params["conv1_w"], params["conv1_b"], 2))
    f2 = jax.nn.relu(conv(f1, params["conv2_w"], params["conv2_b"], 2))
    c1 = conv(f1, params["cls_w"][0], params["cls_b"][0], 1).reshape(n, -1, NUM_CLASSES)
    r1 = conv(f1, params["reg_w"][0], params["reg_b"][0], 1).reshape(n, -1, 4)
    c2 = conv(f2, params["cls_w"][1], params["cls_b"][1], 1).reshape(n, -1, NUM_CLASSES)
    r2 = conv(f2, params["reg_w"][1], params["reg_b"][1], 1).reshape(n, -1, 4)
    cls = jnp.concatenate([c1, c2], axis=1)
    reg = jnp.concatenate([r1, r2], axis=1)
    rej = jnp.mean(f2, axis=(1, 2)) @ params["rej_w"] + params["rej_b"]
    return reg, cls, rej


# -----------------------------------------------------------------------------
if __name__ == "__main__":
    key = jax.random.PRNGKey(0)
    pkey, xkey = jax.random.split(key)
    params = init_params(pkey)

    images = jax.random.normal(xkey, (2, 3, IMG_SIZE[0], IMG_SIZE[1]),
                               dtype=jnp.float32)               # NCHW

    packed = pack_params(params, batch_size=images.shape[0])    # one-time setup
    fwd = jax.jit(cfssd_forward)

    bbox_reg, cls_logits, rej_logits, anchors = fwd(images, packed)
    jax.block_until_ready((bbox_reg, cls_logits, rej_logits, anchors[0]))

    # --- shape checks ---------------------------------------------------------
    total_anchors = 16 * 16 * NUM_ANCHORS[0] + 8 * 8 * NUM_ANCHORS[1]   # 1408
    assert bbox_reg.shape == (2, total_anchors, 4)
    assert cls_logits.shape == (2, total_anchors, NUM_CLASSES)
    assert rej_logits.shape == (2, NUM_REJECTION_CLASSES)
    assert len(anchors) == 2 and anchors[0].shape == (total_anchors, 4)

    # --- numerical check vs pure-JAX f32 reference (kernel uses bf16 operands,
    #     f32 accumulation -> ~1e-2 level agreement expected) -------------------
    ref_reg, ref_cls, ref_rej = reference_forward(images, params)
    np.testing.assert_allclose(np.asarray(bbox_reg), np.asarray(ref_reg),
                               rtol=5e-2, atol=3e-2)
    np.testing.assert_allclose(np.asarray(cls_logits), np.asarray(ref_cls),
                               rtol=5e-2, atol=3e-2)
    np.testing.assert_allclose(np.asarray(rej_logits), np.asarray(ref_rej),
                               rtol=5e-2, atol=3e-2)

    print("KERNEL_OK")
</pallas_src>

<mosaic_0001>
module attributes {stable_mosaic.version = 11 : i64} {
  func.func @_cfssd_fused_kernel(%arg0: memref<64x96xbf16, #tpu.memory_space<vmem>>, %arg1: memref<3x32x64xbf16, #tpu.memory_space<vmem>>, %arg2: memref<3x96x256xbf16, #tpu.memory_space<vmem>>, %arg3: memref<1x256xf32, #tpu.memory_space<vmem>>, %arg4: memref<3x16x32xbf16, #tpu.memory_space<vmem>>, %arg5: memref<3x256x256xbf16, #tpu.memory_space<vmem>>, %arg6: memref<1x256xf32, #tpu.memory_space<vmem>>, %arg7: memref<3x32x32xbf16, #tpu.memory_space<vmem>>, %arg8: memref<3x256x192xbf16, #tpu.memory_space<vmem>>, %arg9: memref<1x192xf32, #tpu.memory_space<vmem>>, %arg10: memref<3x256x256xbf16, #tpu.memory_space<vmem>>, %arg11: memref<1x256xf32, #tpu.memory_space<vmem>>, %arg12: memref<3x16x16xbf16, #tpu.memory_space<vmem>>, %arg13: memref<3x256x144xbf16, #tpu.memory_space<vmem>>, %arg14: memref<1x144xf32, #tpu.memory_space<vmem>>, %arg15: memref<3x256x192xbf16, #tpu.memory_space<vmem>>, %arg16: memref<1x192xf32, #tpu.memory_space<vmem>>, %arg17: memref<2x16xbf16, #tpu.memory_space<vmem>>, %arg18: memref<256x2xbf16, #tpu.memory_space<vmem>>, %arg19: memref<1x2xf32, #tpu.memory_space<vmem>>, %arg20: memref<32x192xf32, #tpu.memory_space<vmem>>, %arg21: memref<32x256xf32, #tpu.memory_space<vmem>>, %arg22: memref<16x144xf32, #tpu.memory_space<vmem>>, %arg23: memref<16x192xf32, #tpu.memory_space<vmem>>, %arg24: memref<2x2xf32, #tpu.memory_space<vmem>>) attributes {dimension_semantics = [], scalar_prefetch = 0 : i64, scratch_operands = 0 : i64, tpu.core_type = #tpu.core_type<tc>} {
    %c0 = arith.constant 0 : index
    %c0_0 = arith.constant 0 : index
    %0 = vector.load %arg0[%c0, %c0_0] : memref<64x96xbf16, #tpu.memory_space<vmem>>, vector<64x96xbf16>
    %cst = arith.constant 0.000000e+00 : f32
    %1 = vector.broadcast %cst : f32 to vector<32x256xf32>
    %c0_1 = arith.constant 0 : index
    %c0_2 = arith.constant 0 : index
    %c0_3 = arith.constant 0 : index
    %2 = vector.load %arg1[%c0_1, %c0_2, %c0_3] : memref<3x32x64xbf16, #tpu.memory_space<vmem>>, vector<1x32x64xbf16>
    %3 = vector.shape_cast %2 : vector<1x32x64xbf16> to vector<32x64xbf16>
    %cst_4 = arith.constant dense<0.000000e+00> : vector<32x96xf32>
    %4 = tpu.matmul %3, %0, %cst_4 {dimension_numbers = #tpu.dot_dimension_numbers<[1], [0], [0], [1], [0, 0, 1, 1], [], []>} : vector<32x64xbf16>, vector<64x96xbf16>, vector<32x96xf32> -> vector<32x96xf32>
    %5 = arith.truncf %4 : vector<32x96xf32> to vector<32x96xbf16>
    %c0_5 = arith.constant 0 : index
    %c0_6 = arith.constant 0 : index
    %c0_7 = arith.constant 0 : index
    %6 = vector.load %arg2[%c0_5, %c0_6, %c0_7] : memref<3x96x256xbf16, #tpu.memory_space<vmem>>, vector<1x96x256xbf16>
    %7 = vector.shape_cast %6 : vector<1x96x256xbf16> to vector<96x256xbf16>
    %cst_8 = arith.constant dense<0.000000e+00> : vector<32x256xf32>
    %8 = tpu.matmul %5, %7, %cst_8 {dimension_numbers = #tpu.dot_dimension_numbers<[1], [0], [0], [1], [0, 0, 1, 1], [], []>} : vector<32x96xbf16>, vector<96x256xbf16>, vector<32x256xf32> -> vector<32x256xf32>
    %9 = arith.addf %1, %8 : vector<32x256xf32>
    %c1 = arith.constant 1 : index
    %c0_9 = arith.constant 0 : index
    %c0_10 = arith.constant 0 : index
    %10 = vector.load %arg1[%c1, %c0_9, %c0_10] : memref<3x32x64xbf16, #tpu.memory_space<vmem>>, vector<1x32x64xbf16>
    %11 = vector.shape_cast %10 : vector<1x32x64xbf16> to vector<32x64xbf16>
    %cst_11 = arith.constant dense<0.000000e+00> : vector<32x96xf32>
    %12 = tpu.matmul %11, %0, %cst_11 {dimension_numbers = #tpu.dot_dimension_numbers<[1], [0], [0], [1], [0, 0, 1, 1], [], []>} : vector<32x64xbf16>, vector<64x96xbf16>, vector<32x96xf32> -> vector<32x96xf32>
    %13 = arith.truncf %12 : vector<32x96xf32> to vector<32x96xbf16>
    %c1_12 = arith.constant 1 : index
    %c0_13 = arith.constant 0 : index
    %c0_14 = arith.constant 0 : index
    %14 = vector.load %arg2[%c1_12, %c0_13, %c0_14] : memref<3x96x256xbf16, #tpu.memory_space<vmem>>, vector<1x96x256xbf16>
    %15 = vector.shape_cast %14 : vector<1x96x256xbf16> to vector<96x256xbf16>
    %cst_15 = arith.constant dense<0.000000e+00> : vector<32x256xf32>
    %16 = tpu.matmul %13, %15, %cst_15 {dimension_numbers = #tpu.dot_dimension_numbers<[1], [0], [0], [1], [0, 0, 1, 1], [], []>} : vector<32x96xbf16>, vector<96x256xbf16>, vector<32x256xf32> -> vector<32x256xf32>
    %17 = arith.addf %9, %16 : vector<32x256xf32>
    %c2 = arith.constant 2 : index
    %c0_16 = arith.constant 0 : index
    %c0_17 = arith.constant 0 : index
    %18 = vector.load %arg1[%c2, %c0_16, %c0_17] : memref<3x32x64xbf16, #tpu.memory_space<vmem>>, vector<1x32x64xbf16>
    %19 = vector.shape_cast %18 : vector<1x32x64xbf16> to vector<32x64xbf16>
    %cst_18 = arith.constant dense<0.000000e+00> : vector<32x96xf32>
    %20 = tpu.matmul %19, %0, %cst_18 {dimension_numbers = #tpu.dot_dimension_numbers<[1], [0], [0], [1], [0, 0, 1, 1], [], []>} : vector<32x64xbf16>, vector<64x96xbf16>, vector<32x96xf32> -> vector<32x96xf32>
    %21 = arith.truncf %20 : vector<32x96xf32> to vector<32x96xbf16>
    %c2_19 = arith.constant 2 : index
    %c0_20 = arith.constant 0 : index
    %c0_21 = arith.constant 0 : index
    %22 = vector.load %arg2[%c2_19, %c0_20, %c0_21] : memref<3x96x256xbf16, #tpu.memory_space<vmem>>, vector<1x96x256xbf16>
    %23 = vector.shape_cast %22 : vector<1x96x256xbf16> to vector<96x256xbf16>
    %cst_22 = arith.constant dense<0.000000e+00> : vector<32x256xf32>
    %24 = tpu.matmul %21, %23, %cst_22 {dimension_numbers = #tpu.dot_dimension_numbers<[1], [0], [0], [1], [0, 0, 1, 1], [], []>} : vector<32x96xbf16>, vector<96x256xbf16>, vector<32x256xf32> -> vector<32x256xf32>
    %25 = arith.addf %17, %24 : vector<32x256xf32>
    %c0_23 = arith.constant 0 : index
    %c0_24 = arith.constant 0 : index
    %26 = vector.load %arg3[%c0_23, %c0_24] : memref<1x256xf32, #tpu.memory_space<vmem>>, vector<1x256xf32>
    %27 = vector.broadcast %26 : vector<1x256xf32> to vector<32x256xf32>
    %28 = arith.addf %25, %27 : vector<32x256xf32>
    %cst_25 = arith.constant 0.000000e+00 : f32
    %29 = vector.broadcast %cst_25 : f32 to vector<32x256xf32>
    %30 = arith.maximumf %28, %29 : vector<32x256xf32>
    %31 = arith.truncf %30 : vector<32x256xf32> to vector<32x256xbf16>
    %cst_26 = arith.constant 0.000000e+00 : f32
    %32 = vector.broadcast %cst_26 : f32 to vector<16x256xf32>
    %c0_27 = arith.constant 0 : index
    %c0_28 = arith.constant 0 : index
    %c0_29 = arith.constant 0 : index
    %33 = vector.load %arg4[%c0_27, %c0_28, %c0_29] : memref<3x16x32xbf16, #tpu.memory_space<vmem>>, vector<1x16x32xbf16>
    %34 = vector.shape_cast %33 : vector<1x16x32xbf16> to vector<16x32xbf16>
    %cst_30 = arith.constant dense<0.000000e+00> : vector<16x256xf32>
    %35 = tpu.matmul %34, %31, %cst_30 {dimension_numbers = #tpu.dot_dimension_numbers<[1], [0], [0], [1], [0, 0, 1, 1], [], []>} : vector<16x32xbf16>, vector<32x256xbf16>, vector<16x256xf32> -> vector<16x256xf32>
    %36 = arith.truncf %35 : vector<16x256xf32> to vector<16x256xbf16>
    %c0_31 = arith.constant 0 : index
    %c0_32 = arith.constant 0 : index
    %c0_33 = arith.constant 0 : index
    %37 = vector.load %arg5[%c0_31, %c0_32, %c0_33] : memref<3x256x256xbf16, #tpu.memory_space<vmem>>, vector<1x256x256xbf16>
    %38 = vector.shape_cast %37 : vector<1x256x256xbf16> to vector<256x256xbf16>
    %cst_34 = arith.constant dense<0.000000e+00> : vector<16x256xf32>
    %39 = tpu.matmul %36, %38, %cst_34 {dimension_numbers = #tpu.dot_dimension_numbers<[1], [0], [0], [1], [0, 0, 1, 1], [], []>} : vector<16x256xbf16>, vector<256x256xbf16>, vector<16x256xf32> -> vector<16x256xf32>
    %40 = arith.addf %32, %39 : vector<16x256xf32>
    %c1_35 = arith.constant 1 : index
    %c0_36 = arith.constant 0 : index
    %c0_37 = arith.constant 0 : index
    %41 = vector.load %arg4[%c1_35, %c0_36, %c0_37] : memref<3x16x32xbf16, #tpu.memory_space<vmem>>, vector<1x16x32xbf16>
    %42 = vector.shape_cast %41 : vector<1x16x32xbf16> to vector<16x32xbf16>
    %cst_38 = arith.constant dense<0.000000e+00> : vector<16x256xf32>
    %43 = tpu.matmul %42, %31, %cst_38 {dimension_numbers = #tpu.dot_dimension_numbers<[1], [0], [0], [1], [0, 0, 1, 1], [], []>} : vector<16x32xbf16>, vector<32x256xbf16>, vector<16x256xf32> -> vector<16x256xf32>
    %44 = arith.truncf %43 : vector<16x256xf32> to vector<16x256xbf16>
    %c1_39 = arith.constant 1 : index
    %c0_40 = arith.constant 0 : index
    %c0_41 = arith.constant 0 : index
    %45 = vector.load %arg5[%c1_39, %c0_40, %c0_41] : memref<3x256x256xbf16, #tpu.memory_space<vmem>>, vector<1x256x256xbf16>
    %46 = vector.shape_cast %45 : vector<1x256x256xbf16> to vector<256x256xbf16>
    %cst_42 = arith.constant dense<0.000000e+00> : vector<16x256xf32>
    %47 = tpu.matmul %44, %46, %cst_42 {dimension_numbers = #tpu.dot_dimension_numbers<[1], [0], [0], [1], [0, 0, 1, 1], [], []>} : vector<16x256xbf16>, vector<256x256xbf16>, vector<16x256xf32> -> vector<16x256xf32>
    %48 = arith.addf %40, %47 : vector<16x256xf32>
    %c2_43 = arith.constant 2 : index
    %c0_44 = arith.constant 0 : index
    %c0_45 = arith.constant 0 : index
    %49 = vector.load %arg4[%c2_43, %c0_44, %c0_45] : memref<3x16x32xbf16, #tpu.memory_space<vmem>>, vector<1x16x32xbf16>
    %50 = vector.shape_cast %49 : vector<1x16x32xbf16> to vector<16x32xbf16>
    %cst_46 = arith.constant dense<0.000000e+00> : vector<16x256xf32>
    %51 = tpu.matmul %50, %31, %cst_46 {dimension_numbers = #tpu.dot_dimension_numbers<[1], [0], [0], [1], [0, 0, 1, 1], [], []>} : vector<16x32xbf16>, vector<32x256xbf16>, vector<16x256xf32> -> vector<16x256xf32>
    %52 = arith.truncf %51 : vector<16x256xf32> to vector<16x256xbf16>
    %c2_47 = arith.constant 2 : index
    %c0_48 = arith.constant 0 : index
    %c0_49 = arith.constant 0 : index
    %53 = vector.load %arg5[%c2_47, %c0_48, %c0_49] : memref<3x256x256xbf16, #tpu.memory_space<vmem>>, vector<1x256x256xbf16>
    %54 = vector.shape_cast %53 : vector<1x256x256xbf16> to vector<256x256xbf16>
    %cst_50 = arith.constant dense<0.000000e+00> : vector<16x256xf32>
    %55 = tpu.matmul %52, %54, %cst_50 {dimension_numbers = #tpu.dot_dimension_numbers<[1], [0], [0], [1], [0, 0, 1, 1], [], []>} : vector<16x256xbf16>, vector<256x256xbf16>, vector<16x256xf32> -> vector<16x256xf32>
    %56 = arith.addf %48, %55 : vector<16x256xf32>
    %c0_51 = arith.constant 0 : index
    %c0_52 = arith.constant 0 : index
    %57 = vector.load %arg6[%c0_51, %c0_52] : memref<1x256xf32, #tpu.memory_space<vmem>>, vector<1x256xf32>
    %58 = vector.broadcast %57 : vector<1x256xf32> to vector<16x256xf32>
    %59 = arith.addf %56, %58 : vector<16x256xf32>
    %cst_53 = arith.constant 0.000000e+00 : f32
    %60 = vector.broadcast %cst_53 : f32 to vector<16x256xf32>
    %61 = arith.maximumf %59, %60 : vector<16x256xf32>
    %62 = arith.truncf %61 : vector<16x256xf32> to vector<16x256xbf16>
    %cst_54 = arith.constant 0.000000e+00 : f32
    %63 = vector.broadcast %cst_54 : f32 to vector<32x192xf32>
    %cst_55 = arith.constant 0.000000e+00 : f32
    %64 = vector.broadcast %cst_55 : f32 to vector<32x256xf32>
    %c0_56 = arith.constant 0 : index
    %c0_57 = arith.constant 0 : index
    %c0_58 = arith.constant 0 : index
    %65 = vector.load %arg7[%c0_56, %c0_57, %c0_58] : memref<3x32x32xbf16, #tpu.memory_space<vmem>>, vector<1x32x32xbf16>
    %66 = vector.shape_cast %65 : vector<1x32x32xbf16> to vector<32x32xbf16>
    %cst_59 = arith.constant dense<0.000000e+00> : vector<32x256xf32>
    %67 = tpu.matmul %66, %31, %cst_59 {dimension_numbers = #tpu.dot_dimension_numbers<[1], [0], [0], [1], [0, 0, 1, 1], [], []>} : vector<32x32xbf16>, vector<32x256xbf16>, vector<32x256xf32> -> vector<32x256xf32>
    %68 = arith.truncf %67 : vector<32x256xf32> to vector<32x256xbf16>
    %c0_60 = arith.constant 0 : index
    %c0_61 = arith.constant 0 : index
    %c0_62 = arith.constant 0 : index
    %69 = vector.load %arg8[%c0_60, %c0_61, %c0_62] : memref<3x256x192xbf16, #tpu.memory_space<vmem>>, vector<1x256x192xbf16>
    %70 = vector.shape_cast %69 : vector<1x256x192xbf16> to vector<256x192xbf16>
    %cst_63 = arith.constant dense<0.000000e+00> : vector<32x192xf32>
    %71 = tpu.matmul %68, %70, %cst_63 {dimension_numbers = #tpu.dot_dimension_numbers<[1], [0], [0], [1], [0, 0, 1, 1], [], []>} : vector<32x256xbf16>, vector<256x192xbf16>, vector<32x192xf32> -> vector<32x192xf32>
    %72 = arith.addf %63, %71 : vector<32x192xf32>
    %c0_64 = arith.constant 0 : index
    %c0_65 = arith.constant 0 : index
    %c0_66 = arith.constant 0 : index
    %73 = vector.load %arg10[%c0_64, %c0_65, %c0_66] : memref<3x256x256xbf16, #tpu.memory_space<vmem>>, vector<1x256x256xbf16>
    %74 = vector.shape_cast %73 : vector<1x256x256xbf16> to vector<256x256xbf16>
    %cst_67 = arith.constant dense<0.000000e+00> : vector<32x256xf32>
    %75 = tpu.matmul %68, %74, %cst_67 {dimension_numbers = #tpu.dot_dimension_numbers<[1], [0], [0], [1], [0, 0, 1, 1], [], []>} : vector<32x256xbf16>, vector<256x256xbf16>, vector<32x256xf32> -> vector<32x256xf32>
    %76 = arith.addf %64, %75 : vector<32x256xf32>
    %c1_68 = arith.constant 1 : index
    %c0_69 = arith.constant 0 : index
    %c0_70 = arith.constant 0 : index
    %77 = vector.load %arg7[%c1_68, %c0_69, %c0_70] : memref<3x32x32xbf16, #tpu.memory_space<vmem>>, vector<1x32x32xbf16>
    %78 = vector.shape_cast %77 : vector<1x32x32xbf16> to vector<32x32xbf16>
    %cst_71 = arith.constant dense<0.000000e+00> : vector<32x256xf32>
    %79 = tpu.matmul %78, %31, %cst_71 {dimension_numbers = #tpu.dot_dimension_numbers<[1], [0], [0], [1], [0, 0, 1, 1], [], []>} : vector<32x32xbf16>, vector<32x256xbf16>, vector<32x256xf32> -> vector<32x256xf32>
    %80 = arith.truncf %79 : vector<32x256xf32> to vector<32x256xbf16>
    %c1_72 = arith.constant 1 : index
    %c0_73 = arith.constant 0 : index
    %c0_74 = arith.constant 0 : index
    %81 = vector.load %arg8[%c1_72, %c0_73, %c0_74] : memref<3x256x192xbf16, #tpu.memory_space<vmem>>, vector<1x256x192xbf16>
    %82 = vector.shape_cast %81 : vector<1x256x192xbf16> to vector<256x192xbf16>
    %cst_75 = arith.constant dense<0.000000e+00> : vector<32x192xf32>
    %83 = tpu.matmul %80, %82, %cst_75 {dimension_numbers = #tpu.dot_dimension_numbers<[1], [0], [0], [1], [0, 0, 1, 1], [], []>} : vector<32x256xbf16>, vector<256x192xbf16>, vector<32x192xf32> -> vector<32x192xf32>
    %84 = arith.addf %72, %83 : vector<32x192xf32>
    %c1_76 = arith.constant 1 : index
    %c0_77 = arith.constant 0 : index
    %c0_78 = arith.constant 0 : index
    %85 = vector.load %arg10[%c1_76, %c0_77, %c0_78] : memref<3x256x256xbf16, #tpu.memory_space<vmem>>, vector<1x256x256xbf16>
    %86 = vector.shape_cast %85 : vector<1x256x256xbf16> to vector<256x256xbf16>
    %cst_79 = arith.constant dense<0.000000e+00> : vector<32x256xf32>
    %87 = tpu.matmul %80, %86, %cst_79 {dimension_numbers = #tpu.dot_dimension_numbers<[1], [0], [0], [1], [0, 0, 1, 1], [], []>} : vector<32x256xbf16>, vector<256x256xbf16>, vector<32x256xf32> -> vector<32x256xf32>
    %88 = arith.addf %76, %87 : vector<32x256xf32>
    %c2_80 = arith.constant 2 : index
    %c0_81 = arith.constant 0 : index
    %c0_82 = arith.constant 0 : index
    %89 = vector.load %arg7[%c2_80, %c0_81, %c0_82] : memref<3x32x32xbf16, #tpu.memory_space<vmem>>, vector<1x32x32xbf16>
    %90 = vector.shape_cast %89 : vector<1x32x32xbf16> to vector<32x32xbf16>
    %cst_83 = arith.constant dense<0.000000e+00> : vector<32x256xf32>
    %91 = tpu.matmul %90, %31, %cst_83 {dimension_numbers = #tpu.dot_dimension_numbers<[1], [0], [0], [1], [0, 0, 1, 1], [], []>} : vector<32x32xbf16>, vector<32x256xbf16>, vector<32x256xf32> -> vector<32x256xf32>
    %92 = arith.truncf %91 : vector<32x256xf32> to vector<32x256xbf16>
    %c2_84 = arith.constant 2 : index
    %c0_85 = arith.constant 0 : index
    %c0_86 = arith.constant 0 : index
    %93 = vector.load %arg8[%c2_84, %c0_85, %c0_86] : memref<3x256x192xbf16, #tpu.memory_space<vmem>>, vector<1x256x192xbf16>
    %94 = vector.shape_cast %93 : vector<1x256x192xbf16> to vector<256x192xbf16>
    %cst_87 = arith.constant dense<0.000000e+00> : vector<32x192xf32>
    %95 = tpu.matmul %92, %94, %cst_87 {dimension_numbers = #tpu.dot_dimension_numbers<[1], [0], [0], [1], [0, 0, 1, 1], [], []>} : vector<32x256xbf16>, vector<256x192xbf16>, vector<32x192xf32> -> vector<32x192xf32>
    %96 = arith.addf %84, %95 : vector<32x192xf32>
    %c2_88 = arith.constant 2 : index
    %c0_89 = arith.constant 0 : index
    %c0_90 = arith.constant 0 : index
    %97 = vector.load %arg10[%c2_88, %c0_89, %c0_90] : memref<3x256x256xbf16, #tpu.memory_space<vmem>>, vector<1x256x256xbf16>
    %98 = vector.shape_cast %97 : vector<1x256x256xbf16> to vector<256x256xbf16>
    %cst_91 = arith.constant dense<0.000000e+00> : vector<32x256xf32>
    %99 = tpu.matmul %92, %98, %cst_91 {dimension_numbers = #tpu.dot_dimension_numbers<[1], [0], [0], [1], [0, 0, 1, 1], [], []>} : vector<32x256xbf16>, vector<256x256xbf16>, vector<32x256xf32> -> vector<32x256xf32>
    %100 = arith.addf %88, %99 : vector<32x256xf32>
    %c0_92 = arith.constant 0 : index
    %c0_93 = arith.constant 0 : index
    %101 = vector.load %arg9[%c0_92, %c0_93] : memref<1x192xf32, #tpu.memory_space<vmem>>, vector<1x192xf32>
    %102 = vector.broadcast %101 : vector<1x192xf32> to vector<32x192xf32>
    %103 = arith.addf %96, %102 : vector<32x192xf32>
    %c0_94 = arith.constant 0 : index
    %c0_95 = arith.constant 0 : index
    %104 = vector.load %arg11[%c0_94, %c0_95] : memref<1x256xf32, #tpu.memory_space<vmem>>, vector<1x256xf32>
    %105 = vector.broadcast %104 : vector<1x256xf32> to vector<32x256xf32>
    %106 = arith.addf %100, %105 : vector<32x256xf32>
    %c0_96 = arith.constant 0 : index
    %c0_97 = arith.constant 0 : index
    %107 = vector.load %arg20[%c0_96, %c0_97] : memref<32x192xf32, #tpu.memory_space<vmem>>, vector<32x192xf32>
    tpu.vector_store %arg20[%c0_96, %c0_97], %103 {strides = array<i32>} : memref<32x192xf32, #tpu.memory_space<vmem>>, vector<32x192xf32>,
    %c0_98 = arith.constant 0 : index
    %c0_99 = arith.constant 0 : index
    %108 = vector.load %arg21[%c0_98, %c0_99] : memref<32x256xf32, #tpu.memory_space<vmem>>, vector<32x256xf32>
    tpu.vector_store %arg21[%c0_98, %c0_99], %106 {strides = array<i32>} : memref<32x256xf32, #tpu.memory_space<vmem>>, vector<32x256xf32>,
    %cst_100 = arith.constant 0.000000e+00 : f32
    %109 = vector.broadcast %cst_100 : f32 to vector<16x144xf32>
    %cst_101 = arith.constant 0.000000e+00 : f32
    %110 = vector.broadcast %cst_101 : f32 to vector<16x192xf32>
    %c0_102 = arith.constant 0 : index
    %c0_103 = arith.constant 0 : index
    %c0_104 = arith.constant 0 : index
    %111 = vector.load %arg12[%c0_102, %c0_103, %c0_104] : memref<3x16x16xbf16, #tpu.memory_space<vmem>>, vector<1x16x16xbf16>
    %112 = vector.shape_cast %111 : vector<1x16x16xbf16> to vector<16x16xbf16>
    %cst_105 = arith.constant dense<0.000000e+00> : vector<16x256xf32>
    %113 = tpu.matmul %112, %62, %cst_105 {dimension_numbers = #tpu.dot_dimension_numbers<[1], [0], [0], [1], [0, 0, 1, 1], [], []>} : vector<16x16xbf16>, vector<16x256xbf16>, vector<16x256xf32> -> vector<16x256xf32>
    %114 = arith.truncf %113 : vector<16x256xf32> to vector<16x256xbf16>
    %c0_106 = arith.constant 0 : index
    %c0_107 = arith.constant 0 : index
    %c0_108 = arith.constant 0 : index
    %115 = vector.load %arg13[%c0_106, %c0_107, %c0_108] : memref<3x256x144xbf16, #tpu.memory_space<vmem>>, vector<1x256x144xbf16>
    %116 = vector.shape_cast %115 : vector<1x256x144xbf16> to vector<256x144xbf16>
    %cst_109 = arith.constant dense<0.000000e+00> : vector<16x144xf32>
    %117 = tpu.matmul %114, %116, %cst_109 {dimension_numbers = #tpu.dot_dimension_numbers<[1], [0], [0], [1], [0, 0, 1, 1], [], []>} : vector<16x256xbf16>, vector<256x144xbf16>, vector<16x144xf32> -> vector<16x144xf32>
    %118 = arith.addf %109, %117 : vector<16x144xf32>
    %c0_110 = arith.constant 0 : index
    %c0_111 = arith.constant 0 : index
    %c0_112 = arith.constant 0 : index
    %119 = vector.load %arg15[%c0_110, %c0_111, %c0_112] : memref<3x256x192xbf16, #tpu.memory_space<vmem>>, vector<1x256x192xbf16>
    %120 = vector.shape_cast %119 : vector<1x256x192xbf16> to vector<256x192xbf16>
    %cst_113 = arith.constant dense<0.000000e+00> : vector<16x192xf32>
    %121 = tpu.matmul %114, %120, %cst_113 {dimension_numbers = #tpu.dot_dimension_numbers<[1], [0], [0], [1], [0, 0, 1, 1], [], []>} : vector<16x256xbf16>, vector<256x192xbf16>, vector<16x192xf32> -> vector<16x192xf32>
    %122 = arith.addf %110, %121 : vector<16x192xf32>
    %c1_114 = arith.constant 1 : index
    %c0_115 = arith.constant 0 : index
    %c0_116 = arith.constant 0 : index
    %123 = vector.load %arg12[%c1_114, %c0_115, %c0_116] : memref<3x16x16xbf16, #tpu.memory_space<vmem>>, vector<1x16x16xbf16>
    %124 = vector.shape_cast %123 : vector<1x16x16xbf16> to vector<16x16xbf16>
    %cst_117 = arith.constant dense<0.000000e+00> : vector<16x256xf32>
    %125 = tpu.matmul %124, %62, %cst_117 {dimension_numbers = #tpu.dot_dimension_numbers<[1], [0], [0], [1], [0, 0, 1, 1], [], []>} : vector<16x16xbf16>, vector<16x256xbf16>, vector<16x256xf32> -> vector<16x256xf32>
    %126 = arith.truncf %125 : vector<16x256xf32> to vector<16x256xbf16>
    %c1_118 = arith.constant 1 : index
    %c0_119 = arith.constant 0 : index
    %c0_120 = arith.constant 0 : index
    %127 = vector.load %arg13[%c1_118, %c0_119, %c0_120] : memref<3x256x144xbf16, #tpu.memory_space<vmem>>, vector<1x256x144xbf16>
    %128 = vector.shape_cast %127 : vector<1x256x144xbf16> to vector<256x144xbf16>
    %cst_121 = arith.constant dense<0.000000e+00> : vector<16x144xf32>
    %129 = tpu.matmul %126, %128, %cst_121 {dimension_numbers = #tpu.dot_dimension_numbers<[1], [0], [0], [1], [0, 0, 1, 1], [], []>} : vector<16x256xbf16>, vector<256x144xbf16>, vector<16x144xf32> -> vector<16x144xf32>
    %130 = arith.addf %118, %129 : vector<16x144xf32>
    %c1_122 = arith.constant 1 : index
    %c0_123 = arith.constant 0 : index
    %c0_124 = arith.constant 0 : index
    %131 = vector.load %arg15[%c1_122, %c0_123, %c0_124] : memref<3x256x192xbf16, #tpu.memory_space<vmem>>, vector<1x256x192xbf16>
    %132 = vector.shape_cast %131 : vector<1x256x192xbf16> to vector<256x192xbf16>
    %cst_125 = arith.constant dense<0.000000e+00> : vector<16x192xf32>
    %133 = tpu.matmul %126, %132, %cst_125 {dimension_numbers = #tpu.dot_dimension_numbers<[1], [0], [0], [1], [0, 0, 1, 1], [], []>} : vector<16x256xbf16>, vector<256x192xbf16>, vector<16x192xf32> -> vector<16x192xf32>
    %134 = arith.addf %122, %133 : vector<16x192xf32>
    %c2_126 = arith.constant 2 : index
    %c0_127 = arith.constant 0 : index
    %c0_128 = arith.constant 0 : index
    %135 = vector.load %arg12[%c2_126, %c0_127, %c0_128] : memref<3x16x16xbf16, #tpu.memory_space<vmem>>, vector<1x16x16xbf16>
    %136 = vector.shape_cast %135 : vector<1x16x16xbf16> to vector<16x16xbf16>
    %cst_129 = arith.constant dense<0.000000e+00> : vector<16x256xf32>
    %137 = tpu.matmul %136, %62, %cst_129 {dimension_numbers = #tpu.dot_dimension_numbers<[1], [0], [0], [1], [0, 0, 1, 1], [], []>} : vector<16x16xbf16>, vector<16x256xbf16>, vector<16x256xf32> -> vector<16x256xf32>
    %138 = arith.truncf %137 : vector<16x256xf32> to vector<16x256xbf16>
    %c2_130 = arith.constant 2 : index
    %c0_131 = arith.constant 0 : index
    %c0_132 = arith.constant 0 : index
    %139 = vector.load %arg13[%c2_130, %c0_131, %c0_132] : memref<3x256x144xbf16, #tpu.memory_space<vmem>>, vector<1x256x144xbf16>
    %140 = vector.shape_cast %139 : vector<1x256x144xbf16> to vector<256x144xbf16>
    %cst_133 = arith.constant dense<0.000000e+00> : vector<16x144xf32>
    %141 = tpu.matmul %138, %140, %cst_133 {dimension_numbers = #tpu.dot_dimension_numbers<[1], [0], [0], [1], [0, 0, 1, 1], [], []>} : vector<16x256xbf16>, vector<256x144xbf16>, vector<16x144xf32> -> vector<16x144xf32>
    %142 = arith.addf %130, %141 : vector<16x144xf32>
    %c2_134 = arith.constant 2 : index
    %c0_135 = arith.constant 0 : index
    %c0_136 = arith.constant 0 : index
    %143 = vector.load %arg15[%c2_134, %c0_135, %c0_136] : memref<3x256x192xbf16, #tpu.memory_space<vmem>>, vector<1x256x192xbf16>
    %144 = vector.shape_cast %143 : vector<1x256x192xbf16> to vector<256x192xbf16>
    %cst_137 = arith.constant dense<0.000000e+00> : vector<16x192xf32>
    %145 = tpu.matmul %138, %144, %cst_137 {dimension_numbers = #tpu.dot_dimension_numbers<[1], [0], [0], [1], [0, 0, 1, 1], [], []>} : vector<16x256xbf16>, vector<256x192xbf16>, vector<16x192xf32> -> vector<16x192xf32>
    %146 = arith.addf %134, %145 : vector<16x192xf32>
    %c0_138 = arith.constant 0 : index
    %c0_139 = arith.constant 0 : index
    %147 = vector.load %arg14[%c0_138, %c0_139] : memref<1x144xf32, #tpu.memory_space<vmem>>, vector<1x144xf32>
    %148 = vector.broadcast %147 : vector<1x144xf32> to vector<16x144xf32>
    %149 = arith.addf %142, %148 : vector<16x144xf32>
    %c0_140 = arith.constant 0 : index
    %c0_141 = arith.constant 0 : index
    %150 = vector.load %arg16[%c0_140, %c0_141] : memref<1x192xf32, #tpu.memory_space<vmem>>, vector<1x192xf32>
    %151 = vector.broadcast %150 : vector<1x192xf32> to vector<16x192xf32>
    %152 = arith.addf %146, %151 : vector<16x192xf32>
    %c0_142 = arith.constant 0 : index
    %c0_143 = arith.constant 0 : index
    %153 = vector.load %arg22[%c0_142, %c0_143] : memref<16x144xf32, #tpu.memory_space<vmem>>, vector<16x144xf32>
    tpu.vector_store %arg22[%c0_142, %c0_143], %149 {strides = array<i32>} : memref<16x144xf32, #tpu.memory_space<vmem>>, vector<16x144xf32>,
    %c0_144 = arith.constant 0 : index
    %c0_145 = arith.constant 0 : index
    %154 = vector.load %arg23[%c0_144, %c0_145] : memref<16x192xf32, #tpu.memory_space<vmem>>, vector<16x192xf32>
    tpu.vector_store %arg23[%c0_144, %c0_145], %152 {strides = array<i32>} : memref<16x192xf32, #tpu.memory_space<vmem>>, vector<16x192xf32>,
    %c0_146 = arith.constant 0 : index
    %c0_147 = arith.constant 0 : index
    %155 = vector.load %arg17[%c0_146, %c0_147] : memref<2x16xbf16, #tpu.memory_space<vmem>>, vector<2x16xbf16>
    %cst_148 = arith.constant dense<0.000000e+00> : vector<2x256xf32>
    %156 = tpu.matmul %155, %62, %cst_148 {dimension_numbers = #tpu.dot_dimension_numbers<[1], [0], [0], [1], [0, 0, 1, 1], [], []>} : vector<2x16xbf16>, vector<16x256xbf16>, vector<2x256xf32> -> vector<2x256xf32>
    %157 = arith.truncf %156 : vector<2x256xf32> to vector<2x256xbf16>
    %c0_149 = arith.constant 0 : index
    %c0_150 = arith.constant 0 : index
    %158 = vector.load %arg18[%c0_149, %c0_150] : memref<256x2xbf16, #tpu.memory_space<vmem>>, vector<256x2xbf16>
    %cst_151 = arith.constant dense<0.000000e+00> : vector<2x2xf32>
    %159 = tpu.matmul %157, %158, %cst_151 {dimension_numbers = #tpu.dot_dimension_numbers<[1], [0], [0], [1], [0, 0, 1, 1], [], []>} : vector<2x256xbf16>, vector<256x2xbf16>, vector<2x2xf32> -> vector<2x2xf32>
    %c0_152 = arith.constant 0 : index
    %c0_153 = arith.constant 0 : index
    %160 = vector.load %arg19[%c0_152, %c0_153] : memref<1x2xf32, #tpu.memory_space<vmem>>, vector<1x2xf32>
    %161 = vector.broadcast %160 : vector<1x2xf32> to vector<2x2xf32>
    %162 = arith.addf %159, %161 : vector<2x2xf32>
    %c0_154 = arith.constant 0 : index
    %c0_155 = arith.constant 0 : index
    %163 = vector.load %arg24[%c0_154, %c0_155] : memref<2x2xf32, #tpu.memory_space<vmem>>, vector<2x2xf32>
    tpu.vector_store %arg24[%c0_154, %c0_155], %162 {strides = array<i32>} : memref<2x2xf32, #tpu.memory_space<vmem>>, vector<2x2xf32>,
    return
  }
}

</mosaic_0001>

<llo_original>
// kernel: cfssd_forward.1
$region0: #{cfssd_forward.1}
  #allocation0 [shape = 'u32[]', space=smem, size = 0x4, offset = 0x4, fixed_abs, tag = 'smem constant byte address 0x4 - core index']
  #allocation1 [shape = 'u32[144,128]{1,0:T(1,128)}', space=vmem, size = 0x12000, scoped, tag = 'internal scratch']
  %s0 = inlined_call_operand.vmem [shape: bf16[64,96], index: 0, kind: input, shape index: {}]
  %s1 = inlined_call_operand.vmem [shape: bf16[3,32,64], index: 1, kind: input, shape index: {}]
  %s2 = inlined_call_operand.vmem [shape: bf16[3,96,256], index: 2, kind: input, shape index: {}]
  %s3 = inlined_call_operand.vmem [shape: f32[1,256], index: 3, kind: input, shape index: {}]
  %s4 = inlined_call_operand.vmem [shape: bf16[3,16,32], index: 4, kind: input, shape index: {}]
  %s5 = inlined_call_operand.vmem [shape: bf16[3,256,256], index: 5, kind: input, shape index: {}]
  %s6 = inlined_call_operand.vmem [shape: f32[1,256], index: 6, kind: input, shape index: {}]
  %s7 = inlined_call_operand.vmem [shape: bf16[3,32,32], index: 7, kind: input, shape index: {}]
  %s8 = inlined_call_operand.vmem [shape: bf16[3,256,192], index: 8, kind: input, shape index: {}]
  %s9 = inlined_call_operand.vmem [shape: f32[1,192], index: 9, kind: input, shape index: {}]
  %s10 = inlined_call_operand.vmem [shape: bf16[3,256,256], index: 10, kind: input, shape index: {}]
  %s11 = inlined_call_operand.vmem [shape: f32[1,256], index: 11, kind: input, shape index: {}]
  %s12 = inlined_call_operand.vmem [shape: bf16[3,16,16], index: 12, kind: input, shape index: {}]
  %s13 = inlined_call_operand.vmem [shape: bf16[3,256,144], index: 13, kind: input, shape index: {}]
  %s14 = inlined_call_operand.vmem [shape: f32[1,144], index: 14, kind: input, shape index: {}]
  %s15 = inlined_call_operand.vmem [shape: bf16[3,256,192], index: 15, kind: input, shape index: {}]
  %s16 = inlined_call_operand.vmem [shape: f32[1,192], index: 16, kind: input, shape index: {}]
  %s17 = inlined_call_operand.vmem [shape: bf16[2,16], index: 17, kind: input, shape index: {}]
  %s18 = inlined_call_operand.vmem [shape: bf16[256,2], index: 18, kind: input, shape index: {}]
  %s19 = inlined_call_operand.vmem [shape: f32[1,2], index: 19, kind: input, shape index: {}]
  %s20 = inlined_call_operand.vmem [shape: f32[32,192], index: 20, kind: output, shape index: {0}]
  %s21 = inlined_call_operand.vmem [shape: f32[32,256], index: 21, kind: output, shape index: {1}]
  %s22 = inlined_call_operand.vmem [shape: f32[16,144], index: 22, kind: output, shape index: {2}]
  %s23 = inlined_call_operand.vmem [shape: f32[16,192], index: 23, kind: output, shape index: {3}]
  %s24 = inlined_call_operand.hbm [shape: f32[2,2], index: 24, kind: output, shape index: {4}]
  %25 = xla_tuple %s20, %s21, %s22, %s23, %s24
  %s26 = sld [smem:[#allocation0]]
  $region122: #{cfssd_forward.1} parent=0
    _
  %s28 = ssub.s32 1, %s26
  %s29 = scalar_select 0, %s28, %s26
  $region1: #{cfssd_forward.1} parent=0
    #allocation2 [shape = 'u8[1024]{0}', space=vmem, size = 0x400, scoped, tag = 'output window, operand 4, single buffered']
    #allocation3 [shape = 's32[1]{0}', space=sflag, size = 0x4, scoped, tag = 'scoped memory for cfssd_forward.1']
    %30 = vsyncpa [#allocation3], 0
    // Predicated region
    $region2: #{cfssd_forward.1} parent=1 // pred_check
      _
    $region3: #{cfssd_forward.1} parent=1 // pred_check_branch
      %32 = sbr.rel (0) target = $region5
    $region4: #{cfssd_forward.1} parent=1 // pred_region
      _
    $region5: #{cfssd_forward.1} parent=1 // pred_fallthru
      _
    // Predicated region
    $region6: #{cfssd_forward.1} parent=1 // pred_check
      _
    $region7: #{cfssd_forward.1} parent=1 // pred_check_branch
      %34 = sbr.rel (0) target = $region9
    $region8: #{cfssd_forward.1} parent=1 // pred_region
      _
    $region9: #{cfssd_forward.1} parent=1 // pred_fallthru
      _
    // Predicated region
    $region10: #{cfssd_forward.1} parent=1 // pred_check
      _
    $region11: #{cfssd_forward.1} parent=1 // pred_check_branch
      %36 = sbr.rel (0) target = $region13
    $region12: #{cfssd_forward.1} parent=1 // pred_region
      _
    $region13: #{cfssd_forward.1} parent=1 // pred_fallthru
      _
    // Predicated region
    $region14: #{cfssd_forward.1} parent=1 // pred_check
      _
    $region15: #{cfssd_forward.1} parent=1 // pred_check_branch
      %38 = sbr.rel (0) target = $region17
    $region16: #{cfssd_forward.1} parent=1 // pred_region
      _
    $region17: #{cfssd_forward.1} parent=1 // pred_fallthru
      _
    // Predicated region
    $region18: #{cfssd_forward.1} parent=1 // pred_check
      _
    $region19: #{cfssd_forward.1} parent=1 // pred_check_branch
      %40 = sbr.rel (0) target = $region21
    $region20: #{cfssd_forward.1} parent=1 // pred_region
      _
    $region21: #{cfssd_forward.1} parent=1 // pred_fallthru
      _
    // Predicated region
    $region22: #{cfssd_forward.1} parent=1 // pred_check
      _
    $region23: #{cfssd_forward.1} parent=1 // pred_check_branch
      %42 = sbr.rel (0) target = $region25
    $region24: #{cfssd_forward.1} parent=1 // pred_region
      _
    $region25: #{cfssd_forward.1} parent=1 // pred_fallthru
      _
    // Predicated region
    $region26: #{cfssd_forward.1} parent=1 // pred_check
      _
    $region27: #{cfssd_forward.1} parent=1 // pred_check_branch
      %44 = sbr.rel (0) target = $region29
    $region28: #{cfssd_forward.1} parent=1 // pred_region
      _
    $region29: #{cfssd_forward.1} parent=1 // pred_fallthru
      _
    // Predicated region
    $region30: #{cfssd_forward.1} parent=1 // pred_check
      _
    $region31: #{cfssd_forward.1} parent=1 // pred_check_branch
      %46 = sbr.rel (0) target = $region33
    $region32: #{cfssd_forward.1} parent=1 // pred_region
      _
    $region33: #{cfssd_forward.1} parent=1 // pred_fallthru
      _
    // Predicated region
    $region34: #{cfssd_forward.1} parent=1 // pred_check
      _
    $region35: #{cfssd_forward.1} parent=1 // pred_check_branch
      %48 = sbr.rel (0) target = $region37
    $region36: #{cfssd_forward.1} parent=1 // pred_region
      _
    $region37: #{cfssd_forward.1} parent=1 // pred_fallthru
      _
    // Predicated region
    $region38: #{cfssd_forward.1} parent=1 // pred_check
      _
    $region39: #{cfssd_forward.1} parent=1 // pred_check_branch
      %50 = sbr.rel (0) target = $region41
    $region40: #{cfssd_forward.1} parent=1 // pred_region
      _
    $region41: #{cfssd_forward.1} parent=1 // pred_fallthru
      _
    // Predicated region
    $region42: #{cfssd_forward.1} parent=1 // pred_check
      _
    $region43: #{cfssd_forward.1} parent=1 // pred_check_branch
      %52 = sbr.rel (0) target = $region45
    $region44: #{cfssd_forward.1} parent=1 // pred_region
      _
    $region45: #{cfssd_forward.1} parent=1 // pred_fallthru
      _
    // Predicated region
    $region46: #{cfssd_forward.1} parent=1 // pred_check
      _
    $region47: #{cfssd_forward.1} parent=1 // pred_check_branch
      %54 = sbr.rel (0) target = $region49
    $region48: #{cfssd_forward.1} parent=1 // pred_region
      _
    $region49: #{cfssd_forward.1} parent=1 // pred_fallthru
      _
    // Predicated region
    $region50: #{cfssd_forward.1} parent=1 // pred_check
      _
    $region51: #{cfssd_forward.1} parent=1 // pred_check_branch
      %56 = sbr.rel (0) target = $region53
    $region52: #{cfssd_forward.1} parent=1 // pred_region
      _
    $region53: #{cfssd_forward.1} parent=1 // pred_fallthru
      _
    // Predicated region
    $region54: #{cfssd_forward.1} parent=1 // pred_check
      _
    $region55: #{cfssd_forward.1} parent=1 // pred_check_branch
      %58 = sbr.rel (0) target = $region57
    $region56: #{cfssd_forward.1} parent=1 // pred_region
      _
    $region57: #{cfssd_forward.1} parent=1 // pred_fallthru
      _
    // Predicated region
    $region58: #{cfssd_forward.1} parent=1 // pred_check
      _
    $region59: #{cfssd_forward.1} parent=1 // pred_check_branch
      %60 = sbr.rel (0) target = $region61
    $region60: #{cfssd_forward.1} parent=1 // pred_region
      _
    $region61: #{cfssd_forward.1} parent=1 // pred_fallthru
      _
    // Predicated region
    $region62: #{cfssd_forward.1} parent=1 // pred_check
      _
    $region63: #{cfssd_forward.1} parent=1 // pred_check_branch
      %62 = sbr.rel (0) target = $region65
    $region64: #{cfssd_forward.1} parent=1 // pred_region
      _
    $region65: #{cfssd_forward.1} parent=1 // pred_fallthru
      _
    // Predicated region
    $region66: #{cfssd_forward.1} parent=1 // pred_check
      _
    $region67: #{cfssd_forward.1} parent=1 // pred_check_branch
      %64 = sbr.rel (0) target = $region69
    $region68: #{cfssd_forward.1} parent=1 // pred_region
      _
    $region69: #{cfssd_forward.1} parent=1 // pred_fallthru
      _
    // Predicated region
    $region70: #{cfssd_forward.1} parent=1 // pred_check
      _
    $region71: #{cfssd_forward.1} parent=1 // pred_check_branch
      %66 = sbr.rel (0) target = $region73
    $region72: #{cfssd_forward.1} parent=1 // pred_region
      _
    $region73: #{cfssd_forward.1} parent=1 // pred_fallthru
      _
    // Predicated region
    $region74: #{cfssd_forward.1} parent=1 // pred_check
      _
    $region75: #{cfssd_forward.1} parent=1 // pred_check_branch
      %68 = sbr.rel (0) target = $region77
    $region76: #{cfssd_forward.1} parent=1 // pred_region
      _
    $region77: #{cfssd_forward.1} parent=1 // pred_fallthru
      _
    // Predicated region
    $region78: #{cfssd_forward.1} parent=1 // pred_check
      _
    $region79: #{cfssd_forward.1} parent=1 // pred_check_branch
      %70 = sbr.rel (0) target = $region81
    $region80: #{cfssd_forward.1} parent=1 // pred_region
      _
    $region81: #{cfssd_forward.1} parent=1 // pred_fallthru
      _
    %v72 = vld [vmem:[%s0] sm:$0xf]
    %v73 = vld [vmem:[%s0 + $0x4] sm:$0xf]
    %v74 = vld [vmem:[%s0 + $0x8] sm:$0xf]
    %v75 = vld [vmem:[%s0 + $0xc] sm:$0xf]
    %v76 = vld [vmem:[%s0 + $0x10] sm:$0xf]
    %v77 = vld [vmem:[%s0 + $0x14] sm:$0xf]
    %v78 = vld [vmem:[%s0 + $0x18] sm:$0xf]
    %v79 = vld [vmem:[%s0 + $0x1c] sm:$0xf]
    %v80 = vld [vmem:[%s1] sm:$0xf]
    %v81 = vld [vmem:[%s1 + $0x4] sm:$0xf]
    %v82 = vld [vmem:[%s1 + $0x8] sm:$0xf]
    %v83 = vld [vmem:[%s1 + $0xc] sm:$0xf]
    %v88 = vunpack.c.l.b16 %v80
    %v89 = vunpack.c.l.b16 %v81
    %v90 = vunpack.c.l.b16 %v82
    %v91 = vunpack.c.l.b16 %v83
    %v92 = vpack.c.b16 %v89, %v88
    %v93 = vpack.c.b16 %v91, %v90
    %v102 = vunpack.c.l.b16 %v72
    %v103 = vunpack.c.l.b16 %v73
    %v104 = vunpack.c.l.b16 %v74
    %v105 = vunpack.c.l.b16 %v75
    %v106 = vunpack.c.l.b16 %v76
    %v107 = vunpack.c.l.b16 %v77
    %v108 = vunpack.c.l.b16 %v78
    %v109 = vunpack.c.l.b16 %v79
    %v110 = vpack.c.b16 %v103, %v102
    %v111 = vpack.c.b16 %v105, %v104
    %v112 = vpack.c.b16 %v107, %v106
    %v113 = vpack.c.b16 %v109, %v108
    %vm118 = vcmask 523264
    %v120 = vsel %vm118, %v92, 0
    %v123 = vsel %vm118, %v93, 0
    %125 = vmatprep.subr.bf16.mxu0 0
    %126 = vmatpush1.bf16.msra.mxu0 %v110
    %127 = vmatprep.subr.bf16.mxu0 0
    %128 = vmatpush1.bf16.msra.mxu0 %v111
    %129 = vmatprep.subr.bf16.mxu0 0
    %130 = vmatpush1.bf16.msra.mxu0 %v112
    %131 = vmatprep.subr.bf16.mxu0 0
    %132 = vmatpush1.bf16.msra.mxu0 %v113
    %133 = vmatprep.subr.bf16.mxu0 0
    %134 = vmatpush1.bf16.msra.mxu0 0
    %135 = vmatprep.subr.bf16.mxu0 0
    %136 = vmatpush1.bf16.msra.mxu0 0
    %137 = vmatprep.subr.bf16.mxu0 0
    %138 = vmatpush1.bf16.msra.mxu0 0
    %139 = vmatprep.subr.bf16.mxu0 0
    %140 = vmatpush1.bf16.msra.mxu0 0
    %141 = vmatprep.subr.bf16.mxu0 0
    %142 = vmatpush1.bf16.msra.mxu0 0
    %143 = vmatprep.subr.bf16.mxu0 0
    %144 = vmatpush1.bf16.msra.mxu0 0
    %145 = vmatprep.subr.bf16.mxu0 0
    %146 = vmatpush1.bf16.msra.mxu0 0
    %147 = vmatprep.subr.bf16.mxu0 0
    %148 = vmatpush1.bf16.msra.mxu0 0
    %149 = vmatprep.subr.bf16.mxu0 0
    %150 = vmatpush1.bf16.msra.mxu0 0
    %151 = vmatprep.subr.bf16.mxu0 0
    %152 = vmatpush1.bf16.msra.mxu0 0
    %153 = vmatprep.subr.bf16.mxu0 0
    %154 = vmatpush1.bf16.msra.mxu0 0
    %155 = vmatprep.subr.bf16.mxu0 0
    %156 = vmatpush1.bf16.msra.mxu0 0
    %157 = vmatprep.mubr.bf16.mxu0 0
    %158 = vmatmul.mubr.bf16.gmra.mrb[0].mxu0 %v120
    %v159 = vpop.f32.mrb[0].mxu0
    %v160 = vadd.f32 0.0, %v159
    %v161 = vpop.f32.mrb[0].mxu0
    %v162 = vpop.f32.mrb[0].mxu0
    %v163 = vadd.f32 0.0, %v162
    %v164 = vpop.f32.mrb[0].mxu0
    %165 = vmatprep.mubr.bf16.mxu0 0
    %166 = vmatmul.mubr.bf16.gmra.mrb[0].mxu0 %v123
    %v167 = vpop.f32.mrb[0].mxu0
    %v168 = vadd.f32 0.0, %v167
    %v169 = vpop.f32.mrb[0].mxu0
    %v170 = vpop.f32.mrb[0].mxu0
    %v171 = vadd.f32 0.0, %v170
    %v172 = vpop.f32.mrb[0].mxu0
    %173 = vdwg.mxu0
    %v174 = vpack.c.bf16 %v163, %v160
    %v175 = vpack.c.bf16 %v171, %v168
    %v176 = vld [vmem:[%s2] sm:$0xff]
    %v177 = vld [vmem:[%s2 + $0x8] sm:$0xff]
    %v178 = vld [vmem:[%s2 + $0x10] sm:$0xff]
    %v179 = vld [vmem:[%s2 + $0x18] sm:$0xff]
    %v180 = vld [vmem:[%s2 + $0x20] sm:$0xff]
    %v181 = vld [vmem:[%s2 + $0x28] sm:$0xff]
    %v182 = vld [vmem:[%s2 + $0x30] sm:$0xff]
    %v183 = vld [vmem:[%s2 + $0x38] sm:$0xff]
    %v184 = vld [vmem:[%s2 + $0x40] sm:$0xff]
    %v185 = vld [vmem:[%s2 + $0x48] sm:$0xff]
    %v186 = vld [vmem:[%s2 + $0x50] sm:$0xff]
    %v187 = vld [vmem:[%s2 + $0x58] sm:$0xff]
    %s188 = scalar_lea.vmem %s1, 16
    %v189 = vld [vmem:[%s188] sm:$0xf]
    %v190 = vld [vmem:[%s188 + $0x4] sm:$0xf]
    %v191 = vld [vmem:[%s188 + $0x8] sm:$0xf]
    %v192 = vld [vmem:[%s188 + $0xc] sm:$0xf]
    %v197 = vunpack.c.l.b16 %v189
    %v198 = vunpack.c.l.b16 %v190
    %v199 = vunpack.c.l.b16 %v191
    %v200 = vunpack.c.l.b16 %v192
    %v201 = vpack.c.b16 %v198, %v197
    %v202 = vpack.c.b16 %v200, %v199
    %v204 = vsel %vm118, %v201, 0
    %v207 = vsel %vm118, %v202, 0
    %209 = vmatprep.subr.bf16.mxu0 0
    %210 = vmatpush1.bf16.msra.mxu0 %v110
    %211 = vmatprep.subr.bf16.mxu0 0
    %212 = vmatpush1.bf16.msra.mxu0 %v111
    %213 = vmatprep.subr.bf16.mxu0 0
    %214 = vmatpush1.bf16.msra.mxu0 %v112
    %215 = vmatprep.subr.bf16.mxu0 0
    %216 = vmatpush1.bf16.msra.mxu0 %v113
    %217 = vmatprep.subr.bf16.mxu0 0
    %218 = vmatpush1.bf16.msra.mxu0 0
    %219 = vmatprep.subr.bf16.mxu0 0
    %220 = vmatpush1.bf16.msra.mxu0 0
    %221 = vmatprep.subr.bf16.mxu0 0
    %222 = vmatpush1.bf16.msra.mxu0 0
    %223 = vmatprep.subr.bf16.mxu0 0
    %224 = vmatpush1.bf16.msra.mxu0 0
    %225 = vmatprep.subr.bf16.mxu0 0
    %226 = vmatpush1.bf16.msra.mxu0 0
    %227 = vmatprep.subr.bf16.mxu0 0
    %228 = vmatpush1.bf16.msra.mxu0 0
    %229 = vmatprep.subr.bf16.mxu0 0
    %230 = vmatpush1.bf16.msra.mxu0 0
    %231 = vmatprep.subr.bf16.mxu0 0
    %232 = vmatpush1.bf16.msra.mxu0 0
    %233 = vmatprep.subr.bf16.mxu0 0
    %234 = vmatpush1.bf16.msra.mxu0 0
    %235 = vmatprep.subr.bf16.mxu0 0
    %236 = vmatpush1.bf16.msra.mxu0 0
    %237 = vmatprep.subr.bf16.mxu0 0
    %238 = vmatpush1.bf16.msra.mxu0 0
    %239 = vmatprep.subr.bf16.mxu0 0
    %240 = vmatpush1.bf16.msra.mxu0 0
    %241 = vmatprep.mubr.bf16.mxu0 0
    %242 = vmatmul.mubr.bf16.gmra.mrb[0].mxu0 %v204
    %v243 = vpop.f32.mrb[0].mxu0
    %v244 = vadd.f32 0.0, %v243
    %v245 = vpop.f32.mrb[0].mxu0
    %v246 = vpop.f32.mrb[0].mxu0
    %v247 = vadd.f32 0.0, %v246
    %v248 = vpop.f32.mrb[0].mxu0
    %249 = vmatprep.mubr.bf16.mxu0 0
    %250 = vmatmul.mubr.bf16.gmra.mrb[0].mxu0 %v207
    %v251 = vpop.f32.mrb[0].mxu0
    %v252 = vadd.f32 0.0, %v251
    %v253 = vpop.f32.mrb[0].mxu0
    %v254 = vpop.f32.mrb[0].mxu0
    %v255 = vadd.f32 0.0, %v254
    %v256 = vpop.f32.mrb[0].mxu0
    %257 = vdwg.mxu0
    %v258 = vpack.c.bf16 %v247, %v244
    %v259 = vpack.c.bf16 %v255, %v252
    %s260 = scalar_lea.vmem %s2, 96
    %v261 = vld [vmem:[%s260] sm:$0xff]
    %v262 = vld [vmem:[%s260 + $0x8] sm:$0xff]
    %v263 = vld [vmem:[%s260 + $0x10] sm:$0xff]
    %v264 = vld [vmem:[%s260 + $0x18] sm:$0xff]
    %v265 = vld [vmem:[%s260 + $0x20] sm:$0xff]
    %v266 = vld [vmem:[%s260 + $0x28] sm:$0xff]
    %v267 = vld [vmem:[%s260 + $0x30] sm:$0xff]
    %v268 = vld [vmem:[%s260 + $0x38] sm:$0xff]
    %v269 = vld [vmem:[%s260 + $0x40] sm:$0xff]
    %v270 = vld [vmem:[%s260 + $0x48] sm:$0xff]
    %v271 = vld [vmem:[%s260 + $0x50] sm:$0xff]
    %v272 = vld [vmem:[%s260 + $0x58] sm:$0xff]
    %v285 = vunpack.c.l.b16 %v261
    %v286 = vunpack.c.h.b16 %v261
    %v287 = vunpack.c.l.b16 %v262
    %v288 = vunpack.c.h.b16 %v262
    %v289 = vunpack.c.l.b16 %v263
    %v290 = vunpack.c.h.b16 %v263
    %v291 = vunpack.c.l.b16 %v264
    %v292 = vunpack.c.h.b16 %v264
    %v293 = vunpack.c.l.b16 %v265
    %v294 = vunpack.c.h.b16 %v265
    %v295 = vunpack.c.l.b16 %v266
    %v296 = vunpack.c.h.b16 %v266
    %v297 = vunpack.c.l.b16 %v267
    %v298 = vunpack.c.h.b16 %v267
    %v299 = vunpack.c.l.b16 %v268
    %v300 = vunpack.c.h.b16 %v268
    %v301 = vunpack.c.l.b16 %v269
    %v302 = vunpack.c.h.b16 %v269
    %v303 = vunpack.c.l.b16 %v270
    %v304 = vunpack.c.h.b16 %v270
    %v305 = vunpack.c.l.b16 %v271
    %v306 = vunpack.c.h.b16 %v271
    %v307 = vunpack.c.l.b16 %v272
    %v308 = vunpack.c.h.b16 %v272
    %v309 = vpack.c.b16 %v287, %v285
    %v310 = vpack.c.b16 %v288, %v286
    %v311 = vpack.c.b16 %v291, %v289
    %v312 = vpack.c.b16 %v292, %v290
    %v313 = vpack.c.b16 %v295, %v293
    %v314 = vpack.c.b16 %v296, %v294
    %v315 = vpack.c.b16 %v299, %v297
    %v316 = vpack.c.b16 %v300, %v298
    %v317 = vpack.c.b16 %v303, %v301
    %v318 = vpack.c.b16 %v304, %v302
    %v319 = vpack.c.b16 %v307, %v305
    %v320 = vpack.c.b16 %v308, %v306
    %vm333 = vcmask 785408
    %v335 = vsel %vm333, %v258, 0
    %v338 = vsel %vm333, %v259, 0
    %340 = vmatprep.subr.bf16.mxu0 %v310
    %341 = vmatpush1.bf16.msra.mxu0 %v309
    %342 = vmatprep.subr.bf16.mxu0 %v312
    %343 = vmatpush1.bf16.msra.mxu0 %v311
    %344 = vmatprep.subr.bf16.mxu0 %v314
    %345 = vmatpush1.bf16.msra.mxu0 %v313
    %346 = vmatprep.subr.bf16.mxu0 %v316
    %347 = vmatpush1.bf16.msra.mxu0 %v315
    %348 = vmatprep.subr.bf16.mxu0 %v318
    %349 = vmatpush1.bf16.msra.mxu0 %v317
    %350 = vmatprep.subr.bf16.mxu0 %v320
    %351 = vmatpush1.bf16.msra.mxu0 %v319
    %352 = vmatprep.subr.bf16.mxu0 0
    %353 = vmatpush1.bf16.msra.mxu0 0
    %354 = vmatprep.subr.bf16.mxu0 0
    %355 = vmatpush1.bf16.msra.mxu0 0
    %356 = vmatprep.subr.bf16.mxu0 0
    %357 = vmatpush1.bf16.msra.mxu0 0
    %358 = vmatprep.subr.bf16.mxu0 0
    %359 = vmatpush1.bf16.msra.mxu0 0
    %360 = vmatprep.subr.bf16.mxu0 0
    %361 = vmatpush1.bf16.msra.mxu0 0
    %362 = vmatprep.subr.bf16.mxu0 0
    %363 = vmatpush1.bf16.msra.mxu0 0
    %364 = vmatprep.subr.bf16.mxu0 0
    %365 = vmatpush1.bf16.msra.mxu0 0
    %366 = vmatprep.subr.bf16.mxu0 0
    %367 = vmatpush1.bf16.msra.mxu0 0
    %368 = vmatprep.subr.bf16.mxu0 0
    %369 = vmatpush1.bf16.msra.mxu0 0
    %370 = vmatprep.subr.bf16.mxu0 0
    %371 = vmatpush1.bf16.msra.mxu0 0
    %372 = vmatprep.mubr.bf16.mxu0 0
    %373 = vmatmul.mubr.bf16.gmra.mrb[0].mxu0 %v335
    %v374 = vpop.f32.mrb[0].mxu0
    %v375 = vadd.f32 0.0, %v374
    %v376 = vpop.f32.mrb[0].mxu0
    %v377 = vadd.f32 0.0, %v376
    %v378 = vpop.f32.mrb[0].mxu0
    %v379 = vadd.f32 0.0, %v378
    %v380 = vpop.f32.mrb[0].mxu0
    %v381 = vadd.f32 0.0, %v380
    %382 = vmatprep.mubr.bf16.mxu0 0
    %383 = vmatmul.mubr.bf16.gmra.mrb[0].mxu0 %v338
    %v384 = vpop.f32.mrb[0].mxu0
    %v385 = vadd.f32 0.0, %v384
    %v386 = vpop.f32.mrb[0].mxu0
    %v387 = vadd.f32 0.0, %v386
    %v388 = vpop.f32.mrb[0].mxu0
    %v389 = vadd.f32 0.0, %v388
    %v390 = vpop.f32.mrb[0].mxu0
    %v391 = vadd.f32 0.0, %v390
    %392 = vdwg.mxu0
    %v405 = vunpack.c.l.b16 %v176
    %v406 = vunpack.c.h.b16 %v176
    %v407 = vunpack.c.l.b16 %v177
    %v408 = vunpack.c.h.b16 %v177
    %v409 = vunpack.c.l.b16 %v178
    %v410 = vunpack.c.h.b16 %v178
    %v411 = vunpack.c.l.b16 %v179
    %v412 = vunpack.c.h.b16 %v179
    %v413 = vunpack.c.l.b16 %v180
    %v414 = vunpack.c.h.b16 %v180
    %v415 = vunpack.c.l.b16 %v181
    %v416 = vunpack.c.h.b16 %v181
    %v417 = vunpack.c.l.b16 %v182
    %v418 = vunpack.c.h.b16 %v182
    %v419 = vunpack.c.l.b16 %v183
    %v420 = vunpack.c.h.b16 %v183
    %v421 = vunpack.c.l.b16 %v184
    %v422 = vunpack.c.h.b16 %v184
    %v423 = vunpack.c.l.b16 %v185
    %v424 = vunpack.c.h.b16 %v185
    %v425 = vunpack.c.l.b16 %v186
    %v426 = vunpack.c.h.b16 %v186
    %v427 = vunpack.c.l.b16 %v187
    %v428 = vunpack.c.h.b16 %v187
    %v429 = vpack.c.b16 %v407, %v405
    %v430 = vpack.c.b16 %v408, %v406
    %v431 = vpack.c.b16 %v411, %v409
    %v432 = vpack.c.b16 %v412, %v410
    %v433 = vpack.c.b16 %v415, %v413
    %v434 = vpack.c.b16 %v416, %v414
    %v435 = vpack.c.b16 %v419, %v417
    %v436 = vpack.c.b16 %v420, %v418
    %v437 = vpack.c.b16 %v423, %v421
    %v438 = vpack.c.b16 %v424, %v422
    %v439 = vpack.c.b16 %v427, %v425
    %v440 = vpack.c.b16 %v428, %v426
    %v454 = vsel %vm333, %v174, 0
    %v457 = vsel %vm333, %v175, 0
    %459 = vmatprep.subr.bf16.mxu0 %v430
    %460 = vmatpush1.bf16.msra.mxu0 %v429
    %461 = vmatprep.subr.bf16.mxu0 %v432
    %462 = vmatpush1.bf16.msra.mxu0 %v431
    %463 = vmatprep.subr.bf16.mxu0 %v434
    %464 = vmatpush1.bf16.msra.mxu0 %v433
    %465 = vmatprep.subr.bf16.mxu0 %v436
    %466 = vmatpush1.bf16.msra.mxu0 %v435
    %467 = vmatprep.subr.bf16.mxu0 %v438
    %468 = vmatpush1.bf16.msra.mxu0 %v437
    %469 = vmatprep.subr.bf16.mxu0 %v440
    %470 = vmatpush1.bf16.msra.mxu0 %v439
    %471 = vmatprep.subr.bf16.mxu0 0
    %472 = vmatpush1.bf16.msra.mxu0 0
    %473 = vmatprep.subr.bf16.mxu0 0
    %474 = vmatpush1.bf16.msra.mxu0 0
    %475 = vmatprep.subr.bf16.mxu0 0
    %476 = vmatpush1.bf16.msra.mxu0 0
    %477 = vmatprep.subr.bf16.mxu0 0
    %478 = vmatpush1.bf16.msra.mxu0 0
    %479 = vmatprep.subr.bf16.mxu0 0
    %480 = vmatpush1.bf16.msra.mxu0 0
    %481 = vmatprep.subr.bf16.mxu0 0
    %482 = vmatpush1.bf16.msra.mxu0 0
    %483 = vmatprep.subr.bf16.mxu0 0
    %484 = vmatpush1.bf16.msra.mxu0 0
    %485 = vmatprep.subr.bf16.mxu0 0
    %486 = vmatpush1.bf16.msra.mxu0 0
    %487 = vmatprep.subr.bf16.mxu0 0
    %488 = vmatpush1.bf16.msra.mxu0 0
    %489 = vmatprep.subr.bf16.mxu0 0
    %490 = vmatpush1.bf16.msra.mxu0 0
    %491 = vmatprep.mubr.bf16.mxu0 0
    %492 = vmatmul.mubr.bf16.gmra.mrb[0].mxu0 %v454
    %v493 = vpop.f32.mrb[0].mxu0
    %v494 = vadd.f32 %v375, %v493
    %v495 = vpop.f32.mrb[0].mxu0
    %v496 = vadd.f32 %v377, %v495
    %v497 = vpop.f32.mrb[0].mxu0
    %v498 = vadd.f32 %v379, %v497
    %v499 = vpop.f32.mrb[0].mxu0
    %v500 = vadd.f32 %v381, %v499
    %501 = vmatprep.mubr.bf16.mxu0 0
    %502 = vmatmul.mubr.bf16.gmra.mrb[0].mxu0 %v457
    %v503 = vpop.f32.mrb[0].mxu0
    %v504 = vadd.f32 %v385, %v503
    %v505 = vpop.f32.mrb[0].mxu0
    %v506 = vadd.f32 %v387, %v505
    %v507 = vpop.f32.mrb[0].mxu0
    %v508 = vadd.f32 %v389, %v507
    %v509 = vpop.f32.mrb[0].mxu0
    %v510 = vadd.f32 %v391, %v509
    %511 = vdwg.mxu0
    %s512 = scalar_lea.vmem %s1, 32
    %v513 = vld [vmem:[%s512] sm:$0xf]
    %v514 = vld [vmem:[%s512 + $0x4] sm:$0xf]
    %v515 = vld [vmem:[%s512 + $0x8] sm:$0xf]
    %v516 = vld [vmem:[%s512 + $0xc] sm:$0xf]
    %v521 = vunpack.c.l.b16 %v513
    %v522 = vunpack.c.l.b16 %v514
    %v523 = vunpack.c.l.b16 %v515
    %v524 = vunpack.c.l.b16 %v516
    %v525 = vpack.c.b16 %v522, %v521
    %v526 = vpack.c.b16 %v524, %v523
    %v528 = vsel %vm118, %v525, 0
    %v531 = vsel %vm118, %v526, 0
    %533 = vmatprep.subr.bf16.mxu0 0
    %534 = vmatpush1.bf16.msra.mxu0 %v110
    %535 = vmatprep.subr.bf16.mxu0 0
    %536 = vmatpush1.bf16.msra.mxu0 %v111
    %537 = vmatprep.subr.bf16.mxu0 0
    %538 = vmatpush1.bf16.msra.mxu0 %v112
    %539 = vmatprep.subr.bf16.mxu0 0
    %540 = vmatpush1.bf16.msra.mxu0 %v113
    %541 = vmatprep.subr.bf16.mxu0 0
    %542 = vmatpush1.bf16.msra.mxu0 0
    %543 = vmatprep.subr.bf16.mxu0 0
    %544 = vmatpush1.bf16.msra.mxu0 0
    %545 = vmatprep.subr.bf16.mxu0 0
    %546 = vmatpush1.bf16.msra.mxu0 0
    %547 = vmatprep.subr.bf16.mxu0 0
    %548 = vmatpush1.bf16.msra.mxu0 0
    %549 = vmatprep.subr.bf16.mxu0 0
    %550 = vmatpush1.bf16.msra.mxu0 0
    %551 = vmatprep.subr.bf16.mxu0 0
    %552 = vmatpush1.bf16.msra.mxu0 0
    %553 = vmatprep.subr.bf16.mxu0 0
    %554 = vmatpush1.bf16.msra.mxu0 0
    %555 = vmatprep.subr.bf16.mxu0 0
    %556 = vmatpush1.bf16.msra.mxu0 0
    %557 = vmatprep.subr.bf16.mxu0 0
    %558 = vmatpush1.bf16.msra.mxu0 0
    %559 = vmatprep.subr.bf16.mxu0 0
    %560 = vmatpush1.bf16.msra.mxu0 0
    %561 = vmatprep.subr.bf16.mxu0 0
    %562 = vmatpush1.bf16.msra.mxu0 0
    %563 = vmatprep.subr.bf16.mxu0 0
    %564 = vmatpush1.bf16.msra.mxu0 0
    %565 = vmatprep.mubr.bf16.mxu0 0
    %566 = vmatmul.mubr.bf16.gmra.mrb[0].mxu0 %v528
    %v567 = vpop.f32.mrb[0].mxu0
    %v568 = vadd.f32 0.0, %v567
    %v569 = vpop.f32.mrb[0].mxu0
    %v570 = vpop.f32.mrb[0].mxu0
    %v571 = vadd.f32 0.0, %v570
    %v572 = vpop.f32.mrb[0].mxu0
    %573 = vmatprep.mubr.bf16.mxu0 0
    %574 = vmatmul.mubr.bf16.gmra.mrb[0].mxu0 %v531
    %v575 = vpop.f32.mrb[0].mxu0
    %v576 = vadd.f32 0.0, %v575
    %v577 = vpop.f32.mrb[0].mxu0
    %v578 = vpop.f32.mrb[0].mxu0
    %v579 = vadd.f32 0.0, %v578
    %v580 = vpop.f32.mrb[0].mxu0
    %581 = vdwg.mxu0
    %v582 = vpack.c.bf16 %v571, %v568
    %v583 = vpack.c.bf16 %v579, %v576
    %s584 = scalar_lea.vmem %s2, 192
    %v585 = vld [vmem:[%s584] sm:$0xff]
    %v586 = vld [vmem:[%s584 + $0x8] sm:$0xff]
    %v587 = vld [vmem:[%s584 + $0x10] sm:$0xff]
    %v588 = vld [vmem:[%s584 + $0x18] sm:$0xff]
    %v589 = vld [vmem:[%s584 + $0x20] sm:$0xff]
    %v590 = vld [vmem:[%s584 + $0x28] sm:$0xff]
    %v591 = vld [vmem:[%s584 + $0x30] sm:$0xff]
    %v592 = vld [vmem:[%s584 + $0x38] sm:$0xff]
    %v593 = vld [vmem:[%s584 + $0x40] sm:$0xff]
    %v594 = vld [vmem:[%s584 + $0x48] sm:$0xff]
    %v595 = vld [vmem:[%s584 + $0x50] sm:$0xff]
    %v596 = vld [vmem:[%s584 + $0x58] sm:$0xff]
    %v609 = vunpack.c.l.b16 %v585
    %v610 = vunpack.c.h.b16 %v585
    %v611 = vunpack.c.l.b16 %v586
    %v612 = vunpack.c.h.b16 %v586
    %v613 = vunpack.c.l.b16 %v587
    %v614 = vunpack.c.h.b16 %v587
    %v615 = vunpack.c.l.b16 %v588
    %v616 = vunpack.c.h.b16 %v588
    %v617 = vunpack.c.l.b16 %v589
    %v618 = vunpack.c.h.b16 %v589
    %v619 = vunpack.c.l.b16 %v590
    %v620 = vunpack.c.h.b16 %v590
    %v621 = vunpack.c.l.b16 %v591
    %v622 = vunpack.c.h.b16 %v591
    %v623 = vunpack.c.l.b16 %v592
    %v624 = vunpack.c.h.b16 %v592
    %v625 = vunpack.c.l.b16 %v593
    %v626 = vunpack.c.h.b16 %v593
    %v627 = vunpack.c.l.b16 %v594
    %v628 = vunpack.c.h.b16 %v594
    %v629 = vunpack.c.l.b16 %v595
    %v630 = vunpack.c.h.b16 %v595
    %v631 = vunpack.c.l.b16 %v596
    %v632 = vunpack.c.h.b16 %v596
    %v633 = vpack.c.b16 %v611, %v609
    %v634 = vpack.c.b16 %v612, %v610
    %v635 = vpack.c.b16 %v615, %v613
    %v636 = vpack.c.b16 %v616, %v614
    %v637 = vpack.c.b16 %v619, %v617
    %v638 = vpack.c.b16 %v620, %v618
    %v639 = vpack.c.b16 %v623, %v621
    %v640 = vpack.c.b16 %v624, %v622
    %v641 = vpack.c.b16 %v627, %v625
    %v642 = vpack.c.b16 %v628, %v626
    %v643 = vpack.c.b16 %v631, %v629
    %v644 = vpack.c.b16 %v632, %v630
    %v658 = vsel %vm333, %v582, 0
    %v661 = vsel %vm333, %v583, 0
    %663 = vmatprep.subr.bf16.mxu0 %v634
    %664 = vmatpush1.bf16.msra.mxu0 %v633
    %665 = vmatprep.subr.bf16.mxu0 %v636
    %666 = vmatpush1.bf16.msra.mxu0 %v635
    %667 = vmatprep.subr.bf16.mxu0 %v638
    %668 = vmatpush1.bf16.msra.mxu0 %v637
    %669 = vmatprep.subr.bf16.mxu0 %v640
    %670 = vmatpush1.bf16.msra.mxu0 %v639
    %671 = vmatprep.subr.bf16.mxu0 %v642
    %672 = vmatpush1.bf16.msra.mxu0 %v641
    %673 = vmatprep.subr.bf16.mxu0 %v644
    %674 = vmatpush1.bf16.msra.mxu0 %v643
    %675 = vmatprep.subr.bf16.mxu0 0
    %676 = vmatpush1.bf16.msra.mxu0 0
    %677 = vmatprep.subr.bf16.mxu0 0
    %678 = vmatpush1.bf16.msra.mxu0 0
    %679 = vmatprep.subr.bf16.mxu0 0
    %680 = vmatpush1.bf16.msra.mxu0 0
    %681 = vmatprep.subr.bf16.mxu0 0
    %682 = vmatpush1.bf16.msra.mxu0 0
    %683 = vmatprep.subr.bf16.mxu0 0
    %684 = vmatpush1.bf16.msra.mxu0 0
    %685 = vmatprep.subr.bf16.mxu0 0
    %686 = vmatpush1.bf16.msra.mxu0 0
    %687 = vmatprep.subr.bf16.mxu0 0
    %688 = vmatpush1.bf16.msra.mxu0 0
    %689 = vmatprep.subr.bf16.mxu0 0
    %690 = vmatpush1.bf16.msra.mxu0 0
    %691 = vmatprep.subr.bf16.mxu0 0
    %692 = vmatpush1.bf16.msra.mxu0 0
    %693 = vmatprep.subr.bf16.mxu0 0
    %694 = vmatpush1.bf16.msra.mxu0 0
    %695 = vmatprep.mubr.bf16.mxu0 0
    %696 = vmatmul.mubr.bf16.gmra.mrb[0].mxu0 %v658
    %v697 = vpop.f32.mrb[0].mxu0
    %v698 = vadd.f32 0.0, %v697
    %v699 = vpop.f32.mrb[0].mxu0
    %v700 = vadd.f32 0.0, %v699
    %v701 = vpop.f32.mrb[0].mxu0
    %v702 = vadd.f32 0.0, %v701
    %v703 = vpop.f32.mrb[0].mxu0
    %v704 = vadd.f32 0.0, %v703
    %705 = vmatprep.mubr.bf16.mxu0 0
    %706 = vmatmul.mubr.bf16.gmra.mrb[0].mxu0 %v661
    %v707 = vpop.f32.mrb[0].mxu0
    %v708 = vadd.f32 0.0, %v707
    %v709 = vpop.f32.mrb[0].mxu0
    %v710 = vadd.f32 0.0, %v709
    %v711 = vpop.f32.mrb[0].mxu0
    %v712 = vadd.f32 0.0, %v711
    %v713 = vpop.f32.mrb[0].mxu0
    %v714 = vadd.f32 0.0, %v713
    %715 = vdwg.mxu0
    %v716 = vadd.f32 %v494, %v698
    %v717 = vadd.f32 %v496, %v700
    %v718 = vadd.f32 %v498, %v702
    %v719 = vadd.f32 %v500, %v704
    %v720 = vadd.f32 %v504, %v708
    %v721 = vadd.f32 %v506, %v710
    %v722 = vadd.f32 %v508, %v712
    %v723 = vadd.f32 %v510, %v714
    %v724 = vld [vmem:[%s3] sm:$0x3]
    %v726 = vlaneseq
    %v727 = vshrl.u32 %v726, 7
    %v728 = vsub.s32 0, %v727
    %v729 = vrot.slane %v724, %v728
    %v730 = vlaneseq
    %v731 = vshrl.u32 %v730, 7
    %v732 = vsub.s32 1, %v731
    %v733 = vrot.slane %v724, %v732
    %v736 = vadd.f32 %v716, %v729
    %v737 = vadd.f32 %v717, %v733
    %v738 = vadd.f32 %v718, %v729
    %v739 = vadd.f32 %v719, %v733
    %v740 = vadd.f32 %v720, %v729
    %v741 = vadd.f32 %v721, %v733
    %v742 = vadd.f32 %v722, %v729
    %v743 = vadd.f32 %v723, %v733
    %v744 = vmax.f32 %v736, 0.0
    %v745 = vmax.f32 %v737, 0.0
    %v746 = vmax.f32 %v738, 0.0
    %v747 = vmax.f32 %v739, 0.0
    %v748 = vmax.f32 %v740, 0.0
    %v749 = vmax.f32 %v741, 0.0
    %v750 = vmax.f32 %v742, 0.0
    %v751 = vmax.f32 %v743, 0.0
    %v752 = vpack.c.bf16 %v746, %v744
    %v753 = vpack.c.bf16 %v747, %v745
    %v754 = vpack.c.bf16 %v750, %v748
    %v755 = vpack.c.bf16 %v751, %v749
    %v756 = vld [vmem:[%s4] sm:$0xf]
    %v757 = vld [vmem:[%s4 + $0x4] sm:$0xf]
    %v760 = vunpack.c.l.b16 %v756
    %v761 = vunpack.c.l.b16 %v757
    %v762 = vpack.c.b16 %v761, %v760
    %vm763 = vcmask 261120
    %v765 = vsel %vm763, %v762, 0
    %767 = vmatprep.subr.bf16.mxu0 %v753
    %768 = vmatpush1.bf16.msra.mxu0 %v752
    %769 = vmatprep.subr.bf16.mxu0 %v755
    %770 = vmatpush1.bf16.msra.mxu0 %v754
    %771 = vmatprep.subr.bf16.mxu0 0
    %772 = vmatpush1.bf16.msra.mxu0 0
    %773 = vmatprep.subr.bf16.mxu0 0
    %774 = vmatpush1.bf16.msra.mxu0 0
    %775 = vmatprep.subr.bf16.mxu0 0
    %776 = vmatpush1.bf16.msra.mxu0 0
    %777 = vmatprep.subr.bf16.mxu0 0
    %778 = vmatpush1.bf16.msra.mxu0 0
    %779 = vmatprep.subr.bf16.mxu0 0
    %780 = vmatpush1.bf16.msra.mxu0 0
    %781 = vmatprep.subr.bf16.mxu0 0
    %782 = vmatpush1.bf16.msra.mxu0 0
    %783 = vmatprep.subr.bf16.mxu0 0
    %784 = vmatpush1.bf16.msra.mxu0 0
    %785 = vmatprep.subr.bf16.mxu0 0
    %786 = vmatpush1.bf16.msra.mxu0 0
    %787 = vmatprep.subr.bf16.mxu0 0
    %788 = vmatpush1.bf16.msra.mxu0 0
    %789 = vmatprep.subr.bf16.mxu0 0
    %790 = vmatpush1.bf16.msra.mxu0 0
    %791 = vmatprep.subr.bf16.mxu0 0
    %792 = vmatpush1.bf16.msra.mxu0 0
    %793 = vmatprep.subr.bf16.mxu0 0
    %794 = vmatpush1.bf16.msra.mxu0 0
    %795 = vmatprep.subr.bf16.mxu0 0
    %796 = vmatpush1.bf16.msra.mxu0 0
    %797 = vmatprep.subr.bf16.mxu0 0
    %798 = vmatpush1.bf16.msra.mxu0 0
    %799 = vmatprep.mubr.bf16.mxu0 0
    %800 = vmatmul.mubr.bf16.gmra.mrb[0].mxu0 %v765
    %v801 = vpop.f32.mrb[0].mxu0
    %v802 = vadd.f32 0.0, %v801
    %v803 = vpop.f32.mrb[0].mxu0
    %v804 = vadd.f32 0.0, %v803
    %v805 = vpop.f32.mrb[0].mxu0
    %v806 = vadd.f32 0.0, %v805
    %v807 = vpop.f32.mrb[0].mxu0
    %v808 = vadd.f32 0.0, %v807
    %809 = vdwg.mxu0
    %v810 = vpack.c.bf16 %v806, %v802
    %v811 = vpack.c.bf16 %v808, %v804
    %v812 = vld [vmem:[%s5] sm:$0xff]
    %v813 = vld [vmem:[%s5 + $0x8] sm:$0xff]
    %v814 = vld [vmem:[%s5 + $0x10] sm:$0xff]
    %v815 = vld [vmem:[%s5 + $0x18] sm:$0xff]
    %v816 = vld [vmem:[%s5 + $0x20] sm:$0xff]
    %v817 = vld [vmem:[%s5 + $0x28] sm:$0xff]
    %v818 = vld [vmem:[%s5 + $0x30] sm:$0xff]
    %v819 = vld [vmem:[%s5 + $0x38] sm:$0xff]
    %v820 = vld [vmem:[%s5 + $0x40] sm:$0xff]
    %v821 = vld [vmem:[%s5 + $0x48] sm:$0xff]
    %v822 = vld [vmem:[%s5 + $0x50] sm:$0xff]
    %v823 = vld [vmem:[%s5 + $0x58] sm:$0xff]
    %v824 = vld [vmem:[%s5 + $0x60] sm:$0xff]
    %v825 = vld [vmem:[%s5 + $0x68] sm:$0xff]
    %v826 = vld [vmem:[%s5 + $0x70] sm:$0xff]
    %v827 = vld [vmem:[%s5 + $0x78] sm:$0xff]
    %v828 = vld [vmem:[%s5 + $0x80] sm:$0xff]
    %v829 = vld [vmem:[%s5 + $0x88] sm:$0xff]
    %v830 = vld [vmem:[%s5 + $0x90] sm:$0xff]
    %v831 = vld [vmem:[%s5 + $0x98] sm:$0xff]
    %v832 = vld [vmem:[%s5 + $0xa0] sm:$0xff]
    %v833 = vld [vmem:[%s5 + $0xa8] sm:$0xff]
    %v834 = vld [vmem:[%s5 + $0xb0] sm:$0xff]
    %v835 = vld [vmem:[%s5 + $0xb8] sm:$0xff]
    %v836 = vld [vmem:[%s5 + $0xc0] sm:$0xff]
    %v837 = vld [vmem:[%s5 + $0xc8] sm:$0xff]
    %v838 = vld [vmem:[%s5 + $0xd0] sm:$0xff]
    %v839 = vld [vmem:[%s5 + $0xd8] sm:$0xff]
    %v840 = vld [vmem:[%s5 + $0xe0] sm:$0xff]
    %v841 = vld [vmem:[%s5 + $0xe8] sm:$0xff]
    %v842 = vld [vmem:[%s5 + $0xf0] sm:$0xff]
    %v843 = vld [vmem:[%s5 + $0xf8] sm:$0xff]
    %s844 = scalar_lea.vmem %s4, 8
    %v845 = vld [vmem:[%s844] sm:$0xf]
    %v846 = vld [vmem:[%s844 + $0x4] sm:$0xf]
    %v849 = vunpack.c.l.b16 %v845
    %v850 = vunpack.c.l.b16 %v846
    %v851 = vpack.c.b16 %v850, %v849
    %v853 = vsel %vm763, %v851, 0
    %855 = vmatprep.subr.bf16.mxu0 %v753
    %856 = vmatpush1.bf16.msra.mxu0 %v752
    %857 = vmatprep.subr.bf16.mxu0 %v755
    %858 = vmatpush1.bf16.msra.mxu0 %v754
    %859 = vmatprep.subr.bf16.mxu0 0
    %860 = vmatpush1.bf16.msra.mxu0 0
    %861 = vmatprep.subr.bf16.mxu0 0
    %862 = vmatpush1.bf16.msra.mxu0 0
    %863 = vmatprep.subr.bf16.mxu0 0
    %864 = vmatpush1.bf16.msra.mxu0 0
    %865 = vmatprep.subr.bf16.mxu0 0
    %866 = vmatpush1.bf16.msra.mxu0 0
    %867 = vmatprep.subr.bf16.mxu0 0
    %868 = vmatpush1.bf16.msra.mxu0 0
    %869 = vmatprep.subr.bf16.mxu0 0
    %870 = vmatpush1.bf16.msra.mxu0 0
    %871 = vmatprep.subr.bf16.mxu0 0
    %872 = vmatpush1.bf16.msra.mxu0 0
    %873 = vmatprep.subr.bf16.mxu0 0
    %874 = vmatpush1.bf16.msra.mxu0 0
    %875 = vmatprep.subr.bf16.mxu0 0
    %876 = vmatpush1.bf16.msra.mxu0 0
    %877 = vmatprep.subr.bf16.mxu0 0
    %878 = vmatpush1.bf16.msra.mxu0 0
    %879 = vmatprep.subr.bf16.mxu0 0
    %880 = vmatpush1.bf16.msra.mxu0 0
    %881 = vmatprep.subr.bf16.mxu0 0
    %882 = vmatpush1.bf16.msra.mxu0 0
    %883 = vmatprep.subr.bf16.mxu0 0
    %884 = vmatpush1.bf16.msra.mxu0 0
    %885 = vmatprep.subr.bf16.mxu0 0
    %886 = vmatpush1.bf16.msra.mxu0 0
    %887 = vmatprep.mubr.bf16.mxu0 0
    %888 = vmatmul.mubr.bf16.gmra.mrb[0].mxu0 %v853
    %v889 = vpop.f32.mrb[0].mxu0
    %v890 = vadd.f32 0.0, %v889
    %v891 = vpop.f32.mrb[0].mxu0
    %v892 = vadd.f32 0.0, %v891
    %v893 = vpop.f32.mrb[0].mxu0
    %v894 = vadd.f32 0.0, %v893
    %v895 = vpop.f32.mrb[0].mxu0
    %v896 = vadd.f32 0.0, %v895
    %897 = vdwg.mxu0
    %v898 = vpack.c.bf16 %v894, %v890
    %v899 = vpack.c.bf16 %v896, %v892
    %s900 = scalar_lea.vmem %s5, 256
    %v901 = vld [vmem:[%s900] sm:$0xff]
    %v902 = vld [vmem:[%s900 + $0x8] sm:$0xff]
    %v903 = vld [vmem:[%s900 + $0x10] sm:$0xff]
    %v904 = vld [vmem:[%s900 + $0x18] sm:$0xff]
    %v905 = vld [vmem:[%s900 + $0x20] sm:$0xff]
    %v906 = vld [vmem:[%s900 + $0x28] sm:$0xff]
    %v907 = vld [vmem:[%s900 + $0x30] sm:$0xff]
    %v908 = vld [vmem:[%s900 + $0x38] sm:$0xff]
    %v909 = vld [vmem:[%s900 + $0x40] sm:$0xff]
    %v910 = vld [vmem:[%s900 + $0x48] sm:$0xff]
    %v911 = vld [vmem:[%s900 + $0x50] sm:$0xff]
    %v912 = vld [vmem:[%s900 + $0x58] sm:$0xff]
    %v913 = vld [vmem:[%s900 + $0x60] sm:$0xff]
    %v914 = vld [vmem:[%s900 + $0x68] sm:$0xff]
    %v915 = vld [vmem:[%s900 + $0x70] sm:$0xff]
    %v916 = vld [vmem:[%s900 + $0x78] sm:$0xff]
    %v917 = vld [vmem:[%s900 + $0x80] sm:$0xff]
    %v918 = vld [vmem:[%s900 + $0x88] sm:$0xff]
    %v919 = vld [vmem:[%s900 + $0x90] sm:$0xff]
    %v920 = vld [vmem:[%s900 + $0x98] sm:$0xff]
    %v921 = vld [vmem:[%s900 + $0xa0] sm:$0xff]
    %v922 = vld [vmem:[%s900 + $0xa8] sm:$0xff]
    %v923 = vld [vmem:[%s900 + $0xb0] sm:$0xff]
    %v924 = vld [vmem:[%s900 + $0xb8] sm:$0xff]
    %v925 = vld [vmem:[%s900 + $0xc0] sm:$0xff]
    %v926 = vld [vmem:[%s900 + $0xc8] sm:$0xff]
    %v927 = vld [vmem:[%s900 + $0xd0] sm:$0xff]
    %v928 = vld [vmem:[%s900 + $0xd8] sm:$0xff]
    %v929 = vld [vmem:[%s900 + $0xe0] sm:$0xff]
    %v930 = vld [vmem:[%s900 + $0xe8] sm:$0xff]
    %v931 = vld [vmem:[%s900 + $0xf0] sm:$0xff]
    %v932 = vld [vmem:[%s900 + $0xf8] sm:$0xff]
    %v965 = vunpack.c.l.b16 %v901
    %v966 = vunpack.c.h.b16 %v901
    %v967 = vunpack.c.l.b16 %v902
    %v968 = vunpack.c.h.b16 %v902
    %v969 = vunpack.c.l.b16 %v903
    %v970 = vunpack.c.h.b16 %v903
    %v971 = vunpack.c.l.b16 %v904
    %v972 = vunpack.c.h.b16 %v904
    %v973 = vunpack.c.l.b16 %v905
    %v974 = vunpack.c.h.b16 %v905
    %v975 = vunpack.c.l.b16 %v906
    %v976 = vunpack.c.h.b16 %v906
    %v977 = vunpack.c.l.b16 %v907
    %v978 = vunpack.c.h.b16 %v907
    %v979 = vunpack.c.l.b16 %v908
    %v980 = vunpack.c.h.b16 %v908
    %v981 = vunpack.c.l.b16 %v909
    %v982 = vunpack.c.h.b16 %v909
    %v983 = vunpack.c.l.b16 %v910
    %v984 = vunpack.c.h.b16 %v910
    %v985 = vunpack.c.l.b16 %v911
    %v986 = vunpack.c.h.b16 %v911
    %v987 = vunpack.c.l.b16 %v912
    %v988 = vunpack.c.h.b16 %v912
    %v989 = vunpack.c.l.b16 %v913
    %v990 = vunpack.c.h.b16 %v913
    %v991 = vunpack.c.l.b16 %v914
    %v992 = vunpack.c.h.b16 %v914
    %v993 = vunpack.c.l.b16 %v915
    %v994 = vunpack.c.h.b16 %v915
    %v995 = vunpack.c.l.b16 %v916
    %v996 = vunpack.c.h.b16 %v916
    %v997 = vunpack.c.l.b16 %v917
    %v998 = vunpack.c.h.b16 %v917
    %v999 = vunpack.c.l.b16 %v918
    %v1000 = vunpack.c.h.b16 %v918
    %v1001 = vunpack.c.l.b16 %v919
    %v1002 = vunpack.c.h.b16 %v919
    %v1003 = vunpack.c.l.b16 %v920
    %v1004 = vunpack.c.h.b16 %v920
    %v1005 = vunpack.c.l.b16 %v921
    %v1006 = vunpack.c.h.b16 %v921
    %v1007 = vunpack.c.l.b16 %v922
    %v1008 = vunpack.c.h.b16 %v922
    %v1009 = vunpack.c.l.b16 %v923
    %v1010 = vunpack.c.h.b16 %v923
    %v1011 = vunpack.c.l.b16 %v924
    %v1012 = vunpack.c.h.b16 %v924
    %v1013 = vunpack.c.l.b16 %v925
    %v1014 = vunpack.c.h.b16 %v925
    %v1015 = vunpack.c.l.b16 %v926
    %v1016 = vunpack.c.h.b16 %v926
    %v1017 = vunpack.c.l.b16 %v927
    %v1018 = vunpack.c.h.b16 %v927
    %v1019 = vunpack.c.l.b16 %v928
    %v1020 = vunpack.c.h.b16 %v928
    %v1021 = vunpack.c.l.b16 %v929
    %v1022 = vunpack.c.h.b16 %v929
    %v1023 = vunpack.c.l.b16 %v930
    %v1024 = vunpack.c.h.b16 %v930
    %v1025 = vunpack.c.l.b16 %v931
    %v1026 = vunpack.c.h.b16 %v931
    %v1027 = vunpack.c.l.b16 %v932
    %v1028 = vunpack.c.h.b16 %v932
    %v1029 = vpack.c.b16 %v967, %v965
    %v1030 = vpack.c.b16 %v968, %v966
    %v1031 = vpack.c.b16 %v971, %v969
    %v1032 = vpack.c.b16 %v972, %v970
    %v1033 = vpack.c.b16 %v975, %v973
    %v1034 = vpack.c.b16 %v976, %v974
    %v1035 = vpack.c.b16 %v979, %v977
    %v1036 = vpack.c.b16 %v980, %v978
    %v1037 = vpack.c.b16 %v983, %v981
    %v1038 = vpack.c.b16 %v984, %v982
    %v1039 = vpack.c.b16 %v987, %v985
    %v1040 = vpack.c.b16 %v988, %v986
    %v1041 = vpack.c.b16 %v991, %v989
    %v1042 = vpack.c.b16 %v992, %v990
    %v1043 = vpack.c.b16 %v995, %v993
    %v1044 = vpack.c.b16 %v996, %v994
    %v1045 = vpack.c.b16 %v999, %v997
    %v1046 = vpack.c.b16 %v1000, %v998
    %v1047 = vpack.c.b16 %v1003, %v1001
    %v1048 = vpack.c.b16 %v1004, %v1002
    %v1049 = vpack.c.b16 %v1007, %v1005
    %v1050 = vpack.c.b16 %v1008, %v1006
    %v1051 = vpack.c.b16 %v1011, %v1009
    %v1052 = vpack.c.b16 %v1012, %v1010
    %v1053 = vpack.c.b16 %v1015, %v1013
    %v1054 = vpack.c.b16 %v1016, %v1014
    %v1055 = vpack.c.b16 %v1019, %v1017
    %v1056 = vpack.c.b16 %v1020, %v1018
    %v1057 = vpack.c.b16 %v1023, %v1021
    %v1058 = vpack.c.b16 %v1024, %v1022
    %v1059 = vpack.c.b16 %v1027, %v1025
    %v1060 = vpack.c.b16 %v1028, %v1026
    %1093 = vmatprep.subr.bf16.mxu0 %v1030
    %1094 = vmatpush1.bf16.msra.mxu0 %v1029
    %1095 = vmatprep.subr.bf16.mxu0 %v1032
    %1096 = vmatpush1.bf16.msra.mxu0 %v1031
    %1097 = vmatprep.subr.bf16.mxu0 %v1034
    %1098 = vmatpush1.bf16.msra.mxu0 %v1033
    %1099 = vmatprep.subr.bf16.mxu0 %v1036
    %1100 = vmatpush1.bf16.msra.mxu0 %v1035
    %1101 = vmatprep.subr.bf16.mxu0 %v1038
    %1102 = vmatpush1.bf16.msra.mxu0 %v1037
    %1103 = vmatprep.subr.bf16.mxu0 %v1040
    %1104 = vmatpush1.bf16.msra.mxu0 %v1039
    %1105 = vmatprep.subr.bf16.mxu0 %v1042
    %1106 = vmatpush1.bf16.msra.mxu0 %v1041
    %1107 = vmatprep.subr.bf16.mxu0 %v1044
    %1108 = vmatpush1.bf16.msra.mxu0 %v1043
    %1109 = vmatprep.subr.bf16.mxu0 %v1046
    %1110 = vmatpush1.bf16.msra.mxu0 %v1045
    %1111 = vmatprep.subr.bf16.mxu0 %v1048
    %1112 = vmatpush1.bf16.msra.mxu0 %v1047
    %1113 = vmatprep.subr.bf16.mxu0 %v1050
    %1114 = vmatpush1.bf16.msra.mxu0 %v1049
    %1115 = vmatprep.subr.bf16.mxu0 %v1052
    %1116 = vmatpush1.bf16.msra.mxu0 %v1051
    %1117 = vmatprep.subr.bf16.mxu0 %v1054
    %1118 = vmatpush1.bf16.msra.mxu0 %v1053
    %1119 = vmatprep.subr.bf16.mxu0 %v1056
    %1120 = vmatpush1.bf16.msra.mxu0 %v1055
    %1121 = vmatprep.subr.bf16.mxu0 %v1058
    %1122 = vmatpush1.bf16.msra.mxu0 %v1057
    %1123 = vmatprep.subr.bf16.mxu0 %v1060
    %1124 = vmatpush1.bf16.msra.mxu0 %v1059
    %1125 = vmatprep.mubr.bf16.mxu0 %v899
    %1126 = vmatmul.mubr.bf16.gmra.mrb[0].mxu0 %v898
    %v1127 = vpop.f32.mrb[0].mxu0
    %v1128 = vadd.f32 0.0, %v1127
    %v1129 = vpop.f32.mrb[0].mxu0
    %v1130 = vadd.f32 0.0, %v1129
    %v1131 = vpop.f32.mrb[0].mxu0
    %v1132 = vadd.f32 0.0, %v1131
    %v1133 = vpop.f32.mrb[0].mxu0
    %v1134 = vadd.f32 0.0, %v1133
    %1135 = vdwg.mxu0
    %v1168 = vunpack.c.l.b16 %v812
    %v1169 = vunpack.c.h.b16 %v812
    %v1170 = vunpack.c.l.b16 %v813
    %v1171 = vunpack.c.h.b16 %v813
    %v1172 = vunpack.c.l.b16 %v814
    %v1173 = vunpack.c.h.b16 %v814
    %v1174 = vunpack.c.l.b16 %v815
    %v1175 = vunpack.c.h.b16 %v815
    %v1176 = vunpack.c.l.b16 %v816
    %v1177 = vunpack.c.h.b16 %v816
    %v1178 = vunpack.c.l.b16 %v817
    %v1179 = vunpack.c.h.b16 %v817
    %v1180 = vunpack.c.l.b16 %v818
    %v1181 = vunpack.c.h.b16 %v818
    %v1182 = vunpack.c.l.b16 %v819
    %v1183 = vunpack.c.h.b16 %v819
    %v1184 = vunpack.c.l.b16 %v820
    %v1185 = vunpack.c.h.b16 %v820
    %v1186 = vunpack.c.l.b16 %v821
    %v1187 = vunpack.c.h.b16 %v821
    %v1188 = vunpack.c.l.b16 %v822
    %v1189 = vunpack.c.h.b16 %v822
    %v1190 = vunpack.c.l.b16 %v823
    %v1191 = vunpack.c.h.b16 %v823
    %v1192 = vunpack.c.l.b16 %v824
    %v1193 = vunpack.c.h.b16 %v824
    %v1194 = vunpack.c.l.b16 %v825
    %v1195 = vunpack.c.h.b16 %v825
    %v1196 = vunpack.c.l.b16 %v826
    %v1197 = vunpack.c.h.b16 %v826
    %v1198 = vunpack.c.l.b16 %v827
    %v1199 = vunpack.c.h.b16 %v827
    %v1200 = vunpack.c.l.b16 %v828
    %v1201 = vunpack.c.h.b16 %v828
    %v1202 = vunpack.c.l.b16 %v829
    %v1203 = vunpack.c.h.b16 %v829
    %v1204 = vunpack.c.l.b16 %v830
    %v1205 = vunpack.c.h.b16 %v830
    %v1206 = vunpack.c.l.b16 %v831
    %v1207 = vunpack.c.h.b16 %v831
    %v1208 = vunpack.c.l.b16 %v832
    %v1209 = vunpack.c.h.b16 %v832
    %v1210 = vunpack.c.l.b16 %v833
    %v1211 = vunpack.c.h.b16 %v833
    %v1212 = vunpack.c.l.b16 %v834
    %v1213 = vunpack.c.h.b16 %v834
    %v1214 = vunpack.c.l.b16 %v835
    %v1215 = vunpack.c.h.b16 %v835
    %v1216 = vunpack.c.l.b16 %v836
    %v1217 = vunpack.c.h.b16 %v836
    %v1218 = vunpack.c.l.b16 %v837
    %v1219 = vunpack.c.h.b16 %v837
    %v1220 = vunpack.c.l.b16 %v838
    %v1221 = vunpack.c.h.b16 %v838
    %v1222 = vunpack.c.l.b16 %v839
    %v1223 = vunpack.c.h.b16 %v839
    %v1224 = vunpack.c.l.b16 %v840
    %v1225 = vunpack.c.h.b16 %v840
    %v1226 = vunpack.c.l.b16 %v841
    %v1227 = vunpack.c.h.b16 %v841
    %v1228 = vunpack.c.l.b16 %v842
    %v1229 = vunpack.c.h.b16 %v842
    %v1230 = vunpack.c.l.b16 %v843
    %v1231 = vunpack.c.h.b16 %v843
    %v1232 = vpack.c.b16 %v1170, %v1168
    %v1233 = vpack.c.b16 %v1171, %v1169
    %v1234 = vpack.c.b16 %v1174, %v1172
    %v1235 = vpack.c.b16 %v1175, %v1173
    %v1236 = vpack.c.b16 %v1178, %v1176
    %v1237 = vpack.c.b16 %v1179, %v1177
    %v1238 = vpack.c.b16 %v1182, %v1180
    %v1239 = vpack.c.b16 %v1183, %v1181
    %v1240 = vpack.c.b16 %v1186, %v1184
    %v1241 = vpack.c.b16 %v1187, %v1185
    %v1242 = vpack.c.b16 %v1190, %v1188
    %v1243 = vpack.c.b16 %v1191, %v1189
    %v1244 = vpack.c.b16 %v1194, %v1192
    %v1245 = vpack.c.b16 %v1195, %v1193
    %v1246 = vpack.c.b16 %v1198, %v1196
    %v1247 = vpack.c.b16 %v1199, %v1197
    %v1248 = vpack.c.b16 %v1202, %v1200
    %v1249 = vpack.c.b16 %v1203, %v1201
    %v1250 = vpack.c.b16 %v1206, %v1204
    %v1251 = vpack.c.b16 %v1207, %v1205
    %v1252 = vpack.c.b16 %v1210, %v1208
    %v1253 = vpack.c.b16 %v1211, %v1209
    %v1254 = vpack.c.b16 %v1214, %v1212
    %v1255 = vpack.c.b16 %v1215, %v1213
    %v1256 = vpack.c.b16 %v1218, %v1216
    %v1257 = vpack.c.b16 %v1219, %v1217
    %v1258 = vpack.c.b16 %v1222, %v1220
    %v1259 = vpack.c.b16 %v1223, %v1221
    %v1260 = vpack.c.b16 %v1226, %v1224
    %v1261 = vpack.c.b16 %v1227, %v1225
    %v1262 = vpack.c.b16 %v1230, %v1228
    %v1263 = vpack.c.b16 %v1231, %v1229
    %1296 = vmatprep.subr.bf16.mxu0 %v1233
    %1297 = vmatpush1.bf16.msra.mxu0 %v1232
    %1298 = vmatprep.subr.bf16.mxu0 %v1235
    %1299 = vmatpush1.bf16.msra.mxu0 %v1234
    %1300 = vmatprep.subr.bf16.mxu0 %v1237
    %1301 = vmatpush1.bf16.msra.mxu0 %v1236
    %1302 = vmatprep.subr.bf16.mxu0 %v1239
    %1303 = vmatpush1.bf16.msra.mxu0 %v1238
    %1304 = vmatprep.subr.bf16.mxu0 %v1241
    %1305 = vmatpush1.bf16.msra.mxu0 %v1240
    %1306 = vmatprep.subr.bf16.mxu0 %v1243
    %1307 = vmatpush1.bf16.msra.mxu0 %v1242
    %1308 = vmatprep.subr.bf16.mxu0 %v1245
    %1309 = vmatpush1.bf16.msra.mxu0 %v1244
    %1310 = vmatprep.subr.bf16.mxu0 %v1247
    %1311 = vmatpush1.bf16.msra.mxu0 %v1246
    %1312 = vmatprep.subr.bf16.mxu0 %v1249
    %1313 = vmatpush1.bf16.msra.mxu0 %v1248
    %1314 = vmatprep.subr.bf16.mxu0 %v1251
    %1315 = vmatpush1.bf16.msra.mxu0 %v1250
    %1316 = vmatprep.subr.bf16.mxu0 %v1253
    %1317 = vmatpush1.bf16.msra.mxu0 %v1252
    %1318 = vmatprep.subr.bf16.mxu0 %v1255
    %1319 = vmatpush1.bf16.msra.mxu0 %v1254
    %1320 = vmatprep.subr.bf16.mxu0 %v1257
    %1321 = vmatpush1.bf16.msra.mxu0 %v1256
    %1322 = vmatprep.subr.bf16.mxu0 %v1259
    %1323 = vmatpush1.bf16.msra.mxu0 %v1258
    %1324 = vmatprep.subr.bf16.mxu0 %v1261
    %1325 = vmatpush1.bf16.msra.mxu0 %v1260
    %1326 = vmatprep.subr.bf16.mxu0 %v1263
    %1327 = vmatpush1.bf16.msra.mxu0 %v1262
    %1328 = vmatprep.mubr.bf16.mxu0 %v811
    %1329 = vmatmul.mubr.bf16.gmra.mrb[0].mxu0 %v810
    %v1330 = vpop.f32.mrb[0].mxu0
    %v1331 = vadd.f32 %v1128, %v1330
    %v1332 = vpop.f32.mrb[0].mxu0
    %v1333 = vadd.f32 %v1130, %v1332
    %v1334 = vpop.f32.mrb[0].mxu0
    %v1335 = vadd.f32 %v1132, %v1334
    %v1336 = vpop.f32.mrb[0].mxu0
    %v1337 = vadd.f32 %v1134, %v1336
    %1338 = vdwg.mxu0
    %s1339 = scalar_lea.vmem %s4, 16
    %v1340 = vld [vmem:[%s1339] sm:$0xf]
    %v1341 = vld [vmem:[%s1339 + $0x4] sm:$0xf]
    %v1344 = vunpack.c.l.b16 %v1340
    %v1345 = vunpack.c.l.b16 %v1341
    %v1346 = vpack.c.b16 %v1345, %v1344
    %v1348 = vsel %vm763, %v1346, 0
    %1350 = vmatprep.subr.bf16.mxu0 %v753
    %1351 = vmatpush1.bf16.msra.mxu0 %v752
    %1352 = vmatprep.subr.bf16.mxu0 %v755
    %1353 = vmatpush1.bf16.msra.mxu0 %v754
    %1354 = vmatprep.subr.bf16.mxu0 0
    %1355 = vmatpush1.bf16.msra.mxu0 0
    %1356 = vmatprep.subr.bf16.mxu0 0
    %1357 = vmatpush1.bf16.msra.mxu0 0
    %1358 = vmatprep.subr.bf16.mxu0 0
    %1359 = vmatpush1.bf16.msra.mxu0 0
    %1360 = vmatprep.subr.bf16.mxu0 0
    %1361 = vmatpush1.bf16.msra.mxu0 0
    %1362 = vmatprep.subr.bf16.mxu0 0
    %1363 = vmatpush1.bf16.msra.mxu0 0
    %1364 = vmatprep.subr.bf16.mxu0 0
    %1365 = vmatpush1.bf16.msra.mxu0 0
    %1366 = vmatprep.subr.bf16.mxu0 0
    %1367 = vmatpush1.bf16.msra.mxu0 0
    %1368 = vmatprep.subr.bf16.mxu0 0
    %1369 = vmatpush1.bf16.msra.mxu0 0
    %1370 = vmatprep.subr.bf16.mxu0 0
    %1371 = vmatpush1.bf16.msra.mxu0 0
    %1372 = vmatprep.subr.bf16.mxu0 0
    %1373 = vmatpush1.bf16.msra.mxu0 0
    %1374 = vmatprep.subr.bf16.mxu0 0
    %1375 = vmatpush1.bf16.msra.mxu0 0
    %1376 = vmatprep.subr.bf16.mxu0 0
    %1377 = vmatpush1.bf16.msra.mxu0 0
    %1378 = vmatprep.subr.bf16.mxu0 0
    %1379 = vmatpush1.bf16.msra.mxu0 0
    %1380 = vmatprep.subr.bf16.mxu0 0
    %1381 = vmatpush1.bf16.msra.mxu0 0
    %1382 = vmatprep.mubr.bf16.mxu0 0
    %1383 = vmatmul.mubr.bf16.gmra.mrb[0].mxu0 %v1348
    %v1384 = vpop.f32.mrb[0].mxu0
    %v1385 = vadd.f32 0.0, %v1384
    %v1386 = vpop.f32.mrb[0].mxu0
    %v1387 = vadd.f32 0.0, %v1386
    %v1388 = vpop.f32.mrb[0].mxu0
    %v1389 = vadd.f32 0.0, %v1388
    %v1390 = vpop.f32.mrb[0].mxu0
    %v1391 = vadd.f32 0.0, %v1390
    %1392 = vdwg.mxu0
    %v1393 = vpack.c.bf16 %v1389, %v1385
    %v1394 = vpack.c.bf16 %v1391, %v1387
    %s1395 = scalar_lea.vmem %s5, 512
    %v1396 = vld [vmem:[%s1395] sm:$0xff]
    %v1397 = vld [vmem:[%s1395 + $0x8] sm:$0xff]
    %v1398 = vld [vmem:[%s1395 + $0x10] sm:$0xff]
    %v1399 = vld [vmem:[%s1395 + $0x18] sm:$0xff]
    %v1400 = vld [vmem:[%s1395 + $0x20] sm:$0xff]
    %v1401 = vld [vmem:[%s1395 + $0x28] sm:$0xff]
    %v1402 = vld [vmem:[%s1395 + $0x30] sm:$0xff]
    %v1403 = vld [vmem:[%s1395 + $0x38] sm:$0xff]
    %v1404 = vld [vmem:[%s1395 + $0x40] sm:$0xff]
    %v1405 = vld [vmem:[%s1395 + $0x48] sm:$0xff]
    %v1406 = vld [vmem:[%s1395 + $0x50] sm:$0xff]
    %v1407 = vld [vmem:[%s1395 + $0x58] sm:$0xff]
    %v1408 = vld [vmem:[%s1395 + $0x60] sm:$0xff]
    %v1409 = vld [vmem:[%s1395 + $0x68] sm:$0xff]
    %v1410 = vld [vmem:[%s1395 + $0x70] sm:$0xff]
    %v1411 = vld [vmem:[%s1395 + $0x78] sm:$0xff]
    %v1412 = vld [vmem:[%s1395 + $0x80] sm:$0xff]
    %v1413 = vld [vmem:[%s1395 + $0x88] sm:$0xff]
    %v1414 = vld [vmem:[%s1395 + $0x90] sm:$0xff]
    %v1415 = vld [vmem:[%s1395 + $0x98] sm:$0xff]
    %v1416 = vld [vmem:[%s1395 + $0xa0] sm:$0xff]
    %v1417 = vld [vmem:[%s1395 + $0xa8] sm:$0xff]
    %v1418 = vld [vmem:[%s1395 + $0xb0] sm:$0xff]
    %v1419 = vld [vmem:[%s1395 + $0xb8] sm:$0xff]
    %v1420 = vld [vmem:[%s1395 + $0xc0] sm:$0xff]
    %v1421 = vld [vmem:[%s1395 + $0xc8] sm:$0xff]
    %v1422 = vld [vmem:[%s1395 + $0xd0] sm:$0xff]
    %v1423 = vld [vmem:[%s1395 + $0xd8] sm:$0xff]
    %v1424 = vld [vmem:[%s1395 + $0xe0] sm:$0xff]
    %v1425 = vld [vmem:[%s1395 + $0xe8] sm:$0xff]
    %v1426 = vld [vmem:[%s1395 + $0xf0] sm:$0xff]
    %v1427 = vld [vmem:[%s1395 + $0xf8] sm:$0xff]
    %v1460 = vunpack.c.l.b16 %v1396
    %v1461 = vunpack.c.h.b16 %v1396
    %v1462 = vunpack.c.l.b16 %v1397
    %v1463 = vunpack.c.h.b16 %v1397
    %v1464 = vunpack.c.l.b16 %v1398
    %v1465 = vunpack.c.h.b16 %v1398
    %v1466 = vunpack.c.l.b16 %v1399
    %v1467 = vunpack.c.h.b16 %v1399
    %v1468 = vunpack.c.l.b16 %v1400
    %v1469 = vunpack.c.h.b16 %v1400
    %v1470 = vunpack.c.l.b16 %v1401
    %v1471 = vunpack.c.h.b16 %v1401
    %v1472 = vunpack.c.l.b16 %v1402
    %v1473 = vunpack.c.h.b16 %v1402
    %v1474 = vunpack.c.l.b16 %v1403
    %v1475 = vunpack.c.h.b16 %v1403
    %v1476 = vunpack.c.l.b16 %v1404
    %v1477 = vunpack.c.h.b16 %v1404
    %v1478 = vunpack.c.l.b16 %v1405
    %v1479 = vunpack.c.h.b16 %v1405
    %v1480 = vunpack.c.l.b16 %v1406
    %v1481 = vunpack.c.h.b16 %v1406
    %v1482 = vunpack.c.l.b16 %v1407
    %v1483 = vunpack.c.h.b16 %v1407
    %v1484 = vunpack.c.l.b16 %v1408
    %v1485 = vunpack.c.h.b16 %v1408
    %v1486 = vunpack.c.l.b16 %v1409
    %v1487 = vunpack.c.h.b16 %v1409
    %v1488 = vunpack.c.l.b16 %v1410
    %v1489 = vunpack.c.h.b16 %v1410
    %v1490 = vunpack.c.l.b16 %v1411
    %v1491 = vunpack.c.h.b16 %v1411
    %v1492 = vunpack.c.l.b16 %v1412
    %v1493 = vunpack.c.h.b16 %v1412
    %v1494 = vunpack.c.l.b16 %v1413
    %v1495 = vunpack.c.h.b16 %v1413
    %v1496 = vunpack.c.l.b16 %v1414
    %v1497 = vunpack.c.h.b16 %v1414
    %v1498 = vunpack.c.l.b16 %v1415
    %v1499 = vunpack.c.h.b16 %v1415
    %v1500 = vunpack.c.l.b16 %v1416
    %v1501 = vunpack.c.h.b16 %v1416
    %v1502 = vunpack.c.l.b16 %v1417
    %v1503 = vunpack.c.h.b16 %v1417
    %v1504 = vunpack.c.l.b16 %v1418
    %v1505 = vunpack.c.h.b16 %v1418
    %v1506 = vunpack.c.l.b16 %v1419
    %v1507 = vunpack.c.h.b16 %v1419
    %v1508 = vunpack.c.l.b16 %v1420
    %v1509 = vunpack.c.h.b16 %v1420
    %v1510 = vunpack.c.l.b16 %v1421
    %v1511 = vunpack.c.h.b16 %v1421
    %v1512 = vunpack.c.l.b16 %v1422
    %v1513 = vunpack.c.h.b16 %v1422
    %v1514 = vunpack.c.l.b16 %v1423
    %v1515 = vunpack.c.h.b16 %v1423
    %v1516 = vunpack.c.l.b16 %v1424
    %v1517 = vunpack.c.h.b16 %v1424
    %v1518 = vunpack.c.l.b16 %v1425
    %v1519 = vunpack.c.h.b16 %v1425
    %v1520 = vunpack.c.l.b16 %v1426
    %v1521 = vunpack.c.h.b16 %v1426
    %v1522 = vunpack.c.l.b16 %v1427
    %v1523 = vunpack.c.h.b16 %v1427
    %v1524 = vpack.c.b16 %v1462, %v1460
    %v1525 = vpack.c.b16 %v1463, %v1461
    %v1526 = vpack.c.b16 %v1466, %v1464
    %v1527 = vpack.c.b16 %v1467, %v1465
    %v1528 = vpack.c.b16 %v1470, %v1468
    %v1529 = vpack.c.b16 %v1471, %v1469
    %v1530 = vpack.c.b16 %v1474, %v1472
    %v1531 = vpack.c.b16 %v1475, %v1473
    %v1532 = vpack.c.b16 %v1478, %v1476
    %v1533 = vpack.c.b16 %v1479, %v1477
    %v1534 = vpack.c.b16 %v1482, %v1480
    %v1535 = vpack.c.b16 %v1483, %v1481
    %v1536 = vpack.c.b16 %v1486, %v1484
    %v1537 = vpack.c.b16 %v1487, %v1485
    %v1538 = vpack.c.b16 %v1490, %v1488
    %v1539 = vpack.c.b16 %v1491, %v1489
    %v1540 = vpack.c.b16 %v1494, %v1492
    %v1541 = vpack.c.b16 %v1495, %v1493
    %v1542 = vpack.c.b16 %v1498, %v1496
    %v1543 = vpack.c.b16 %v1499, %v1497
    %v1544 = vpack.c.b16 %v1502, %v1500
    %v1545 = vpack.c.b16 %v1503, %v1501
    %v1546 = vpack.c.b16 %v1506, %v1504
    %v1547 = vpack.c.b16 %v1507, %v1505
    %v1548 = vpack.c.b16 %v1510, %v1508
    %v1549 = vpack.c.b16 %v1511, %v1509
    %v1550 = vpack.c.b16 %v1514, %v1512
    %v1551 = vpack.c.b16 %v1515, %v1513
    %v1552 = vpack.c.b16 %v1518, %v1516
    %v1553 = vpack.c.b16 %v1519, %v1517
    %v1554 = vpack.c.b16 %v1522, %v1520
    %v1555 = vpack.c.b16 %v1523, %v1521
    %1588 = vmatprep.subr.bf16.mxu0 %v1525
    %1589 = vmatpush1.bf16.msra.mxu0 %v1524
    %1590 = vmatprep.subr.bf16.mxu0 %v1527
    %1591 = vmatpush1.bf16.msra.mxu0 %v1526
    %1592 = vmatprep.subr.bf16.mxu0 %v1529
    %1593 = vmatpush1.bf16.msra.mxu0 %v1528
    %1594 = vmatprep.subr.bf16.mxu0 %v1531
    %1595 = vmatpush1.bf16.msra.mxu0 %v1530
    %1596 = vmatprep.subr.bf16.mxu0 %v1533
    %1597 = vmatpush1.bf16.msra.mxu0 %v1532
    %1598 = vmatprep.subr.bf16.mxu0 %v1535
    %1599 = vmatpush1.bf16.msra.mxu0 %v1534
    %1600 = vmatprep.subr.bf16.mxu0 %v1537
    %1601 = vmatpush1.bf16.msra.mxu0 %v1536
    %1602 = vmatprep.subr.bf16.mxu0 %v1539
    %1603 = vmatpush1.bf16.msra.mxu0 %v1538
    %1604 = vmatprep.subr.bf16.mxu0 %v1541
    %1605 = vmatpush1.bf16.msra.mxu0 %v1540
    %1606 = vmatprep.subr.bf16.mxu0 %v1543
    %1607 = vmatpush1.bf16.msra.mxu0 %v1542
    %1608 = vmatprep.subr.bf16.mxu0 %v1545
    %1609 = vmatpush1.bf16.msra.mxu0 %v1544
    %1610 = vmatprep.subr.bf16.mxu0 %v1547
    %1611 = vmatpush1.bf16.msra.mxu0 %v1546
    %1612 = vmatprep.subr.bf16.mxu0 %v1549
    %1613 = vmatpush1.bf16.msra.mxu0 %v1548
    %1614 = vmatprep.subr.bf16.mxu0 %v1551
    %1615 = vmatpush1.bf16.msra.mxu0 %v1550
    %1616 = vmatprep.subr.bf16.mxu0 %v1553
    %1617 = vmatpush1.bf16.msra.mxu0 %v1552
    %1618 = vmatprep.subr.bf16.mxu0 %v1555
    %1619 = vmatpush1.bf16.msra.mxu0 %v1554
    %1620 = vmatprep.mubr.bf16.mxu0 %v1394
    %1621 = vmatmul.mubr.bf16.gmra.mrb[0].mxu0 %v1393
    %v1622 = vpop.f32.mrb[0].mxu0
    %v1623 = vadd.f32 0.0, %v1622
    %v1624 = vpop.f32.mrb[0].mxu0
    %v1625 = vadd.f32 0.0, %v1624
    %v1626 = vpop.f32.mrb[0].mxu0
    %v1627 = vadd.f32 0.0, %v1626
    %v1628 = vpop.f32.mrb[0].mxu0
    %v1629 = vadd.f32 0.0, %v1628
    %1630 = vdwg.mxu0
    %v1631 = vadd.f32 %v1331, %v1623
    %v1632 = vadd.f32 %v1333, %v1625
    %v1633 = vadd.f32 %v1335, %v1627
    %v1634 = vadd.f32 %v1337, %v1629
    %v1635 = vld [vmem:[%s6] sm:$0x3]
    %v1637 = vlaneseq
    %v1638 = vshrl.u32 %v1637, 7
    %v1639 = vsub.s32 0, %v1638
    %v1640 = vrot.slane %v1635, %v1639
    %v1641 = vlaneseq
    %v1642 = vshrl.u32 %v1641, 7
    %v1643 = vsub.s32 1, %v1642
    %v1644 = vrot.slane %v1635, %v1643
    %v1647 = vadd.f32 %v1631, %v1640
    %v1648 = vadd.f32 %v1632, %v1644
    %v1649 = vadd.f32 %v1633, %v1640
    %v1650 = vadd.f32 %v1634, %v1644
    %v1651 = vmax.f32 %v1647, 0.0
    %v1652 = vmax.f32 %v1648, 0.0
    %v1653 = vmax.f32 %v1649, 0.0
    %v1654 = vmax.f32 %v1650, 0.0
    %v1655 = vpack.c.bf16 %v1653, %v1651
    %v1656 = vpack.c.bf16 %v1654, %v1652
    %v1657 = vld [vmem:[%s7] sm:$0xf]
    %v1658 = vld [vmem:[%s7 + $0x4] sm:$0xf]
    %v1659 = vld [vmem:[%s7 + $0x8] sm:$0xf]
    %v1660 = vld [vmem:[%s7 + $0xc] sm:$0xf]
    %v1665 = vunpack.c.l.b16 %v1657
    %v1666 = vunpack.c.l.b16 %v1658
    %v1667 = vunpack.c.l.b16 %v1659
    %v1668 = vunpack.c.l.b16 %v1660
    %v1669 = vpack.c.b16 %v1666, %v1665
    %v1670 = vpack.c.b16 %v1668, %v1667
    %v1672 = vsel %vm763, %v1669, 0
    %v1675 = vsel %vm763, %v1670, 0
    %1677 = vmatprep.subr.bf16.mxu0 %v753
    %1678 = vmatpush1.bf16.msra.mxu0 %v752
    %1679 = vmatprep.subr.bf16.mxu0 %v755
    %1680 = vmatpush1.bf16.msra.mxu0 %v754
    %1681 = vmatprep.subr.bf16.mxu0 0
    %1682 = vmatpush1.bf16.msra.mxu0 0
    %1683 = vmatprep.subr.bf16.mxu0 0
    %1684 = vmatpush1.bf16.msra.mxu0 0
    %1685 = vmatprep.subr.bf16.mxu0 0
    %1686 = vmatpush1.bf16.msra.mxu0 0
    %1687 = vmatprep.subr.bf16.mxu0 0
    %1688 = vmatpush1.bf16.msra.mxu0 0
    %1689 = vmatprep.subr.bf16.mxu0 0
    %1690 = vmatpush1.bf16.msra.mxu0 0
    %1691 = vmatprep.subr.bf16.mxu0 0
    %1692 = vmatpush1.bf16.msra.mxu0 0
    %1693 = vmatprep.subr.bf16.mxu0 0
    %1694 = vmatpush1.bf16.msra.mxu0 0
    %1695 = vmatprep.subr.bf16.mxu0 0
    %1696 = vmatpush1.bf16.msra.mxu0 0
    %1697 = vmatprep.subr.bf16.mxu0 0
    %1698 = vmatpush1.bf16.msra.mxu0 0
    %1699 = vmatprep.subr.bf16.mxu0 0
    %1700 = vmatpush1.bf16.msra.mxu0 0
    %1701 = vmatprep.subr.bf16.mxu0 0
    %1702 = vmatpush1.bf16.msra.mxu0 0
    %1703 = vmatprep.subr.bf16.mxu0 0
    %1704 = vmatpush1.bf16.msra.mxu0 0
    %1705 = vmatprep.subr.bf16.mxu0 0
    %1706 = vmatpush1.bf16.msra.mxu0 0
    %1707 = vmatprep.subr.bf16.mxu0 0
    %1708 = vmatpush1.bf16.msra.mxu0 0
    %1709 = vmatprep.mubr.bf16.mxu0 0
    %1710 = vmatmul.mubr.bf16.gmra.mrb[0].mxu0 %v1672
    %v1711 = vpop.f32.mrb[0].mxu0
    %v1712 = vadd.f32 0.0, %v1711
    %v1713 = vpop.f32.mrb[0].mxu0
    %v1714 = vadd.f32 0.0, %v1713
    %v1715 = vpop.f32.mrb[0].mxu0
    %v1716 = vadd.f32 0.0, %v1715
    %v1717 = vpop.f32.mrb[0].mxu0
    %v1718 = vadd.f32 0.0, %v1717
    %1719 = vmatprep.mubr.bf16.mxu0 0
    %1720 = vmatmul.mubr.bf16.gmra.mrb[0].mxu0 %v1675
    %v1721 = vpop.f32.mrb[0].mxu0
    %v1722 = vadd.f32 0.0, %v1721
    %v1723 = vpop.f32.mrb[0].mxu0
    %v1724 = vadd.f32 0.0, %v1723
    %v1725 = vpop.f32.mrb[0].mxu0
    %v1726 = vadd.f32 0.0, %v1725
    %v1727 = vpop.f32.mrb[0].mxu0
    %v1728 = vadd.f32 0.0, %v1727
    %1729 = vdwg.mxu0
    %v1730 = vpack.c.bf16 %v1716, %v1712
    %v1731 = vpack.c.bf16 %v1718, %v1714
    %v1732 = vpack.c.bf16 %v1726, %v1722
    %v1733 = vpack.c.bf16 %v1728, %v1724
    %v1734 = vld [vmem:[%s8] sm:$0xff]
    %v1735 = vld [vmem:[%s8 + $0x8] sm:$0xff]
    %v1736 = vld [vmem:[%s8 + $0x10] sm:$0xff]
    %v1737 = vld [vmem:[%s8 + $0x18] sm:$0xff]
    %v1738 = vld [vmem:[%s8 + $0x20] sm:$0xff]
    %v1739 = vld [vmem:[%s8 + $0x28] sm:$0xff]
    %v1740 = vld [vmem:[%s8 + $0x30] sm:$0xff]
    %v1741 = vld [vmem:[%s8 + $0x38] sm:$0xff]
    %v1742 = vld [vmem:[%s8 + $0x40] sm:$0xff]
    %v1743 = vld [vmem:[%s8 + $0x48] sm:$0xff]
    %v1744 = vld [vmem:[%s8 + $0x50] sm:$0xff]
    %v1745 = vld [vmem:[%s8 + $0x58] sm:$0xff]
    %v1746 = vld [vmem:[%s8 + $0x60] sm:$0xff]
    %v1747 = vld [vmem:[%s8 + $0x68] sm:$0xff]
    %v1748 = vld [vmem:[%s8 + $0x70] sm:$0xff]
    %v1749 = vld [vmem:[%s8 + $0x78] sm:$0xff]
    %v1750 = vld [vmem:[%s8 + $0x80] sm:$0xff]
    %v1751 = vld [vmem:[%s8 + $0x88] sm:$0xff]
    %v1752 = vld [vmem:[%s8 + $0x90] sm:$0xff]
    %v1753 = vld [vmem:[%s8 + $0x98] sm:$0xff]
    %v1754 = vld [vmem:[%s8 + $0xa0] sm:$0xff]
    %v1755 = vld [vmem:[%s8 + $0xa8] sm:$0xff]
    %v1756 = vld [vmem:[%s8 + $0xb0] sm:$0xff]
    %v1757 = vld [vmem:[%s8 + $0xb8] sm:$0xff]
    %v1758 = vld [vmem:[%s8 + $0xc0] sm:$0xff]
    %v1759 = vld [vmem:[%s8 + $0xc8] sm:$0xff]
    %v1760 = vld [vmem:[%s8 + $0xd0] sm:$0xff]
    %v1761 = vld [vmem:[%s8 + $0xd8] sm:$0xff]
    %v1762 = vld [vmem:[%s8 + $0xe0] sm:$0xff]
    %v1763 = vld [vmem:[%s8 + $0xe8] sm:$0xff]
    %v1764 = vld [vmem:[%s8 + $0xf0] sm:$0xff]
    %v1765 = vld [vmem:[%s8 + $0xf8] sm:$0xff]
    %v1766 = vld [vmem:[%s10] sm:$0xff]
    %v1767 = vld [vmem:[%s10 + $0x8] sm:$0xff]
    %v1768 = vld [vmem:[%s10 + $0x10] sm:$0xff]
    %v1769 = vld [vmem:[%s10 + $0x18] sm:$0xff]
    %v1770 = vld [vmem:[%s10 + $0x20] sm:$0xff]
    %v1771 = vld [vmem:[%s10 + $0x28] sm:$0xff]
    %v1772 = vld [vmem:[%s10 + $0x30] sm:$0xff]
    %v1773 = vld [vmem:[%s10 + $0x38] sm:$0xff]
    %v1774 = vld [vmem:[%s10 + $0x40] sm:$0xff]
    %v1775 = vld [vmem:[%s10 + $0x48] sm:$0xff]
    %v1776 = vld [vmem:[%s10 + $0x50] sm:$0xff]
    %v1777 = vld [vmem:[%s10 + $0x58] sm:$0xff]
    %v1778 = vld [vmem:[%s10 + $0x60] sm:$0xff]
    %v1779 = vld [vmem:[%s10 + $0x68] sm:$0xff]
    %v1780 = vld [vmem:[%s10 + $0x70] sm:$0xff]
    %v1781 = vld [vmem:[%s10 + $0x78] sm:$0xff]
    %v1782 = vld [vmem:[%s10 + $0x80] sm:$0xff]
    %v1783 = vld [vmem:[%s10 + $0x88] sm:$0xff]
    %v1784 = vld [vmem:[%s10 + $0x90] sm:$0xff]
    %v1785 = vld [vmem:[%s10 + $0x98] sm:$0xff]
    %v1786 = vld [vmem:[%s10 + $0xa0] sm:$0xff]
    %v1787 = vld [vmem:[%s10 + $0xa8] sm:$0xff]
    %v1788 = vld [vmem:[%s10 + $0xb0] sm:$0xff]
    %v1789 = vld [vmem:[%s10 + $0xb8] sm:$0xff]
    %v1790 = vld [vmem:[%s10 + $0xc0] sm:$0xff]
    %v1791 = vld [vmem:[%s10 + $0xc8] sm:$0xff]
    %v1792 = vld [vmem:[%s10 + $0xd0] sm:$0xff]
    %v1793 = vld [vmem:[%s10 + $0xd8] sm:$0xff]
    %v1794 = vld [vmem:[%s10 + $0xe0] sm:$0xff]
    %v1795 = vld [vmem:[%s10 + $0xe8] sm:$0xff]
    %v1796 = vld [vmem:[%s10 + $0xf0] sm:$0xff]
    %v1797 = vld [vmem:[%s10 + $0xf8] sm:$0xff]
    %s1798 = scalar_lea.vmem %s7, 16
    %v1799 = vld [vmem:[%s1798] sm:$0xf]
    %v1800 = vld [vmem:[%s1798 + $0x4] sm:$0xf]
    %v1801 = vld [vmem:[%s1798 + $0x8] sm:$0xf]
    %v1802 = vld [vmem:[%s1798 + $0xc] sm:$0xf]
    %v1807 = vunpack.c.l.b16 %v1799
    %v1808 = vunpack.c.l.b16 %v1800
    %v1809 = vunpack.c.l.b16 %v1801
    %v1810 = vunpack.c.l.b16 %v1802
    %v1811 = vpack.c.b16 %v1808, %v1807
    %v1812 = vpack.c.b16 %v1810, %v1809
    %v1814 = vsel %vm763, %v1811, 0
    %v1817 = vsel %vm763, %v1812, 0
    %1819 = vmatprep.subr.bf16.mxu0 %v753
    %1820 = vmatpush1.bf16.msra.mxu0 %v752
    %1821 = vmatprep.subr.bf16.mxu0 %v755
    %1822 = vmatpush1.bf16.msra.mxu0 %v754
    %1823 = vmatprep.subr.bf16.mxu0 0
    %1824 = vmatpush1.bf16.msra.mxu0 0
    %1825 = vmatprep.subr.bf16.mxu0 0
    %1826 = vmatpush1.bf16.msra.mxu0 0
    %1827 = vmatprep.subr.bf16.mxu0 0
    %1828 = vmatpush1.bf16.msra.mxu0 0
    %1829 = vmatprep.subr.bf16.mxu0 0
    %1830 = vmatpush1.bf16.msra.mxu0 0
    %1831 = vmatprep.subr.bf16.mxu0 0
    %1832 = vmatpush1.bf16.msra.mxu0 0
    %1833 = vmatprep.subr.bf16.mxu0 0
    %1834 = vmatpush1.bf16.msra.mxu0 0
    %1835 = vmatprep.subr.bf16.mxu0 0
    %1836 = vmatpush1.bf16.msra.mxu0 0
    %1837 = vmatprep.subr.bf16.mxu0 0
    %1838 = vmatpush1.bf16.msra.mxu0 0
    %1839 = vmatprep.subr.bf16.mxu0 0
    %1840 = vmatpush1.bf16.msra.mxu0 0
    %1841 = vmatprep.subr.bf16.mxu0 0
    %1842 = vmatpush1.bf16.msra.mxu0 0
    %1843 = vmatprep.subr.bf16.mxu0 0
    %1844 = vmatpush1.bf16.msra.mxu0 0
    %1845 = vmatprep.subr.bf16.mxu0 0
    %1846 = vmatpush1.bf16.msra.mxu0 0
    %1847 = vmatprep.subr.bf16.mxu0 0
    %1848 = vmatpush1.bf16.msra.mxu0 0
    %1849 = vmatprep.subr.bf16.mxu0 0
    %1850 = vmatpush1.bf16.msra.mxu0 0
    %1851 = vmatprep.mubr.bf16.mxu0 0
    %1852 = vmatmul.mubr.bf16.gmra.mrb[0].mxu0 %v1814
    %v1853 = vpop.f32.mrb[0].mxu0
    %v1854 = vadd.f32 0.0, %v1853
    %v1855 = vpop.f32.mrb[0].mxu0
    %v1856 = vadd.f32 0.0, %v1855
    %v1857 = vpop.f32.mrb[0].mxu0
    %v1858 = vadd.f32 0.0, %v1857
    %v1859 = vpop.f32.mrb[0].mxu0
    %v1860 = vadd.f32 0.0, %v1859
    %1861 = vmatprep.mubr.bf16.mxu0 0
    %1862 = vmatmul.mubr.bf16.gmra.mrb[0].mxu0 %v1817
    %v1863 = vpop.f32.mrb[0].mxu0
    %v1864 = vadd.f32 0.0, %v1863
    %v1865 = vpop.f32.mrb[0].mxu0
    %v1866 = vadd.f32 0.0, %v1865
    %v1867 = vpop.f32.mrb[0].mxu0
    %v1868 = vadd.f32 0.0, %v1867
    %v1869 = vpop.f32.mrb[0].mxu0
    %v1870 = vadd.f32 0.0, %v1869
    %1871 = vdwg.mxu0
    %v1872 = vpack.c.bf16 %v1858, %v1854
    %v1873 = vpack.c.bf16 %v1860, %v1856
    %v1874 = vpack.c.bf16 %v1868, %v1864
    %v1875 = vpack.c.bf16 %v1870, %v1866
    %s1876 = scalar_lea.vmem %s8, 256
    %v1877 = vld [vmem:[%s1876] sm:$0xff]
    %v1878 = vld [vmem:[%s1876 + $0x8] sm:$0xff]
    %v1879 = vld [vmem:[%s1876 + $0x10] sm:$0xff]
    %v1880 = vld [vmem:[%s1876 + $0x18] sm:$0xff]
    %v1881 = vld [vmem:[%s1876 + $0x20] sm:$0xff]
    %v1882 = vld [vmem:[%s1876 + $0x28] sm:$0xff]
    %v1883 = vld [vmem:[%s1876 + $0x30] sm:$0xff]
    %v1884 = vld [vmem:[%s1876 + $0x38] sm:$0xff]
    %v1885 = vld [vmem:[%s1876 + $0x40] sm:$0xff]
    %v1886 = vld [vmem:[%s1876 + $0x48] sm:$0xff]
    %v1887 = vld [vmem:[%s1876 + $0x50] sm:$0xff]
    %v1888 = vld [vmem:[%s1876 + $0x58] sm:$0xff]
    %v1889 = vld [vmem:[%s1876 + $0x60] sm:$0xff]
    %v1890 = vld [vmem:[%s1876 + $0x68] sm:$0xff]
    %v1891 = vld [vmem:[%s1876 + $0x70] sm:$0xff]
    %v1892 = vld [vmem:[%s1876 + $0x78] sm:$0xff]
    %v1893 = vld [vmem:[%s1876 + $0x80] sm:$0xff]
    %v1894 = vld [vmem:[%s1876 + $0x88] sm:$0xff]
    %v1895 = vld [vmem:[%s1876 + $0x90] sm:$0xff]
    %v1896 = vld [vmem:[%s1876 + $0x98] sm:$0xff]
    %v1897 = vld [vmem:[%s1876 + $0xa0] sm:$0xff]
    %v1898 = vld [vmem:[%s1876 + $0xa8] sm:$0xff]
    %v1899 = vld [vmem:[%s1876 + $0xb0] sm:$0xff]
    %v1900 = vld [vmem:[%s1876 + $0xb8] sm:$0xff]
    %v1901 = vld [vmem:[%s1876 + $0xc0] sm:$0xff]
    %v1902 = vld [vmem:[%s1876 + $0xc8] sm:$0xff]
    %v1903 = vld [vmem:[%s1876 + $0xd0] sm:$0xff]
    %v1904 = vld [vmem:[%s1876 + $0xd8] sm:$0xff]
    %v1905 = vld [vmem:[%s1876 + $0xe0] sm:$0xff]
    %v1906 = vld [vmem:[%s1876 + $0xe8] sm:$0xff]
    %v1907 = vld [vmem:[%s1876 + $0xf0] sm:$0xff]
    %v1908 = vld [vmem:[%s1876 + $0xf8] sm:$0xff]
    %v1941 = vunpack.c.l.b16 %v1877
    %v1942 = vunpack.c.h.b16 %v1877
    %v1943 = vunpack.c.l.b16 %v1878
    %v1944 = vunpack.c.h.b16 %v1878
    %v1945 = vunpack.c.l.b16 %v1879
    %v1946 = vunpack.c.h.b16 %v1879
    %v1947 = vunpack.c.l.b16 %v1880
    %v1948 = vunpack.c.h.b16 %v1880
    %v1949 = vunpack.c.l.b16 %v1881
    %v1950 = vunpack.c.h.b16 %v1881
    %v1951 = vunpack.c.l.b16 %v1882
    %v1952 = vunpack.c.h.b16 %v1882
    %v1953 = vunpack.c.l.b16 %v1883
    %v1954 = vunpack.c.h.b16 %v1883
    %v1955 = vunpack.c.l.b16 %v1884
    %v1956 = vunpack.c.h.b16 %v1884
    %v1957 = vunpack.c.l.b16 %v1885
    %v1958 = vunpack.c.h.b16 %v1885
    %v1959 = vunpack.c.l.b16 %v1886
    %v1960 = vunpack.c.h.b16 %v1886
    %v1961 = vunpack.c.l.b16 %v1887
    %v1962 = vunpack.c.h.b16 %v1887
    %v1963 = vunpack.c.l.b16 %v1888
    %v1964 = vunpack.c.h.b16 %v1888
    %v1965 = vunpack.c.l.b16 %v1889
    %v1966 = vunpack.c.h.b16 %v1889
    %v1967 = vunpack.c.l.b16 %v1890
    %v1968 = vunpack.c.h.b16 %v1890
    %v1969 = vunpack.c.l.b16 %v1891
    %v1970 = vunpack.c.h.b16 %v1891
    %v1971 = vunpack.c.l.b16 %v1892
    %v1972 = vunpack.c.h.b16 %v1892
    %v1973 = vunpack.c.l.b16 %v1893
    %v1974 = vunpack.c.h.b16 %v1893
    %v1975 = vunpack.c.l.b16 %v1894
    %v1976 = vunpack.c.h.b16 %v1894
    %v1977 = vunpack.c.l.b16 %v1895
    %v1978 = vunpack.c.h.b16 %v1895
    %v1979 = vunpack.c.l.b16 %v1896
    %v1980 = vunpack.c.h.b16 %v1896
    %v1981 = vunpack.c.l.b16 %v1897
    %v1982 = vunpack.c.h.b16 %v1897
    %v1983 = vunpack.c.l.b16 %v1898
    %v1984 = vunpack.c.h.b16 %v1898
    %v1985 = vunpack.c.l.b16 %v1899
    %v1986 = vunpack.c.h.b16 %v1899
    %v1987 = vunpack.c.l.b16 %v1900
    %v1988 = vunpack.c.h.b16 %v1900
    %v1989 = vunpack.c.l.b16 %v1901
    %v1990 = vunpack.c.h.b16 %v1901
    %v1991 = vunpack.c.l.b16 %v1902
    %v1992 = vunpack.c.h.b16 %v1902
    %v1993 = vunpack.c.l.b16 %v1903
    %v1994 = vunpack.c.h.b16 %v1903
    %v1995 = vunpack.c.l.b16 %v1904
    %v1996 = vunpack.c.h.b16 %v1904
    %v1997 = vunpack.c.l.b16 %v1905
    %v1998 = vunpack.c.h.b16 %v1905
    %v1999 = vunpack.c.l.b16 %v1906
    %v2000 = vunpack.c.h.b16 %v1906
    %v2001 = vunpack.c.l.b16 %v1907
    %v2002 = vunpack.c.h.b16 %v1907
    %v2003 = vunpack.c.l.b16 %v1908
    %v2004 = vunpack.c.h.b16 %v1908
    %v2005 = vpack.c.b16 %v1943, %v1941
    %v2006 = vpack.c.b16 %v1944, %v1942
    %v2007 = vpack.c.b16 %v1947, %v1945
    %v2008 = vpack.c.b16 %v1948, %v1946
    %v2009 = vpack.c.b16 %v1951, %v1949
    %v2010 = vpack.c.b16 %v1952, %v1950
    %v2011 = vpack.c.b16 %v1955, %v1953
    %v2012 = vpack.c.b16 %v1956, %v1954
    %v2013 = vpack.c.b16 %v1959, %v1957
    %v2014 = vpack.c.b16 %v1960, %v1958
    %v2015 = vpack.c.b16 %v1963, %v1961
    %v2016 = vpack.c.b16 %v1964, %v1962
    %v2017 = vpack.c.b16 %v1967, %v1965
    %v2018 = vpack.c.b16 %v1968, %v1966
    %v2019 = vpack.c.b16 %v1971, %v1969
    %v2020 = vpack.c.b16 %v1972, %v1970
    %v2021 = vpack.c.b16 %v1975, %v1973
    %v2022 = vpack.c.b16 %v1976, %v1974
    %v2023 = vpack.c.b16 %v1979, %v1977
    %v2024 = vpack.c.b16 %v1980, %v1978
    %v2025 = vpack.c.b16 %v1983, %v1981
    %v2026 = vpack.c.b16 %v1984, %v1982
    %v2027 = vpack.c.b16 %v1987, %v1985
    %v2028 = vpack.c.b16 %v1988, %v1986
    %v2029 = vpack.c.b16 %v1991, %v1989
    %v2030 = vpack.c.b16 %v1992, %v1990
    %v2031 = vpack.c.b16 %v1995, %v1993
    %v2032 = vpack.c.b16 %v1996, %v1994
    %v2033 = vpack.c.b16 %v1999, %v1997
    %v2034 = vpack.c.b16 %v2000, %v1998
    %v2035 = vpack.c.b16 %v2003, %v2001
    %v2036 = vpack.c.b16 %v2004, %v2002
    %2069 = vmatprep.subr.bf16.mxu0 %v2006
    %2070 = vmatpush1.bf16.msra.mxu0 %v2005
    %2071 = vmatprep.subr.bf16.mxu0 %v2008
    %2072 = vmatpush1.bf16.msra.mxu0 %v2007
    %2073 = vmatprep.subr.bf16.mxu0 %v2010
    %2074 = vmatpush1.bf16.msra.mxu0 %v2009
    %2075 = vmatprep.subr.bf16.mxu0 %v2012
    %2076 = vmatpush1.bf16.msra.mxu0 %v2011
    %2077 = vmatprep.subr.bf16.mxu0 %v2014
    %2078 = vmatpush1.bf16.msra.mxu0 %v2013
    %2079 = vmatprep.subr.bf16.mxu0 %v2016
    %2080 = vmatpush1.bf16.msra.mxu0 %v2015
    %2081 = vmatprep.subr.bf16.mxu0 %v2018
    %2082 = vmatpush1.bf16.msra.mxu0 %v2017
    %2083 = vmatprep.subr.bf16.mxu0 %v2020
    %2084 = vmatpush1.bf16.msra.mxu0 %v2019
    %2085 = vmatprep.subr.bf16.mxu0 %v2022
    %2086 = vmatpush1.bf16.msra.mxu0 %v2021
    %2087 = vmatprep.subr.bf16.mxu0 %v2024
    %2088 = vmatpush1.bf16.msra.mxu0 %v2023
    %2089 = vmatprep.subr.bf16.mxu0 %v2026
    %2090 = vmatpush1.bf16.msra.mxu0 %v2025
    %2091 = vmatprep.subr.bf16.mxu0 %v2028
    %2092 = vmatpush1.bf16.msra.mxu0 %v2027
    %2093 = vmatprep.subr.bf16.mxu0 %v2030
    %2094 = vmatpush1.bf16.msra.mxu0 %v2029
    %2095 = vmatprep.subr.bf16.mxu0 %v2032
    %2096 = vmatpush1.bf16.msra.mxu0 %v2031
    %2097 = vmatprep.subr.bf16.mxu0 %v2034
    %2098 = vmatpush1.bf16.msra.mxu0 %v2033
    %2099 = vmatprep.subr.bf16.mxu0 %v2036
    %2100 = vmatpush1.bf16.msra.mxu0 %v2035
    %2101 = vmatprep.mubr.bf16.mxu0 %v1873
    %2102 = vmatmul.mubr.bf16.gmra.mrb[0].mxu0 %v1872
    %v2103 = vpop.f32.mrb[0].mxu0
    %v2104 = vadd.f32 0.0, %v2103
    %v2105 = vpop.f32.mrb[0].mxu0
    %v2106 = vadd.f32 0.0, %v2105
    %v2107 = vpop.f32.mrb[0].mxu0
    %v2108 = vadd.f32 0.0, %v2107
    %v2109 = vpop.f32.mrb[0].mxu0
    %v2110 = vadd.f32 0.0, %v2109
    %2111 = vmatprep.mubr.bf16.mxu0 %v1875
    %2112 = vmatmul.mubr.bf16.gmra.mrb[0].mxu0 %v1874
    %v2113 = vpop.f32.mrb[0].mxu0
    %v2114 = vadd.f32 0.0, %v2113
    %v2115 = vpop.f32.mrb[0].mxu0
    %v2116 = vadd.f32 0.0, %v2115
    %v2117 = vpop.f32.mrb[0].mxu0
    %v2118 = vadd.f32 0.0, %v2117
    %v2119 = vpop.f32.mrb[0].mxu0
    %v2120 = vadd.f32 0.0, %v2119
    %2121 = vdwg.mxu0
    %v2154 = vunpack.c.l.b16 %v1734
    %v2155 = vunpack.c.h.b16 %v1734
    %v2156 = vunpack.c.l.b16 %v1735
    %v2157 = vunpack.c.h.b16 %v1735
    %v2158 = vunpack.c.l.b16 %v1736
    %v2159 = vunpack.c.h.b16 %v1736
    %v2160 = vunpack.c.l.b16 %v1737
    %v2161 = vunpack.c.h.b16 %v1737
    %v2162 = vunpack.c.l.b16 %v1738
    %v2163 = vunpack.c.h.b16 %v1738
    %v2164 = vunpack.c.l.b16 %v1739
    %v2165 = vunpack.c.h.b16 %v1739
    %v2166 = vunpack.c.l.b16 %v1740
    %v2167 = vunpack.c.h.b16 %v1740
    %v2168 = vunpack.c.l.b16 %v1741
    %v2169 = vunpack.c.h.b16 %v1741
    %v2170 = vunpack.c.l.b16 %v1742
    %v2171 = vunpack.c.h.b16 %v1742
    %v2172 = vunpack.c.l.b16 %v1743
    %v2173 = vunpack.c.h.b16 %v1743
    %v2174 = vunpack.c.l.b16 %v1744
    %v2175 = vunpack.c.h.b16 %v1744
    %v2176 = vunpack.c.l.b16 %v1745
    %v2177 = vunpack.c.h.b16 %v1745
    %v2178 = vunpack.c.l.b16 %v1746
    %v2179 = vunpack.c.h.b16 %v1746
    %v2180 = vunpack.c.l.b16 %v1747
    %v2181 = vunpack.c.h.b16 %v1747
    %v2182 = vunpack.c.l.b16 %v1748
    %v2183 = vunpack.c.h.b16 %v1748
    %v2184 = vunpack.c.l.b16 %v1749
    %v2185 = vunpack.c.h.b16 %v1749
    %v2186 = vunpack.c.l.b16 %v1750
    %v2187 = vunpack.c.h.b16 %v1750
    %v2188 = vunpack.c.l.b16 %v1751
    %v2189 = vunpack.c.h.b16 %v1751
    %v2190 = vunpack.c.l.b16 %v1752
    %v2191 = vunpack.c.h.b16 %v1752
    %v2192 = vunpack.c.l.b16 %v1753
    %v2193 = vunpack.c.h.b16 %v1753
    %v2194 = vunpack.c.l.b16 %v1754
    %v2195 = vunpack.c.h.b16 %v1754
    %v2196 = vunpack.c.l.b16 %v1755
    %v2197 = vunpack.c.h.b16 %v1755
    %v2198 = vunpack.c.l.b16 %v1756
    %v2199 = vunpack.c.h.b16 %v1756
    %v2200 = vunpack.c.l.b16 %v1757
    %v2201 = vunpack.c.h.b16 %v1757
    %v2202 = vunpack.c.l.b16 %v1758
    %v2203 = vunpack.c.h.b16 %v1758
    %v2204 = vunpack.c.l.b16 %v1759
    %v2205 = vunpack.c.h.b16 %v1759
    %v2206 = vunpack.c.l.b16 %v1760
    %v2207 = vunpack.c.h.b16 %v1760
    %v2208 = vunpack.c.l.b16 %v1761
    %v2209 = vunpack.c.h.b16 %v1761
    %v2210 = vunpack.c.l.b16 %v1762
    %v2211 = vunpack.c.h.b16 %v1762
    %v2212 = vunpack.c.l.b16 %v1763
    %v2213 = vunpack.c.h.b16 %v1763
    %v2214 = vunpack.c.l.b16 %v1764
    %v2215 = vunpack.c.h.b16 %v1764
    %v2216 = vunpack.c.l.b16 %v1765
    %v2217 = vunpack.c.h.b16 %v1765
    %v2218 = vpack.c.b16 %v2156, %v2154
    %v2219 = vpack.c.b16 %v2157, %v2155
    %v2220 = vpack.c.b16 %v2160, %v2158
    %v2221 = vpack.c.b16 %v2161, %v2159
    %v2222 = vpack.c.b16 %v2164, %v2162
    %v2223 = vpack.c.b16 %v2165, %v2163
    %v2224 = vpack.c.b16 %v2168, %v2166
    %v2225 = vpack.c.b16 %v2169, %v2167
    %v2226 = vpack.c.b16 %v2172, %v2170
    %v2227 = vpack.c.b16 %v2173, %v2171
    %v2228 = vpack.c.b16 %v2176, %v2174
    %v2229 = vpack.c.b16 %v2177, %v2175
    %v2230 = vpack.c.b16 %v2180, %v2178
    %v2231 = vpack.c.b16 %v2181, %v2179
    %v2232 = vpack.c.b16 %v2184, %v2182
    %v2233 = vpack.c.b16 %v2185, %v2183
    %v2234 = vpack.c.b16 %v2188, %v2186
    %v2235 = vpack.c.b16 %v2189, %v2187
    %v2236 = vpack.c.b16 %v2192, %v2190
    %v2237 = vpack.c.b16 %v2193, %v2191
    %v2238 = vpack.c.b16 %v2196, %v2194
    %v2239 = vpack.c.b16 %v2197, %v2195
    %v2240 = vpack.c.b16 %v2200, %v2198
    %v2241 = vpack.c.b16 %v2201, %v2199
    %v2242 = vpack.c.b16 %v2204, %v2202
    %v2243 = vpack.c.b16 %v2205, %v2203
    %v2244 = vpack.c.b16 %v2208, %v2206
    %v2245 = vpack.c.b16 %v2209, %v2207
    %v2246 = vpack.c.b16 %v2212, %v2210
    %v2247 = vpack.c.b16 %v2213, %v2211
    %v2248 = vpack.c.b16 %v2216, %v2214
    %v2249 = vpack.c.b16 %v2217, %v2215
    %2282 = vmatprep.subr.bf16.mxu0 %v2219
    %2283 = vmatpush1.bf16.msra.mxu0 %v2218
    %2284 = vmatprep.subr.bf16.mxu0 %v2221
    %2285 = vmatpush1.bf16.msra.mxu0 %v2220
    %2286 = vmatprep.subr.bf16.mxu0 %v2223
    %2287 = vmatpush1.bf16.msra.mxu0 %v2222
    %2288 = vmatprep.subr.bf16.mxu0 %v2225
    %2289 = vmatpush1.bf16.msra.mxu0 %v2224
    %2290 = vmatprep.subr.bf16.mxu0 %v2227
    %2291 = vmatpush1.bf16.msra.mxu0 %v2226
    %2292 = vmatprep.subr.bf16.mxu0 %v2229
    %2293 = vmatpush1.bf16.msra.mxu0 %v2228
    %2294 = vmatprep.subr.bf16.mxu0 %v2231
    %2295 = vmatpush1.bf16.msra.mxu0 %v2230
    %2296 = vmatprep.subr.bf16.mxu0 %v2233
    %2297 = vmatpush1.bf16.msra.mxu0 %v2232
    %2298 = vmatprep.subr.bf16.mxu0 %v2235
    %2299 = vmatpush1.bf16.msra.mxu0 %v2234
    %2300 = vmatprep.subr.bf16.mxu0 %v2237
    %2301 = vmatpush1.bf16.msra.mxu0 %v2236
    %2302 = vmatprep.subr.bf16.mxu0 %v2239
    %2303 = vmatpush1.bf16.msra.mxu0 %v2238
    %2304 = vmatprep.subr.bf16.mxu0 %v2241
    %2305 = vmatpush1.bf16.msra.mxu0 %v2240
    %2306 = vmatprep.subr.bf16.mxu0 %v2243
    %2307 = vmatpush1.bf16.msra.mxu0 %v2242
    %2308 = vmatprep.subr.bf16.mxu0 %v2245
    %2309 = vmatpush1.bf16.msra.mxu0 %v2244
    %2310 = vmatprep.subr.bf16.mxu0 %v2247
    %2311 = vmatpush1.bf16.msra.mxu0 %v2246
    %2312 = vmatprep.subr.bf16.mxu0 %v2249
    %2313 = vmatpush1.bf16.msra.mxu0 %v2248
    %2314 = vmatprep.mubr.bf16.mxu0 %v1731
    %2315 = vmatmul.mubr.bf16.gmra.mrb[0].mxu0 %v1730
    %v2316 = vpop.f32.mrb[0].mxu0
    %v2317 = vadd.f32 %v2104, %v2316
    %v2318 = vpop.f32.mrb[0].mxu0
    %v2319 = vadd.f32 %v2106, %v2318
    %v2320 = vpop.f32.mrb[0].mxu0
    %v2321 = vadd.f32 %v2108, %v2320
    %v2322 = vpop.f32.mrb[0].mxu0
    %v2323 = vadd.f32 %v2110, %v2322
    %2324 = vmatprep.mubr.bf16.mxu0 %v1733
    %2325 = vmatmul.mubr.bf16.gmra.mrb[0].mxu0 %v1732
    %v2326 = vpop.f32.mrb[0].mxu0
    %v2327 = vadd.f32 %v2114, %v2326
    %v2328 = vpop.f32.mrb[0].mxu0
    %v2329 = vadd.f32 %v2116, %v2328
    %v2330 = vpop.f32.mrb[0].mxu0
    %v2331 = vadd.f32 %v2118, %v2330
    %v2332 = vpop.f32.mrb[0].mxu0
    %v2333 = vadd.f32 %v2120, %v2332
    %2334 = vdwg.mxu0
    %s2335 = scalar_lea.vmem %s10, 256
    %v2336 = vld [vmem:[%s2335] sm:$0xff]
    %v2337 = vld [vmem:[%s2335 + $0x8] sm:$0xff]
    %v2338 = vld [vmem:[%s2335 + $0x10] sm:$0xff]
    %v2339 = vld [vmem:[%s2335 + $0x18] sm:$0xff]
    %v2340 = vld [vmem:[%s2335 + $0x20] sm:$0xff]
    %v2341 = vld [vmem:[%s2335 + $0x28] sm:$0xff]
    %v2342 = vld [vmem:[%s2335 + $0x30] sm:$0xff]
    %v2343 = vld [vmem:[%s2335 + $0x38] sm:$0xff]
    %v2344 = vld [vmem:[%s2335 + $0x40] sm:$0xff]
    %v2345 = vld [vmem:[%s2335 + $0x48] sm:$0xff]
    %v2346 = vld [vmem:[%s2335 + $0x50] sm:$0xff]
    %v2347 = vld [vmem:[%s2335 + $0x58] sm:$0xff]
    %v2348 = vld [vmem:[%s2335 + $0x60] sm:$0xff]
    %v2349 = vld [vmem:[%s2335 + $0x68] sm:$0xff]
    %v2350 = vld [vmem:[%s2335 + $0x70] sm:$0xff]
    %v2351 = vld [vmem:[%s2335 + $0x78] sm:$0xff]
    %v2352 = vld [vmem:[%s2335 + $0x80] sm:$0xff]
    %v2353 = vld [vmem:[%s2335 + $0x88] sm:$0xff]
    %v2354 = vld [vmem:[%s2335 + $0x90] sm:$0xff]
    %v2355 = vld [vmem:[%s2335 + $0x98] sm:$0xff]
    %v2356 = vld [vmem:[%s2335 + $0xa0] sm:$0xff]
    %v2357 = vld [vmem:[%s2335 + $0xa8] sm:$0xff]
    %v2358 = vld [vmem:[%s2335 + $0xb0] sm:$0xff]
    %v2359 = vld [vmem:[%s2335 + $0xb8] sm:$0xff]
    %v2360 = vld [vmem:[%s2335 + $0xc0] sm:$0xff]
    %v2361 = vld [vmem:[%s2335 + $0xc8] sm:$0xff]
    %v2362 = vld [vmem:[%s2335 + $0xd0] sm:$0xff]
    %v2363 = vld [vmem:[%s2335 + $0xd8] sm:$0xff]
    %v2364 = vld [vmem:[%s2335 + $0xe0] sm:$0xff]
    %v2365 = vld [vmem:[%s2335 + $0xe8] sm:$0xff]
    %v2366 = vld [vmem:[%s2335 + $0xf0] sm:$0xff]
    %v2367 = vld [vmem:[%s2335 + $0xf8] sm:$0xff]
    %v2400 = vunpack.c.l.b16 %v2336
    %v2401 = vunpack.c.h.b16 %v2336
    %v2402 = vunpack.c.l.b16 %v2337
    %v2403 = vunpack.c.h.b16 %v2337
    %v2404 = vunpack.c.l.b16 %v2338
    %v2405 = vunpack.c.h.b16 %v2338
    %v2406 = vunpack.c.l.b16 %v2339
    %v2407 = vunpack.c.h.b16 %v2339
    %v2408 = vunpack.c.l.b16 %v2340
    %v2409 = vunpack.c.h.b16 %v2340
    %v2410 = vunpack.c.l.b16 %v2341
    %v2411 = vunpack.c.h.b16 %v2341
    %v2412 = vunpack.c.l.b16 %v2342
    %v2413 = vunpack.c.h.b16 %v2342
    %v2414 = vunpack.c.l.b16 %v2343
    %v2415 = vunpack.c.h.b16 %v2343
    %v2416 = vunpack.c.l.b16 %v2344
    %v2417 = vunpack.c.h.b16 %v2344
    %v2418 = vunpack.c.l.b16 %v2345
    %v2419 = vunpack.c.h.b16 %v2345
    %v2420 = vunpack.c.l.b16 %v2346
    %v2421 = vunpack.c.h.b16 %v2346
    %v2422 = vunpack.c.l.b16 %v2347
    %v2423 = vunpack.c.h.b16 %v2347
    %v2424 = vunpack.c.l.b16 %v2348
    %v2425 = vunpack.c.h.b16 %v2348
    %v2426 = vunpack.c.l.b16 %v2349
    %v2427 = vunpack.c.h.b16 %v2349
    %v2428 = vunpack.c.l.b16 %v2350
    %v2429 = vunpack.c.h.b16 %v2350
    %v2430 = vunpack.c.l.b16 %v2351
    %v2431 = vunpack.c.h.b16 %v2351
    %v2432 = vunpack.c.l.b16 %v2352
    %v2433 = vunpack.c.h.b16 %v2352
    %v2434 = vunpack.c.l.b16 %v2353
    %v2435 = vunpack.c.h.b16 %v2353
    %v2436 = vunpack.c.l.b16 %v2354
    %v2437 = vunpack.c.h.b16 %v2354
    %v2438 = vunpack.c.l.b16 %v2355
    %v2439 = vunpack.c.h.b16 %v2355
    %v2440 = vunpack.c.l.b16 %v2356
    %v2441 = vunpack.c.h.b16 %v2356
    %v2442 = vunpack.c.l.b16 %v2357
    %v2443 = vunpack.c.h.b16 %v2357
    %v2444 = vunpack.c.l.b16 %v2358
    %v2445 = vunpack.c.h.b16 %v2358
    %v2446 = vunpack.c.l.b16 %v2359
    %v2447 = vunpack.c.h.b16 %v2359
    %v2448 = vunpack.c.l.b16 %v2360
    %v2449 = vunpack.c.h.b16 %v2360
    %v2450 = vunpack.c.l.b16 %v2361
    %v2451 = vunpack.c.h.b16 %v2361
    %v2452 = vunpack.c.l.b16 %v2362
    %v2453 = vunpack.c.h.b16 %v2362
    %v2454 = vunpack.c.l.b16 %v2363
    %v2455 = vunpack.c.h.b16 %v2363
    %v2456 = vunpack.c.l.b16 %v2364
    %v2457 = vunpack.c.h.b16 %v2364
    %v2458 = vunpack.c.l.b16 %v2365
    %v2459 = vunpack.c.h.b16 %v2365
    %v2460 = vunpack.c.l.b16 %v2366
    %v2461 = vunpack.c.h.b16 %v2366
    %v2462 = vunpack.c.l.b16 %v2367
    %v2463 = vunpack.c.h.b16 %v2367
    %v2464 = vpack.c.b16 %v2402, %v2400
    %v2465 = vpack.c.b16 %v2403, %v2401
    %v2466 = vpack.c.b16 %v2406, %v2404
    %v2467 = vpack.c.b16 %v2407, %v2405
    %v2468 = vpack.c.b16 %v2410, %v2408
    %v2469 = vpack.c.b16 %v2411, %v2409
    %v2470 = vpack.c.b16 %v2414, %v2412
    %v2471 = vpack.c.b16 %v2415, %v2413
    %v2472 = vpack.c.b16 %v2418, %v2416
    %v2473 = vpack.c.b16 %v2419, %v2417
    %v2474 = vpack.c.b16 %v2422, %v2420
    %v2475 = vpack.c.b16 %v2423, %v2421
    %v2476 = vpack.c.b16 %v2426, %v2424
    %v2477 = vpack.c.b16 %v2427, %v2425
    %v2478 = vpack.c.b16 %v2430, %v2428
    %v2479 = vpack.c.b16 %v2431, %v2429
    %v2480 = vpack.c.b16 %v2434, %v2432
    %v2481 = vpack.c.b16 %v2435, %v2433
    %v2482 = vpack.c.b16 %v2438, %v2436
    %v2483 = vpack.c.b16 %v2439, %v2437
    %v2484 = vpack.c.b16 %v2442, %v2440
    %v2485 = vpack.c.b16 %v2443, %v2441
    %v2486 = vpack.c.b16 %v2446, %v2444
    %v2487 = vpack.c.b16 %v2447, %v2445
    %v2488 = vpack.c.b16 %v2450, %v2448
    %v2489 = vpack.c.b16 %v2451, %v2449
    %v2490 = vpack.c.b16 %v2454, %v2452
    %v2491 = vpack.c.b16 %v2455, %v2453
    %v2492 = vpack.c.b16 %v2458, %v2456
    %v2493 = vpack.c.b16 %v2459, %v2457
    %v2494 = vpack.c.b16 %v2462, %v2460
    %v2495 = vpack.c.b16 %v2463, %v2461
    %2528 = vmatprep.subr.bf16.mxu0 %v2465
    %2529 = vmatpush1.bf16.msra.mxu0 %v2464
    %2530 = vmatprep.subr.bf16.mxu0 %v2467
    %2531 = vmatpush1.bf16.msra.mxu0 %v2466
    %2532 = vmatprep.subr.bf16.mxu0 %v2469
    %2533 = vmatpush1.bf16.msra.mxu0 %v2468
    %2534 = vmatprep.subr.bf16.mxu0 %v2471
    %2535 = vmatpush1.bf16.msra.mxu0 %v2470
    %2536 = vmatprep.subr.bf16.mxu0 %v2473
    %2537 = vmatpush1.bf16.msra.mxu0 %v2472
    %2538 = vmatprep.subr.bf16.mxu0 %v2475
    %2539 = vmatpush1.bf16.msra.mxu0 %v2474
    %2540 = vmatprep.subr.bf16.mxu0 %v2477
    %2541 = vmatpush1.bf16.msra.mxu0 %v2476
    %2542 = vmatprep.subr.bf16.mxu0 %v2479
    %2543 = vmatpush1.bf16.msra.mxu0 %v2478
    %2544 = vmatprep.subr.bf16.mxu0 %v2481
    %2545 = vmatpush1.bf16.msra.mxu0 %v2480
    %2546 = vmatprep.subr.bf16.mxu0 %v2483
    %2547 = vmatpush1.bf16.msra.mxu0 %v2482
    %2548 = vmatprep.subr.bf16.mxu0 %v2485
    %2549 = vmatpush1.bf16.msra.mxu0 %v2484
    %2550 = vmatprep.subr.bf16.mxu0 %v2487
    %2551 = vmatpush1.bf16.msra.mxu0 %v2486
    %2552 = vmatprep.subr.bf16.mxu0 %v2489
    %2553 = vmatpush1.bf16.msra.mxu0 %v2488
    %2554 = vmatprep.subr.bf16.mxu0 %v2491
    %2555 = vmatpush1.bf16.msra.mxu0 %v2490
    %2556 = vmatprep.subr.bf16.mxu0 %v2493
    %2557 = vmatpush1.bf16.msra.mxu0 %v2492
    %2558 = vmatprep.subr.bf16.mxu0 %v2495
    %2559 = vmatpush1.bf16.msra.mxu0 %v2494
    %2560 = vmatprep.mubr.bf16.mxu0 %v1873
    %2561 = vmatmul.mubr.bf16.gmra.mrb[0].mxu0 %v1872
    %v2562 = vpop.f32.mrb[0].mxu0
    %v2563 = vadd.f32 0.0, %v2562
    %v2564 = vpop.f32.mrb[0].mxu0
    %v2565 = vadd.f32 0.0, %v2564
    %v2566 = vpop.f32.mrb[0].mxu0
    %v2567 = vadd.f32 0.0, %v2566
    %v2568 = vpop.f32.mrb[0].mxu0
    %v2569 = vadd.f32 0.0, %v2568
    %2570 = vmatprep.mubr.bf16.mxu0 %v1875
    %2571 = vmatmul.mubr.bf16.gmra.mrb[0].mxu0 %v1874
    %v2572 = vpop.f32.mrb[0].mxu0
    %v2573 = vadd.f32 0.0, %v2572
    %v2574 = vpop.f32.mrb[0].mxu0
    %v2575 = vadd.f32 0.0, %v2574
    %v2576 = vpop.f32.mrb[0].mxu0
    %v2577 = vadd.f32 0.0, %v2576
    %v2578 = vpop.f32.mrb[0].mxu0
    %v2579 = vadd.f32 0.0, %v2578
    %2580 = vdwg.mxu0
    %v2613 = vunpack.c.l.b16 %v1766
    %v2614 = vunpack.c.h.b16 %v1766
    %v2615 = vunpack.c.l.b16 %v1767
    %v2616 = vunpack.c.h.b16 %v1767
    %v2617 = vunpack.c.l.b16 %v1768
    %v2618 = vunpack.c.h.b16 %v1768
    %v2619 = vunpack.c.l.b16 %v1769
    %v2620 = vunpack.c.h.b16 %v1769
    %v2621 = vunpack.c.l.b16 %v1770
    %v2622 = vunpack.c.h.b16 %v1770
    %v2623 = vunpack.c.l.b16 %v1771
    %v2624 = vunpack.c.h.b16 %v1771
    %v2625 = vunpack.c.l.b16 %v1772
    %v2626 = vunpack.c.h.b16 %v1772
    %v2627 = vunpack.c.l.b16 %v1773
    %v2628 = vunpack.c.h.b16 %v1773
    %v2629 = vunpack.c.l.b16 %v1774
    %v2630 = vunpack.c.h.b16 %v1774
    %v2631 = vunpack.c.l.b16 %v1775
    %v2632 = vunpack.c.h.b16 %v1775
    %v2633 = vunpack.c.l.b16 %v1776
    %v2634 = vunpack.c.h.b16 %v1776
    %v2635 = vunpack.c.l.b16 %v1777
    %v2636 = vunpack.c.h.b16 %v1777
    %v2637 = vunpack.c.l.b16 %v1778
    %v2638 = vunpack.c.h.b16 %v1778
    %v2639 = vunpack.c.l.b16 %v1779
    %v2640 = vunpack.c.h.b16 %v1779
    %v2641 = vunpack.c.l.b16 %v1780
    %v2642 = vunpack.c.h.b16 %v1780
    %v2643 = vunpack.c.l.b16 %v1781
    %v2644 = vunpack.c.h.b16 %v1781
    %v2645 = vunpack.c.l.b16 %v1782
    %v2646 = vunpack.c.h.b16 %v1782
    %v2647 = vunpack.c.l.b16 %v1783
    %v2648 = vunpack.c.h.b16 %v1783
    %v2649 = vunpack.c.l.b16 %v1784
    %v2650 = vunpack.c.h.b16 %v1784
    %v2651 = vunpack.c.l.b16 %v1785
    %v2652 = vunpack.c.h.b16 %v1785
    %v2653 = vunpack.c.l.b16 %v1786
    %v2654 = vunpack.c.h.b16 %v1786
    %v2655 = vunpack.c.l.b16 %v1787
    %v2656 = vunpack.c.h.b16 %v1787
    %v2657 = vunpack.c.l.b16 %v1788
    %v2658 = vunpack.c.h.b16 %v1788
    %v2659 = vunpack.c.l.b16 %v1789
    %v2660 = vunpack.c.h.b16 %v1789
    %v2661 = vunpack.c.l.b16 %v1790
    %v2662 = vunpack.c.h.b16 %v1790
    %v2663 = vunpack.c.l.b16 %v1791
    %v2664 = vunpack.c.h.b16 %v1791
    %v2665 = vunpack.c.l.b16 %v1792
    %v2666 = vunpack.c.h.b16 %v1792
    %v2667 = vunpack.c.l.b16 %v1793
    %v2668 = vunpack.c.h.b16 %v1793
    %v2669 = vunpack.c.l.b16 %v1794
    %v2670 = vunpack.c.h.b16 %v1794
    %v2671 = vunpack.c.l.b16 %v1795
    %v2672 = vunpack.c.h.b16 %v1795
    %v2673 = vunpack.c.l.b16 %v1796
    %v2674 = vunpack.c.h.b16 %v1796
    %v2675 = vunpack.c.l.b16 %v1797
    %v2676 = vunpack.c.h.b16 %v1797
    %v2677 = vpack.c.b16 %v2615, %v2613
    %v2678 = vpack.c.b16 %v2616, %v2614
    %v2679 = vpack.c.b16 %v2619, %v2617
    %v2680 = vpack.c.b16 %v2620, %v2618
    %v2681 = vpack.c.b16 %v2623, %v2621
    %v2682 = vpack.c.b16 %v2624, %v2622
    %v2683 = vpack.c.b16 %v2627, %v2625
    %v2684 = vpack.c.b16 %v2628, %v2626
    %v2685 = vpack.c.b16 %v2631, %v2629
    %v2686 = vpack.c.b16 %v2632, %v2630
    %v2687 = vpack.c.b16 %v2635, %v2633
    %v2688 = vpack.c.b16 %v2636, %v2634
    %v2689 = vpack.c.b16 %v2639, %v2637
    %v2690 = vpack.c.b16 %v2640, %v2638
    %v2691 = vpack.c.b16 %v2643, %v2641
    %v2692 = vpack.c.b16 %v2644, %v2642
    %v2693 = vpack.c.b16 %v2647, %v2645
    %v2694 = vpack.c.b16 %v2648, %v2646
    %v2695 = vpack.c.b16 %v2651, %v2649
    %v2696 = vpack.c.b16 %v2652, %v2650
    %v2697 = vpack.c.b16 %v2655, %v2653
    %v2698 = vpack.c.b16 %v2656, %v2654
    %v2699 = vpack.c.b16 %v2659, %v2657
    %v2700 = vpack.c.b16 %v2660, %v2658
    %v2701 = vpack.c.b16 %v2663, %v2661
    %v2702 = vpack.c.b16 %v2664, %v2662
    %v2703 = vpack.c.b16 %v2667, %v2665
    %v2704 = vpack.c.b16 %v2668, %v2666
    %v2705 = vpack.c.b16 %v2671, %v2669
    %v2706 = vpack.c.b16 %v2672, %v2670
    %v2707 = vpack.c.b16 %v2675, %v2673
    %v2708 = vpack.c.b16 %v2676, %v2674
    %2741 = vmatprep.subr.bf16.mxu0 %v2678
    %2742 = vmatpush1.bf16.msra.mxu0 %v2677
    %2743 = vmatprep.subr.bf16.mxu0 %v2680
    %2744 = vmatpush1.bf16.msra.mxu0 %v2679
    %2745 = vmatprep.subr.bf16.mxu0 %v2682
    %2746 = vmatpush1.bf16.msra.mxu0 %v2681
    %2747 = vmatprep.subr.bf16.mxu0 %v2684
    %2748 = vmatpush1.bf16.msra.mxu0 %v2683
    %2749 = vmatprep.subr.bf16.mxu0 %v2686
    %2750 = vmatpush1.bf16.msra.mxu0 %v2685
    %2751 = vmatprep.subr.bf16.mxu0 %v2688
    %2752 = vmatpush1.bf16.msra.mxu0 %v2687
    %2753 = vmatprep.subr.bf16.mxu0 %v2690
    %2754 = vmatpush1.bf16.msra.mxu0 %v2689
    %2755 = vmatprep.subr.bf16.mxu0 %v2692
    %2756 = vmatpush1.bf16.msra.mxu0 %v2691
    %2757 = vmatprep.subr.bf16.mxu0 %v2694
    %2758 = vmatpush1.bf16.msra.mxu0 %v2693
    %2759 = vmatprep.subr.bf16.mxu0 %v2696
    %2760 = vmatpush1.bf16.msra.mxu0 %v2695
    %2761 = vmatprep.subr.bf16.mxu0 %v2698
    %2762 = vmatpush1.bf16.msra.mxu0 %v2697
    %2763 = vmatprep.subr.bf16.mxu0 %v2700
    %2764 = vmatpush1.bf16.msra.mxu0 %v2699
    %2765 = vmatprep.subr.bf16.mxu0 %v2702
    %2766 = vmatpush1.bf16.msra.mxu0 %v2701
    %2767 = vmatprep.subr.bf16.mxu0 %v2704
    %2768 = vmatpush1.bf16.msra.mxu0 %v2703
    %2769 = vmatprep.subr.bf16.mxu0 %v2706
    %2770 = vmatpush1.bf16.msra.mxu0 %v2705
    %2771 = vmatprep.subr.bf16.mxu0 %v2708
    %2772 = vmatpush1.bf16.msra.mxu0 %v2707
    %2773 = vmatprep.mubr.bf16.mxu0 %v1731
    %2774 = vmatmul.mubr.bf16.gmra.mrb[0].mxu0 %v1730
    %v2775 = vpop.f32.mrb[0].mxu0
    %v2776 = vadd.f32 %v2563, %v2775
    %v2777 = vpop.f32.mrb[0].mxu0
    %v2778 = vadd.f32 %v2565, %v2777
    %v2779 = vpop.f32.mrb[0].mxu0
    %v2780 = vadd.f32 %v2567, %v2779
    %v2781 = vpop.f32.mrb[0].mxu0
    %v2782 = vadd.f32 %v2569, %v2781
    %2783 = vmatprep.mubr.bf16.mxu0 %v1733
    %2784 = vmatmul.mubr.bf16.gmra.mrb[0].mxu0 %v1732
    %v2785 = vpop.f32.mrb[0].mxu0
    %v2786 = vadd.f32 %v2573, %v2785
    %v2787 = vpop.f32.mrb[0].mxu0
    %v2788 = vadd.f32 %v2575, %v2787
    %v2789 = vpop.f32.mrb[0].mxu0
    %v2790 = vadd.f32 %v2577, %v2789
    %v2791 = vpop.f32.mrb[0].mxu0
    %v2792 = vadd.f32 %v2579, %v2791
    %2793 = vdwg.mxu0
    %s2794 = scalar_lea.vmem %s7, 32
    %v2795 = vld [vmem:[%s2794] sm:$0xf]
    %v2796 = vld [vmem:[%s2794 + $0x4] sm:$0xf]
    %v2797 = vld [vmem:[%s2794 + $0x8] sm:$0xf]
    %v2798 = vld [vmem:[%s2794 + $0xc] sm:$0xf]
    %v2803 = vunpack.c.l.b16 %v2795
    %v2804 = vunpack.c.l.b16 %v2796
    %v2805 = vunpack.c.l.b16 %v2797
    %v2806 = vunpack.c.l.b16 %v2798
    %v2807 = vpack.c.b16 %v2804, %v2803
    %v2808 = vpack.c.b16 %v2806, %v2805
    %v2810 = vsel %vm763, %v2807, 0
    %v2813 = vsel %vm763, %v2808, 0
    %2815 = vmatprep.subr.bf16.mxu0 %v753
    %2816 = vmatpush1.bf16.msra.mxu0 %v752
    %2817 = vmatprep.subr.bf16.mxu0 %v755
    %2818 = vmatpush1.bf16.msra.mxu0 %v754
    %2819 = vmatprep.subr.bf16.mxu0 0
    %2820 = vmatpush1.bf16.msra.mxu0 0
    %2821 = vmatprep.subr.bf16.mxu0 0
    %2822 = vmatpush1.bf16.msra.mxu0 0
    %2823 = vmatprep.subr.bf16.mxu0 0
    %2824 = vmatpush1.bf16.msra.mxu0 0
    %2825 = vmatprep.subr.bf16.mxu0 0
    %2826 = vmatpush1.bf16.msra.mxu0 0
    %2827 = vmatprep.subr.bf16.mxu0 0
    %2828 = vmatpush1.bf16.msra.mxu0 0
    %2829 = vmatprep.subr.bf16.mxu0 0
    %2830 = vmatpush1.bf16.msra.mxu0 0
    %2831 = vmatprep.subr.bf16.mxu0 0
    %2832 = vmatpush1.bf16.msra.mxu0 0
    %2833 = vmatprep.subr.bf16.mxu0 0
    %2834 = vmatpush1.bf16.msra.mxu0 0
    %2835 = vmatprep.subr.bf16.mxu0 0
    %2836 = vmatpush1.bf16.msra.mxu0 0
    %2837 = vmatprep.subr.bf16.mxu0 0
    %2838 = vmatpush1.bf16.msra.mxu0 0
    %2839 = vmatprep.subr.bf16.mxu0 0
    %2840 = vmatpush1.bf16.msra.mxu0 0
    %2841 = vmatprep.subr.bf16.mxu0 0
    %2842 = vmatpush1.bf16.msra.mxu0 0
    %2843 = vmatprep.subr.bf16.mxu0 0
    %2844 = vmatpush1.bf16.msra.mxu0 0
    %2845 = vmatprep.subr.bf16.mxu0 0
    %2846 = vmatpush1.bf16.msra.mxu0 0
    %2847 = vmatprep.mubr.bf16.mxu0 0
    %2848 = vmatmul.mubr.bf16.gmra.mrb[0].mxu0 %v2810
    %v2849 = vpop.f32.mrb[0].mxu0
    %v2850 = vadd.f32 0.0, %v2849
    %v2851 = vpop.f32.mrb[0].mxu0
    %v2852 = vadd.f32 0.0, %v2851
    %v2853 = vpop.f32.mrb[0].mxu0
    %v2854 = vadd.f32 0.0, %v2853
    %v2855 = vpop.f32.mrb[0].mxu0
    %v2856 = vadd.f32 0.0, %v2855
    %2857 = vmatprep.mubr.bf16.mxu0 0
    %2858 = vmatmul.mubr.bf16.gmra.mrb[0].mxu0 %v2813
    %v2859 = vpop.f32.mrb[0].mxu0
    %v2860 = vadd.f32 0.0, %v2859
    %v2861 = vpop.f32.mrb[0].mxu0
    %v2862 = vadd.f32 0.0, %v2861
    %v2863 = vpop.f32.mrb[0].mxu0
    %v2864 = vadd.f32 0.0, %v2863
    %v2865 = vpop.f32.mrb[0].mxu0
    %v2866 = vadd.f32 0.0, %v2865
    %2867 = vdwg.mxu0
    %v2868 = vpack.c.bf16 %v2854, %v2850
    %v2869 = vpack.c.bf16 %v2856, %v2852
    %v2870 = vpack.c.bf16 %v2864, %v2860
    %v2871 = vpack.c.bf16 %v2866, %v2862
    %s2872 = scalar_lea.vmem %s8, 512
    %v2873 = vld [vmem:[%s2872] sm:$0xff]
    %v2874 = vld [vmem:[%s2872 + $0x8] sm:$0xff]
    %v2875 = vld [vmem:[%s2872 + $0x10] sm:$0xff]
    %v2876 = vld [vmem:[%s2872 + $0x18] sm:$0xff]
    %v2877 = vld [vmem:[%s2872 + $0x20] sm:$0xff]
    %v2878 = vld [vmem:[%s2872 + $0x28] sm:$0xff]
    %v2879 = vld [vmem:[%s2872 + $0x30] sm:$0xff]
    %v2880 = vld [vmem:[%s2872 + $0x38] sm:$0xff]
    %v2881 = vld [vmem:[%s2872 + $0x40] sm:$0xff]
    %v2882 = vld [vmem:[%s2872 + $0x48] sm:$0xff]
    %v2883 = vld [vmem:[%s2872 + $0x50] sm:$0xff]
    %v2884 = vld [vmem:[%s2872 + $0x58] sm:$0xff]
    %v2885 = vld [vmem:[%s2872 + $0x60] sm:$0xff]
    %v2886 = vld [vmem:[%s2872 + $0x68] sm:$0xff]
    %v2887 = vld [vmem:[%s2872 + $0x70] sm:$0xff]
    %v2888 = vld [vmem:[%s2872 + $0x78] sm:$0xff]
    %v2889 = vld [vmem:[%s2872 + $0x80] sm:$0xff]
    %v2890 = vld [vmem:[%s2872 + $0x88] sm:$0xff]
    %v2891 = vld [vmem:[%s2872 + $0x90] sm:$0xff]
    %v2892 = vld [vmem:[%s2872 + $0x98] sm:$0xff]
    %v2893 = vld [vmem:[%s2872 + $0xa0] sm:$0xff]
    %v2894 = vld [vmem:[%s2872 + $0xa8] sm:$0xff]
    %v2895 = vld [vmem:[%s2872 + $0xb0] sm:$0xff]
    %v2896 = vld [vmem:[%s2872 + $0xb8] sm:$0xff]
    %v2897 = vld [vmem:[%s2872 + $0xc0] sm:$0xff]
    %v2898 = vld [vmem:[%s2872 + $0xc8] sm:$0xff]
    %v2899 = vld [vmem:[%s2872 + $0xd0] sm:$0xff]
    %v2900 = vld [vmem:[%s2872 + $0xd8] sm:$0xff]
    %v2901 = vld [vmem:[%s2872 + $0xe0] sm:$0xff]
    %v2902 = vld [vmem:[%s2872 + $0xe8] sm:$0xff]
    %v2903 = vld [vmem:[%s2872 + $0xf0] sm:$0xff]
    %v2904 = vld [vmem:[%s2872 + $0xf8] sm:$0xff]
    %v2937 = vunpack.c.l.b16 %v2873
    %v2938 = vunpack.c.h.b16 %v2873
    %v2939 = vunpack.c.l.b16 %v2874
    %v2940 = vunpack.c.h.b16 %v2874
    %v2941 = vunpack.c.l.b16 %v2875
    %v2942 = vunpack.c.h.b16 %v2875
    %v2943 = vunpack.c.l.b16 %v2876
    %v2944 = vunpack.c.h.b16 %v2876
    %v2945 = vunpack.c.l.b16 %v2877
    %v2946 = vunpack.c.h.b16 %v2877
    %v2947 = vunpack.c.l.b16 %v2878
    %v2948 = vunpack.c.h.b16 %v2878
    %v2949 = vunpack.c.l.b16 %v2879
    %v2950 = vunpack.c.h.b16 %v2879
    %v2951 = vunpack.c.l.b16 %v2880
    %v2952 = vunpack.c.h.b16 %v2880
    %v2953 = vunpack.c.l.b16 %v2881
    %v2954 = vunpack.c.h.b16 %v2881
    %v2955 = vunpack.c.l.b16 %v2882
    %v2956 = vunpack.c.h.b16 %v2882
    %v2957 = vunpack.c.l.b16 %v2883
    %v2958 = vunpack.c.h.b16 %v2883
    %v2959 = vunpack.c.l.b16 %v2884
    %v2960 = vunpack.c.h.b16 %v2884
    %v2961 = vunpack.c.l.b16 %v2885
    %v2962 = vunpack.c.h.b16 %v2885
    %v2963 = vunpack.c.l.b16 %v2886
    %v2964 = vunpack.c.h.b16 %v2886
    %v2965 = vunpack.c.l.b16 %v2887
    %v2966 = vunpack.c.h.b16 %v2887
    %v2967 = vunpack.c.l.b16 %v2888
    %v2968 = vunpack.c.h.b16 %v2888
    %v2969 = vunpack.c.l.b16 %v2889
    %v2970 = vunpack.c.h.b16 %v2889
    %v2971 = vunpack.c.l.b16 %v2890
    %v2972 = vunpack.c.h.b16 %v2890
    %v2973 = vunpack.c.l.b16 %v2891
    %v2974 = vunpack.c.h.b16 %v2891
    %v2975 = vunpack.c.l.b16 %v2892
    %v2976 = vunpack.c.h.b16 %v2892
    %v2977 = vunpack.c.l.b16 %v2893
    %v2978 = vunpack.c.h.b16 %v2893
    %v2979 = vunpack.c.l.b16 %v2894
    %v2980 = vunpack.c.h.b16 %v2894
    %v2981 = vunpack.c.l.b16 %v2895
    %v2982 = vunpack.c.h.b16 %v2895
    %v2983 = vunpack.c.l.b16 %v2896
    %v2984 = vunpack.c.h.b16 %v2896
    %v2985 = vunpack.c.l.b16 %v2897
    %v2986 = vunpack.c.h.b16 %v2897
    %v2987 = vunpack.c.l.b16 %v2898
    %v2988 = vunpack.c.h.b16 %v2898
    %v2989 = vunpack.c.l.b16 %v2899
    %v2990 = vunpack.c.h.b16 %v2899
    %v2991 = vunpack.c.l.b16 %v2900
    %v2992 = vunpack.c.h.b16 %v2900
    %v2993 = vunpack.c.l.b16 %v2901
    %v2994 = vunpack.c.h.b16 %v2901
    %v2995 = vunpack.c.l.b16 %v2902
    %v2996 = vunpack.c.h.b16 %v2902
    %v2997 = vunpack.c.l.b16 %v2903
    %v2998 = vunpack.c.h.b16 %v2903
    %v2999 = vunpack.c.l.b16 %v2904
    %v3000 = vunpack.c.h.b16 %v2904
    %v3001 = vpack.c.b16 %v2939, %v2937
    %v3002 = vpack.c.b16 %v2940, %v2938
    %v3003 = vpack.c.b16 %v2943, %v2941
    %v3004 = vpack.c.b16 %v2944, %v2942
    %v3005 = vpack.c.b16 %v2947, %v2945
    %v3006 = vpack.c.b16 %v2948, %v2946
    %v3007 = vpack.c.b16 %v2951, %v2949
    %v3008 = vpack.c.b16 %v2952, %v2950
    %v3009 = vpack.c.b16 %v2955, %v2953
    %v3010 = vpack.c.b16 %v2956, %v2954
    %v3011 = vpack.c.b16 %v2959, %v2957
    %v3012 = vpack.c.b16 %v2960, %v2958
    %v3013 = vpack.c.b16 %v2963, %v2961
    %v3014 = vpack.c.b16 %v2964, %v2962
    %v3015 = vpack.c.b16 %v2967, %v2965
    %v3016 = vpack.c.b16 %v2968, %v2966
    %v3017 = vpack.c.b16 %v2971, %v2969
    %v3018 = vpack.c.b16 %v2972, %v2970
    %v3019 = vpack.c.b16 %v2975, %v2973
    %v3020 = vpack.c.b16 %v2976, %v2974
    %v3021 = vpack.c.b16 %v2979, %v2977
    %v3022 = vpack.c.b16 %v2980, %v2978
    %v3023 = vpack.c.b16 %v2983, %v2981
    %v3024 = vpack.c.b16 %v2984, %v2982
    %v3025 = vpack.c.b16 %v2987, %v2985
    %v3026 = vpack.c.b16 %v2988, %v2986
    %v3027 = vpack.c.b16 %v2991, %v2989
    %v3028 = vpack.c.b16 %v2992, %v2990
    %v3029 = vpack.c.b16 %v2995, %v2993
    %v3030 = vpack.c.b16 %v2996, %v2994
    %v3031 = vpack.c.b16 %v2999, %v2997
    %v3032 = vpack.c.b16 %v3000, %v2998
    %3065 = vmatprep.subr.bf16.mxu0 %v3002
    %3066 = vmatpush1.bf16.msra.mxu0 %v3001
    %3067 = vmatprep.subr.bf16.mxu0 %v3004
    %3068 = vmatpush1.bf16.msra.mxu0 %v3003
    %3069 = vmatprep.subr.bf16.mxu0 %v3006
    %3070 = vmatpush1.bf16.msra.mxu0 %v3005
    %3071 = vmatprep.subr.bf16.mxu0 %v3008
    %3072 = vmatpush1.bf16.msra.mxu0 %v3007
    %3073 = vmatprep.subr.bf16.mxu0 %v3010
    %3074 = vmatpush1.bf16.msra.mxu0 %v3009
    %3075 = vmatprep.subr.bf16.mxu0 %v3012
    %3076 = vmatpush1.bf16.msra.mxu0 %v3011
    %3077 = vmatprep.subr.bf16.mxu0 %v3014
    %3078 = vmatpush1.bf16.msra.mxu0 %v3013
    %3079 = vmatprep.subr.bf16.mxu0 %v3016
    %3080 = vmatpush1.bf16.msra.mxu0 %v3015
    %3081 = vmatprep.subr.bf16.mxu0 %v3018
    %3082 = vmatpush1.bf16.msra.mxu0 %v3017
    %3083 = vmatprep.subr.bf16.mxu0 %v3020
    %3084 = vmatpush1.bf16.msra.mxu0 %v3019
    %3085 = vmatprep.subr.bf16.mxu0 %v3022
    %3086 = vmatpush1.bf16.msra.mxu0 %v3021
    %3087 = vmatprep.subr.bf16.mxu0 %v3024
    %3088 = vmatpush1.bf16.msra.mxu0 %v3023
    %3089 = vmatprep.subr.bf16.mxu0 %v3026
    %3090 = vmatpush1.bf16.msra.mxu0 %v3025
    %3091 = vmatprep.subr.bf16.mxu0 %v3028
    %3092 = vmatpush1.bf16.msra.mxu0 %v3027
    %3093 = vmatprep.subr.bf16.mxu0 %v3030
    %3094 = vmatpush1.bf16.msra.mxu0 %v3029
    %3095 = vmatprep.subr.bf16.mxu0 %v3032
    %3096 = vmatpush1.bf16.msra.mxu0 %v3031
    %3097 = vmatprep.mubr.bf16.mxu0 %v2869
    %3098 = vmatmul.mubr.bf16.gmra.mrb[0].mxu0 %v2868
    %v3099 = vpop.f32.mrb[0].mxu0
    %v3100 = vadd.f32 0.0, %v3099
    %v3101 = vpop.f32.mrb[0].mxu0
    %v3102 = vadd.f32 0.0, %v3101
    %v3103 = vpop.f32.mrb[0].mxu0
    %v3104 = vadd.f32 0.0, %v3103
    %v3105 = vpop.f32.mrb[0].mxu0
    %v3106 = vadd.f32 0.0, %v3105
    %3107 = vmatprep.mubr.bf16.mxu0 %v2871
    %3108 = vmatmul.mubr.bf16.gmra.mrb[0].mxu0 %v2870
    %v3109 = vpop.f32.mrb[0].mxu0
    %v3110 = vadd.f32 0.0, %v3109
    %v3111 = vpop.f32.mrb[0].mxu0
    %v3112 = vadd.f32 0.0, %v3111
    %v3113 = vpop.f32.mrb[0].mxu0
    %v3114 = vadd.f32 0.0, %v3113
    %v3115 = vpop.f32.mrb[0].mxu0
    %v3116 = vadd.f32 0.0, %v3115
    %3117 = vdwg.mxu0
    %v3118 = vadd.f32 %v2317, %v3100
    %v3119 = vadd.f32 %v2319, %v3102
    %v3120 = vadd.f32 %v2321, %v3104
    %v3121 = vadd.f32 %v2323, %v3106
    %v3122 = vadd.f32 %v2327, %v3110
    %v3123 = vadd.f32 %v2329, %v3112
    %v3124 = vadd.f32 %v2331, %v3114
    %v3125 = vadd.f32 %v2333, %v3116
    %s3126 = scalar_lea.vmem %s10, 512
    %v3127 = vld [vmem:[%s3126] sm:$0xff]
    %v3128 = vld [vmem:[%s3126 + $0x8] sm:$0xff]
    %v3129 = vld [vmem:[%s3126 + $0x10] sm:$0xff]
    %v3130 = vld [vmem:[%s3126 + $0x18] sm:$0xff]
    %v3131 = vld [vmem:[%s3126 + $0x20] sm:$0xff]
    %v3132 = vld [vmem:[%s3126 + $0x28] sm:$0xff]
    %v3133 = vld [vmem:[%s3126 + $0x30] sm:$0xff]
    %v3134 = vld [vmem:[%s3126 + $0x38] sm:$0xff]
    %v3135 = vld [vmem:[%s3126 + $0x40] sm:$0xff]
    %v3136 = vld [vmem:[%s3126 + $0x48] sm:$0xff]
    %v3137 = vld [vmem:[%s3126 + $0x50] sm:$0xff]
    %v3138 = vld [vmem:[%s3126 + $0x58] sm:$0xff]
    %v3139 = vld [vmem:[%s3126 + $0x60] sm:$0xff]
    %v3140 = vld [vmem:[%s3126 + $0x68] sm:$0xff]
    %v3141 = vld [vmem:[%s3126 + $0x70] sm:$0xff]
    %v3142 = vld [vmem:[%s3126 + $0x78] sm:$0xff]
    %v3143 = vld [vmem:[%s3126 + $0x80] sm:$0xff]
    %v3144 = vld [vmem:[%s3126 + $0x88] sm:$0xff]
    %v3145 = vld [vmem:[%s3126 + $0x90] sm:$0xff]
    %v3146 = vld [vmem:[%s3126 + $0x98] sm:$0xff]
    %v3147 = vld [vmem:[%s3126 + $0xa0] sm:$0xff]
    %v3148 = vld [vmem:[%s3126 + $0xa8] sm:$0xff]
    %v3149 = vld [vmem:[%s3126 + $0xb0] sm:$0xff]
    %v3150 = vld [vmem:[%s3126 + $0xb8] sm:$0xff]
    %v3151 = vld [vmem:[%s3126 + $0xc0] sm:$0xff]
    %v3152 = vld [vmem:[%s3126 + $0xc8] sm:$0xff]
    %v3153 = vld [vmem:[%s3126 + $0xd0] sm:$0xff]
    %v3154 = vld [vmem:[%s3126 + $0xd8] sm:$0xff]
    %v3155 = vld [vmem:[%s3126 + $0xe0] sm:$0xff]
    %v3156 = vld [vmem:[%s3126 + $0xe8] sm:$0xff]
    %v3157 = vld [vmem:[%s3126 + $0xf0] sm:$0xff]
    %v3158 = vld [vmem:[%s3126 + $0xf8] sm:$0xff]
    %v3191 = vunpack.c.l.b16 %v3127
    %v3192 = vunpack.c.h.b16 %v3127
    %v3193 = vunpack.c.l.b16 %v3128
    %v3194 = vunpack.c.h.b16 %v3128
    %v3195 = vunpack.c.l.b16 %v3129
    %v3196 = vunpack.c.h.b16 %v3129
    %v3197 = vunpack.c.l.b16 %v3130
    %v3198 = vunpack.c.h.b16 %v3130
    %v3199 = vunpack.c.l.b16 %v3131
    %v3200 = vunpack.c.h.b16 %v3131
    %v3201 = vunpack.c.l.b16 %v3132
    %v3202 = vunpack.c.h.b16 %v3132
    %v3203 = vunpack.c.l.b16 %v3133
    %v3204 = vunpack.c.h.b16 %v3133
    %v3205 = vunpack.c.l.b16 %v3134
    %v3206 = vunpack.c.h.b16 %v3134
    %v3207 = vunpack.c.l.b16 %v3135
    %v3208 = vunpack.c.h.b16 %v3135
    %v3209 = vunpack.c.l.b16 %v3136
    %v3210 = vunpack.c.h.b16 %v3136
    %v3211 = vunpack.c.l.b16 %v3137
    %v3212 = vunpack.c.h.b16 %v3137
    %v3213 = vunpack.c.l.b16 %v3138
    %v3214 = vunpack.c.h.b16 %v3138
    %v3215 = vunpack.c.l.b16 %v3139
    %v3216 = vunpack.c.h.b16 %v3139
    %v3217 = vunpack.c.l.b16 %v3140
    %v3218 = vunpack.c.h.b16 %v3140
    %v3219 = vunpack.c.l.b16 %v3141
    %v3220 = vunpack.c.h.b16 %v3141
    %v3221 = vunpack.c.l.b16 %v3142
    %v3222 = vunpack.c.h.b16 %v3142
    %v3223 = vunpack.c.l.b16 %v3143
    %v3224 = vunpack.c.h.b16 %v3143
    %v3225 = vunpack.c.l.b16 %v3144
    %v3226 = vunpack.c.h.b16 %v3144
    %v3227 = vunpack.c.l.b16 %v3145
    %v3228 = vunpack.c.h.b16 %v3145
    %v3229 = vunpack.c.l.b16 %v3146
    %v3230 = vunpack.c.h.b16 %v3146
    %v3231 = vunpack.c.l.b16 %v3147
    %v3232 = vunpack.c.h.b16 %v3147
    %v3233 = vunpack.c.l.b16 %v3148
    %v3234 = vunpack.c.h.b16 %v3148
    %v3235 = vunpack.c.l.b16 %v3149
    %v3236 = vunpack.c.h.b16 %v3149
    %v3237 = vunpack.c.l.b16 %v3150
    %v3238 = vunpack.c.h.b16 %v3150
    %v3239 = vunpack.c.l.b16 %v3151
    %v3240 = vunpack.c.h.b16 %v3151
    %v3241 = vunpack.c.l.b16 %v3152
    %v3242 = vunpack.c.h.b16 %v3152
    %v3243 = vunpack.c.l.b16 %v3153
    %v3244 = vunpack.c.h.b16 %v3153
    %v3245 = vunpack.c.l.b16 %v3154
    %v3246 = vunpack.c.h.b16 %v3154
    %v3247 = vunpack.c.l.b16 %v3155
    %v3248 = vunpack.c.h.b16 %v3155
    %v3249 = vunpack.c.l.b16 %v3156
    %v3250 = vunpack.c.h.b16 %v3156
    %v3251 = vunpack.c.l.b16 %v3157
    %v3252 = vunpack.c.h.b16 %v3157
    %v3253 = vunpack.c.l.b16 %v3158
    %v3254 = vunpack.c.h.b16 %v3158
    %v3255 = vpack.c.b16 %v3193, %v3191
    %v3256 = vpack.c.b16 %v3194, %v3192
    %v3257 = vpack.c.b16 %v3197, %v3195
    %v3258 = vpack.c.b16 %v3198, %v3196
    %v3259 = vpack.c.b16 %v3201, %v3199
    %v3260 = vpack.c.b16 %v3202, %v3200
    %v3261 = vpack.c.b16 %v3205, %v3203
    %v3262 = vpack.c.b16 %v3206, %v3204
    %v3263 = vpack.c.b16 %v3209, %v3207
    %v3264 = vpack.c.b16 %v3210, %v3208
    %v3265 = vpack.c.b16 %v3213, %v3211
    %v3266 = vpack.c.b16 %v3214, %v3212
    %v3267 = vpack.c.b16 %v3217, %v3215
    %v3268 = vpack.c.b16 %v3218, %v3216
    %v3269 = vpack.c.b16 %v3221, %v3219
    %v3270 = vpack.c.b16 %v3222, %v3220
    %v3271 = vpack.c.b16 %v3225, %v3223
    %v3272 = vpack.c.b16 %v3226, %v3224
    %v3273 = vpack.c.b16 %v3229, %v3227
    %v3274 = vpack.c.b16 %v3230, %v3228
    %v3275 = vpack.c.b16 %v3233, %v3231
    %v3276 = vpack.c.b16 %v3234, %v3232
    %v3277 = vpack.c.b16 %v3237, %v3235
    %v3278 = vpack.c.b16 %v3238, %v3236
    %v3279 = vpack.c.b16 %v3241, %v3239
    %v3280 = vpack.c.b16 %v3242, %v3240
    %v3281 = vpack.c.b16 %v3245, %v3243
    %v3282 = vpack.c.b16 %v3246, %v3244
    %v3283 = vpack.c.b16 %v3249, %v3247
    %v3284 = vpack.c.b16 %v3250, %v3248
    %v3285 = vpack.c.b16 %v3253, %v3251
    %v3286 = vpack.c.b16 %v3254, %v3252
    %3319 = vmatprep.subr.bf16.mxu0 %v3256
    %3320 = vmatpush1.bf16.msra.mxu0 %v3255
    %3321 = vmatprep.subr.bf16.mxu0 %v3258
    %3322 = vmatpush1.bf16.msra.mxu0 %v3257
    %3323 = vmatprep.subr.bf16.mxu0 %v3260
    %3324 = vmatpush1.bf16.msra.mxu0 %v3259
    %3325 = vmatprep.subr.bf16.mxu0 %v3262
    %3326 = vmatpush1.bf16.msra.mxu0 %v3261
    %3327 = vmatprep.subr.bf16.mxu0 %v3264
    %3328 = vmatpush1.bf16.msra.mxu0 %v3263
    %3329 = vmatprep.subr.bf16.mxu0 %v3266
    %3330 = vmatpush1.bf16.msra.mxu0 %v3265
    %3331 = vmatprep.subr.bf16.mxu0 %v3268
    %3332 = vmatpush1.bf16.msra.mxu0 %v3267
    %3333 = vmatprep.subr.bf16.mxu0 %v3270
    %3334 = vmatpush1.bf16.msra.mxu0 %v3269
    %3335 = vmatprep.subr.bf16.mxu0 %v3272
    %3336 = vmatpush1.bf16.msra.mxu0 %v3271
    %3337 = vmatprep.subr.bf16.mxu0 %v3274
    %3338 = vmatpush1.bf16.msra.mxu0 %v3273
    %3339 = vmatprep.subr.bf16.mxu0 %v3276
    %3340 = vmatpush1.bf16.msra.mxu0 %v3275
    %3341 = vmatprep.subr.bf16.mxu0 %v3278
    %3342 = vmatpush1.bf16.msra.mxu0 %v3277
    %3343 = vmatprep.subr.bf16.mxu0 %v3280
    %3344 = vmatpush1.bf16.msra.mxu0 %v3279
    %3345 = vmatprep.subr.bf16.mxu0 %v3282
    %3346 = vmatpush1.bf16.msra.mxu0 %v3281
    %3347 = vmatprep.subr.bf16.mxu0 %v3284
    %3348 = vmatpush1.bf16.msra.mxu0 %v3283
    %3349 = vmatprep.subr.bf16.mxu0 %v3286
    %3350 = vmatpush1.bf16.msra.mxu0 %v3285
    %3351 = vmatprep.mubr.bf16.mxu0 %v2869
    %3352 = vmatmul.mubr.bf16.gmra.mrb[0].mxu0 %v2868
    %v3353 = vpop.f32.mrb[0].mxu0
    %v3354 = vadd.f32 0.0, %v3353
    %v3355 = vpop.f32.mrb[0].mxu0
    %v3356 = vadd.f32 0.0, %v3355
    %v3357 = vpop.f32.mrb[0].mxu0
    %v3358 = vadd.f32 0.0, %v3357
    %v3359 = vpop.f32.mrb[0].mxu0
    %v3360 = vadd.f32 0.0, %v3359
    %3361 = vmatprep.mubr.bf16.mxu0 %v2871
    %3362 = vmatmul.mubr.bf16.gmra.mrb[0].mxu0 %v2870
    %v3363 = vpop.f32.mrb[0].mxu0
    %v3364 = vadd.f32 0.0, %v3363
    %v3365 = vpop.f32.mrb[0].mxu0
    %v3366 = vadd.f32 0.0, %v3365
    %v3367 = vpop.f32.mrb[0].mxu0
    %v3368 = vadd.f32 0.0, %v3367
    %v3369 = vpop.f32.mrb[0].mxu0
    %v3370 = vadd.f32 0.0, %v3369
    %3371 = vdwg.mxu0
    %v3372 = vadd.f32 %v2776, %v3354
    %v3373 = vadd.f32 %v2778, %v3356
    %v3374 = vadd.f32 %v2780, %v3358
    %v3375 = vadd.f32 %v2782, %v3360
    %v3376 = vadd.f32 %v2786, %v3364
    %v3377 = vadd.f32 %v2788, %v3366
    %v3378 = vadd.f32 %v2790, %v3368
    %v3379 = vadd.f32 %v2792, %v3370
    %v3380 = vld [vmem:[%s9] sm:$0x3]
    %v3382 = vlaneseq
    %v3383 = vshrl.u32 %v3382, 7
    %v3384 = vsub.s32 0, %v3383
    %v3385 = vrot.slane %v3380, %v3384
    %v3386 = vlaneseq
    %v3387 = vshrl.u32 %v3386, 7
    %v3388 = vsub.s32 1, %v3387
    %v3389 = vrot.slane %v3380, %v3388
    %v3392 = vadd.f32 %v3118, %v3385
    %v3393 = vadd.f32 %v3119, %v3389
    %v3394 = vadd.f32 %v3120, %v3385
    %v3395 = vadd.f32 %v3121, %v3389
    %v3396 = vadd.f32 %v3122, %v3385
    %v3397 = vadd.f32 %v3123, %v3389
    %v3398 = vadd.f32 %v3124, %v3385
    %v3399 = vadd.f32 %v3125, %v3389
    %v3400 = vld [vmem:[%s11] sm:$0x3]
    %v3402 = vlaneseq
    %v3403 = vshrl.u32 %v3402, 7
    %v3404 = vsub.s32 0, %v3403
    %v3405 = vrot.slane %v3400, %v3404
    %v3406 = vlaneseq
    %v3407 = vshrl.u32 %v3406, 7
    %v3408 = vsub.s32 1, %v3407
    %v3409 = vrot.slane %v3400, %v3408
    %v3412 = vadd.f32 %v3372, %v3405
    %v3413 = vadd.f32 %v3373, %v3409
    %v3414 = vadd.f32 %v3374, %v3405
    %v3415 = vadd.f32 %v3375, %v3409
    %v3416 = vadd.f32 %v3376, %v3405
    %v3417 = vadd.f32 %v3377, %v3409
    %v3418 = vadd.f32 %v3378, %v3405
    %v3419 = vadd.f32 %v3379, %v3409
    %3420 = vst [vmem:[%s20] sm:$0xff] %v3392
    %3421 = vst.msk [vmem:[%s20 + $0x8] sm:$0xff] %vm118, %v3393
    %3422 = vst [vmem:[%s20 + $0x10] sm:$0xff] %v3394
    %3423 = vst.msk [vmem:[%s20 + $0x18] sm:$0xff] %vm118, %v3395
    %3424 = vst [vmem:[%s20 + $0x20] sm:$0xff] %v3396
    %3425 = vst.msk [vmem:[%s20 + $0x28] sm:$0xff] %vm118, %v3397
    %3426 = vst [vmem:[%s20 + $0x30] sm:$0xff] %v3398
    %3427 = vst.msk [vmem:[%s20 + $0x38] sm:$0xff] %vm118, %v3399
    %3428 = vst [vmem:[%s21] sm:$0xff] %v3412
    %3429 = vst [vmem:[%s21 + $0x8] sm:$0xff] %v3413
    %3430 = vst [vmem:[%s21 + $0x10] sm:$0xff] %v3414
    %3431 = vst [vmem:[%s21 + $0x18] sm:$0xff] %v3415
    %3432 = vst [vmem:[%s21 + $0x20] sm:$0xff] %v3416
    %3433 = vst [vmem:[%s21 + $0x28] sm:$0xff] %v3417
    %3434 = vst [vmem:[%s21 + $0x30] sm:$0xff] %v3418
    %3435 = vst [vmem:[%s21 + $0x38] sm:$0xff] %v3419
    %v3436 = vld [vmem:[%s12] sm:$0xf]
    %v3437 = vld [vmem:[%s12 + $0x4] sm:$0xf]
    %v3440 = vunpack.c.l.b16 %v3436
    %v3441 = vunpack.c.l.b16 %v3437
    %v3442 = vpack.c.b16 %v3441, %v3440
    %vm3443 = vcmask 130048
    %v3445 = vsel %vm3443, %v3442, 0
    %3447 = vmatprep.subr.bf16.mxu0 %v1656
    %3448 = vmatpush1.bf16.msra.mxu0 %v1655
    %3449 = vmatprep.subr.bf16.mxu0 0
    %3450 = vmatpush1.bf16.msra.mxu0 0
    %3451 = vmatprep.subr.bf16.mxu0 0
    %3452 = vmatpush1.bf16.msra.mxu0 0
    %3453 = vmatprep.subr.bf16.mxu0 0
    %3454 = vmatpush1.bf16.msra.mxu0 0
    %3455 = vmatprep.subr.bf16.mxu0 0
    %3456 = vmatpush1.bf16.msra.mxu0 0
    %3457 = vmatprep.subr.bf16.mxu0 0
    %3458 = vmatpush1.bf16.msra.mxu0 0
    %3459 = vmatprep.subr.bf16.mxu0 0
    %3460 = vmatpush1.bf16.msra.mxu0 0
    %3461 = vmatprep.subr.bf16.mxu0 0
    %3462 = vmatpush1.bf16.msra.mxu0 0
    %3463 = vmatprep.subr.bf16.mxu0 0
    %3464 = vmatpush1.bf16.msra.mxu0 0
    %3465 = vmatprep.subr.bf16.mxu0 0
    %3466 = vmatpush1.bf16.msra.mxu0 0
    %3467 = vmatprep.subr.bf16.mxu0 0
    %3468 = vmatpush1.bf16.msra.mxu0 0
    %3469 = vmatprep.subr.bf16.mxu0 0
    %3470 = vmatpush1.bf16.msra.mxu0 0
    %3471 = vmatprep.subr.bf16.mxu0 0
    %3472 = vmatpush1.bf16.msra.mxu0 0
    %3473 = vmatprep.subr.bf16.mxu0 0
    %3474 = vmatpush1.bf16.msra.mxu0 0
    %3475 = vmatprep.subr.bf16.mxu0 0
    %3476 = vmatpush1.bf16.msra.mxu0 0
    %3477 = vmatprep.subr.bf16.mxu0 0
    %3478 = vmatpush1.bf16.msra.mxu0 0
    %3479 = vmatprep.mubr.bf16.mxu0 0
    %3480 = vmatmul.mubr.bf16.gmra.mrb[0].mxu0 %v3445
    %v3481 = vpop.f32.mrb[0].mxu0
    %v3482 = vadd.f32 0.0, %v3481
    %v3483 = vpop.f32.mrb[0].mxu0
    %v3484 = vadd.f32 0.0, %v3483
    %v3485 = vpop.f32.mrb[0].mxu0
    %v3486 = vadd.f32 0.0, %v3485
    %v3487 = vpop.f32.mrb[0].mxu0
    %v3488 = vadd.f32 0.0, %v3487
    %3489 = vdwg.mxu0
    %v3490 = vpack.c.bf16 %v3486, %v3482
    %v3491 = vpack.c.bf16 %v3488, %v3484
    %v3492 = vld [vmem:[%s13] sm:$0xff]
    %v3493 = vld [vmem:[%s13 + $0x8] sm:$0xff]
    %v3494 = vld [vmem:[%s13 + $0x10] sm:$0xff]
    %v3495 = vld [vmem:[%s13 + $0x18] sm:$0xff]
    %v3496 = vld [vmem:[%s13 + $0x20] sm:$0xff]
    %v3497 = vld [vmem:[%s13 + $0x28] sm:$0xff]
    %v3498 = vld [vmem:[%s13 + $0x30] sm:$0xff]
    %v3499 = vld [vmem:[%s13 + $0x38] sm:$0xff]
    %v3500 = vld [vmem:[%s13 + $0x40] sm:$0xff]
    %v3501 = vld [vmem:[%s13 + $0x48] sm:$0xff]
    %v3502 = vld [vmem:[%s13 + $0x50] sm:$0xff]
    %v3503 = vld [vmem:[%s13 + $0x58] sm:$0xff]
    %v3504 = vld [vmem:[%s13 + $0x60] sm:$0xff]
    %v3505 = vld [vmem:[%s13 + $0x68] sm:$0xff]
    %v3506 = vld [vmem:[%s13 + $0x70] sm:$0xff]
    %v3507 = vld [vmem:[%s13 + $0x78] sm:$0xff]
    %v3508 = vld [vmem:[%s13 + $0x80] sm:$0xff]
    %v3509 = vld [vmem:[%s13 + $0x88] sm:$0xff]
    %v3510 = vld [vmem:[%s13 + $0x90] sm:$0xff]
    %v3511 = vld [vmem:[%s13 + $0x98] sm:$0xff]
    %v3512 = vld [vmem:[%s13 + $0xa0] sm:$0xff]
    %v3513 = vld [vmem:[%s13 + $0xa8] sm:$0xff]
    %v3514 = vld [vmem:[%s13 + $0xb0] sm:$0xff]
    %v3515 = vld [vmem:[%s13 + $0xb8] sm:$0xff]
    %v3516 = vld [vmem:[%s13 + $0xc0] sm:$0xff]
    %v3517 = vld [vmem:[%s13 + $0xc8] sm:$0xff]
    %v3518 = vld [vmem:[%s13 + $0xd0] sm:$0xff]
    %v3519 = vld [vmem:[%s13 + $0xd8] sm:$0xff]
    %v3520 = vld [vmem:[%s13 + $0xe0] sm:$0xff]
    %v3521 = vld [vmem:[%s13 + $0xe8] sm:$0xff]
    %v3522 = vld [vmem:[%s13 + $0xf0] sm:$0xff]
    %v3523 = vld [vmem:[%s13 + $0xf8] sm:$0xff]
    %v3524 = vld [vmem:[%s15] sm:$0xff]
    %v3525 = vld [vmem:[%s15 + $0x8] sm:$0xff]
    %v3526 = vld [vmem:[%s15 + $0x10] sm:$0xff]
    %v3527 = vld [vmem:[%s15 + $0x18] sm:$0xff]
    %v3528 = vld [vmem:[%s15 + $0x20] sm:$0xff]
    %v3529 = vld [vmem:[%s15 + $0x28] sm:$0xff]
    %v3530 = vld [vmem:[%s15 + $0x30] sm:$0xff]
    %v3531 = vld [vmem:[%s15 + $0x38] sm:$0xff]
    %v3532 = vld [vmem:[%s15 + $0x40] sm:$0xff]
    %v3533 = vld [vmem:[%s15 + $0x48] sm:$0xff]
    %v3534 = vld [vmem:[%s15 + $0x50] sm:$0xff]
    %v3535 = vld [vmem:[%s15 + $0x58] sm:$0xff]
    %v3536 = vld [vmem:[%s15 + $0x60] sm:$0xff]
    %v3537 = vld [vmem:[%s15 + $0x68] sm:$0xff]
    %v3538 = vld [vmem:[%s15 + $0x70] sm:$0xff]
    %v3539 = vld [vmem:[%s15 + $0x78] sm:$0xff]
    %v3540 = vld [vmem:[%s15 + $0x80] sm:$0xff]
    %v3541 = vld [vmem:[%s15 + $0x88] sm:$0xff]
    %v3542 = vld [vmem:[%s15 + $0x90] sm:$0xff]
    %v3543 = vld [vmem:[%s15 + $0x98] sm:$0xff]
    %v3544 = vld [vmem:[%s15 + $0xa0] sm:$0xff]
    %v3545 = vld [vmem:[%s15 + $0xa8] sm:$0xff]
    %v3546 = vld [vmem:[%s15 + $0xb0] sm:$0xff]
    %v3547 = vld [vmem:[%s15 + $0xb8] sm:$0xff]
    %v3548 = vld [vmem:[%s15 + $0xc0] sm:$0xff]
    %v3549 = vld [vmem:[%s15 + $0xc8] sm:$0xff]
    %v3550 = vld [vmem:[%s15 + $0xd0] sm:$0xff]
    %v3551 = vld [vmem:[%s15 + $0xd8] sm:$0xff]
    %v3552 = vld [vmem:[%s15 + $0xe0] sm:$0xff]
    %v3553 = vld [vmem:[%s15 + $0xe8] sm:$0xff]
    %v3554 = vld [vmem:[%s15 + $0xf0] sm:$0xff]
    %v3555 = vld [vmem:[%s15 + $0xf8] sm:$0xff]
    %s3556 = scalar_lea.vmem %s12, 8
    %v3557 = vld [vmem:[%s3556] sm:$0xf]
    %v3558 = vld [vmem:[%s3556 + $0x4] sm:$0xf]
    %v3561 = vunpack.c.l.b16 %v3557
    %v3562 = vunpack.c.l.b16 %v3558
    %v3563 = vpack.c.b16 %v3562, %v3561
    %v3565 = vsel %vm3443, %v3563, 0
    %3567 = vmatprep.subr.bf16.mxu0 %v1656
    %3568 = vmatpush1.bf16.msra.mxu0 %v1655
    %3569 = vmatprep.subr.bf16.mxu0 0
    %3570 = vmatpush1.bf16.msra.mxu0 0
    %3571 = vmatprep.subr.bf16.mxu0 0
    %3572 = vmatpush1.bf16.msra.mxu0 0
    %3573 = vmatprep.subr.bf16.mxu0 0
    %3574 = vmatpush1.bf16.msra.mxu0 0
    %3575 = vmatprep.subr.bf16.mxu0 0
    %3576 = vmatpush1.bf16.msra.mxu0 0
    %3577 = vmatprep.subr.bf16.mxu0 0
    %3578 = vmatpush1.bf16.msra.mxu0 0
    %3579 = vmatprep.subr.bf16.mxu0 0
    %3580 = vmatpush1.bf16.msra.mxu0 0
    %3581 = vmatprep.subr.bf16.mxu0 0
    %3582 = vmatpush1.bf16.msra.mxu0 0
    %3583 = vmatprep.subr.bf16.mxu0 0
    %3584 = vmatpush1.bf16.msra.mxu0 0
    %3585 = vmatprep.subr.bf16.mxu0 0
    %3586 = vmatpush1.bf16.msra.mxu0 0
    %3587 = vmatprep.subr.bf16.mxu0 0
    %3588 = vmatpush1.bf16.msra.mxu0 0
    %3589 = vmatprep.subr.bf16.mxu0 0
    %3590 = vmatpush1.bf16.msra.mxu0 0
    %3591 = vmatprep.subr.bf16.mxu0 0
    %3592 = vmatpush1.bf16.msra.mxu0 0
    %3593 = vmatprep.subr.bf16.mxu0 0
    %3594 = vmatpush1.bf16.msra.mxu0 0
    %3595 = vmatprep.subr.bf16.mxu0 0
    %3596 = vmatpush1.bf16.msra.mxu0 0
    %3597 = vmatprep.subr.bf16.mxu0 0
    %3598 = vmatpush1.bf16.msra.mxu0 0
    %3599 = vmatprep.mubr.bf16.mxu0 0
    %3600 = vmatmul.mubr.bf16.gmra.mrb[0].mxu0 %v3565
    %v3601 = vpop.f32.mrb[0].mxu0
    %v3602 = vadd.f32 0.0, %v3601
    %v3603 = vpop.f32.mrb[0].mxu0
    %v3604 = vadd.f32 0.0, %v3603
    %v3605 = vpop.f32.mrb[0].mxu0
    %v3606 = vadd.f32 0.0, %v3605
    %v3607 = vpop.f32.mrb[0].mxu0
    %v3608 = vadd.f32 0.0, %v3607
    %3609 = vdwg.mxu0
    %v3610 = vpack.c.bf16 %v3606, %v3602
    %v3611 = vpack.c.bf16 %v3608, %v3604
    %s3612 = scalar_lea.vmem %s13, 256
    %v3613 = vld [vmem:[%s3612] sm:$0xff]
    %v3614 = vld [vmem:[%s3612 + $0x8] sm:$0xff]
    %v3615 = vld [vmem:[%s3612 + $0x10] sm:$0xff]
    %v3616 = vld [vmem:[%s3612 + $0x18] sm:$0xff]
    %v3617 = vld [vmem:[%s3612 + $0x20] sm:$0xff]
    %v3618 = vld [vmem:[%s3612 + $0x28] sm:$0xff]
    %v3619 = vld [vmem:[%s3612 + $0x30] sm:$0xff]
    %v3620 = vld [vmem:[%s3612 + $0x38] sm:$0xff]
    %v3621 = vld [vmem:[%s3612 + $0x40] sm:$0xff]
    %v3622 = vld [vmem:[%s3612 + $0x48] sm:$0xff]
    %v3623 = vld [vmem:[%s3612 + $0x50] sm:$0xff]
    %v3624 = vld [vmem:[%s3612 + $0x58] sm:$0xff]
    %v3625 = vld [vmem:[%s3612 + $0x60] sm:$0xff]
    %v3626 = vld [vmem:[%s3612 + $0x68] sm:$0xff]
    %v3627 = vld [vmem:[%s3612 + $0x70] sm:$0xff]
    %v3628 = vld [vmem:[%s3612 + $0x78] sm:$0xff]
    %v3629 = vld [vmem:[%s3612 + $0x80] sm:$0xff]
    %v3630 = vld [vmem:[%s3612 + $0x88] sm:$0xff]
    %v3631 = vld [vmem:[%s3612 + $0x90] sm:$0xff]
    %v3632 = vld [vmem:[%s3612 + $0x98] sm:$0xff]
    %v3633 = vld [vmem:[%s3612 + $0xa0] sm:$0xff]
    %v3634 = vld [vmem:[%s3612 + $0xa8] sm:$0xff]
    %v3635 = vld [vmem:[%s3612 + $0xb0] sm:$0xff]
    %v3636 = vld [vmem:[%s3612 + $0xb8] sm:$0xff]
    %v3637 = vld [vmem:[%s3612 + $0xc0] sm:$0xff]
    %v3638 = vld [vmem:[%s3612 + $0xc8] sm:$0xff]
    %v3639 = vld [vmem:[%s3612 + $0xd0] sm:$0xff]
    %v3640 = vld [vmem:[%s3612 + $0xd8] sm:$0xff]
    %v3641 = vld [vmem:[%s3612 + $0xe0] sm:$0xff]
    %v3642 = vld [vmem:[%s3612 + $0xe8] sm:$0xff]
    %v3643 = vld [vmem:[%s3612 + $0xf0] sm:$0xff]
    %v3644 = vld [vmem:[%s3612 + $0xf8] sm:$0xff]
    %v3677 = vunpack.c.l.b16 %v3613
    %v3678 = vunpack.c.h.b16 %v3613
    %v3679 = vunpack.c.l.b16 %v3614
    %v3680 = vunpack.c.h.b16 %v3614
    %v3681 = vunpack.c.l.b16 %v3615
    %v3682 = vunpack.c.h.b16 %v3615
    %v3683 = vunpack.c.l.b16 %v3616
    %v3684 = vunpack.c.h.b16 %v3616
    %v3685 = vunpack.c.l.b16 %v3617
    %v3686 = vunpack.c.h.b16 %v3617
    %v3687 = vunpack.c.l.b16 %v3618
    %v3688 = vunpack.c.h.b16 %v3618
    %v3689 = vunpack.c.l.b16 %v3619
    %v3690 = vunpack.c.h.b16 %v3619
    %v3691 = vunpack.c.l.b16 %v3620
    %v3692 = vunpack.c.h.b16 %v3620
    %v3693 = vunpack.c.l.b16 %v3621
    %v3694 = vunpack.c.h.b16 %v3621
    %v3695 = vunpack.c.l.b16 %v3622
    %v3696 = vunpack.c.h.b16 %v3622
    %v3697 = vunpack.c.l.b16 %v3623
    %v3698 = vunpack.c.h.b16 %v3623
    %v3699 = vunpack.c.l.b16 %v3624
    %v3700 = vunpack.c.h.b16 %v3624
    %v3701 = vunpack.c.l.b16 %v3625
    %v3702 = vunpack.c.h.b16 %v3625
    %v3703 = vunpack.c.l.b16 %v3626
    %v3704 = vunpack.c.h.b16 %v3626
    %v3705 = vunpack.c.l.b16 %v3627
    %v3706 = vunpack.c.h.b16 %v3627
    %v3707 = vunpack.c.l.b16 %v3628
    %v3708 = vunpack.c.h.b16 %v3628
    %v3709 = vunpack.c.l.b16 %v3629
    %v3710 = vunpack.c.h.b16 %v3629
    %v3711 = vunpack.c.l.b16 %v3630
    %v3712 = vunpack.c.h.b16 %v3630
    %v3713 = vunpack.c.l.b16 %v3631
    %v3714 = vunpack.c.h.b16 %v3631
    %v3715 = vunpack.c.l.b16 %v3632
    %v3716 = vunpack.c.h.b16 %v3632
    %v3717 = vunpack.c.l.b16 %v3633
    %v3718 = vunpack.c.h.b16 %v3633
    %v3719 = vunpack.c.l.b16 %v3634
    %v3720 = vunpack.c.h.b16 %v3634
    %v3721 = vunpack.c.l.b16 %v3635
    %v3722 = vunpack.c.h.b16 %v3635
    %v3723 = vunpack.c.l.b16 %v3636
    %v3724 = vunpack.c.h.b16 %v3636
    %v3725 = vunpack.c.l.b16 %v3637
    %v3726 = vunpack.c.h.b16 %v3637
    %v3727 = vunpack.c.l.b16 %v3638
    %v3728 = vunpack.c.h.b16 %v3638
    %v3729 = vunpack.c.l.b16 %v3639
    %v3730 = vunpack.c.h.b16 %v3639
    %v3731 = vunpack.c.l.b16 %v3640
    %v3732 = vunpack.c.h.b16 %v3640
    %v3733 = vunpack.c.l.b16 %v3641
    %v3734 = vunpack.c.h.b16 %v3641
    %v3735 = vunpack.c.l.b16 %v3642
    %v3736 = vunpack.c.h.b16 %v3642
    %v3737 = vunpack.c.l.b16 %v3643
    %v3738 = vunpack.c.h.b16 %v3643
    %v3739 = vunpack.c.l.b16 %v3644
    %v3740 = vunpack.c.h.b16 %v3644
    %v3741 = vpack.c.b16 %v3679, %v3677
    %v3742 = vpack.c.b16 %v3680, %v3678
    %v3743 = vpack.c.b16 %v3683, %v3681
    %v3744 = vpack.c.b16 %v3684, %v3682
    %v3745 = vpack.c.b16 %v3687, %v3685
    %v3746 = vpack.c.b16 %v3688, %v3686
    %v3747 = vpack.c.b16 %v3691, %v3689
    %v3748 = vpack.c.b16 %v3692, %v3690
    %v3749 = vpack.c.b16 %v3695, %v3693
    %v3750 = vpack.c.b16 %v3696, %v3694
    %v3751 = vpack.c.b16 %v3699, %v3697
    %v3752 = vpack.c.b16 %v3700, %v3698
    %v3753 = vpack.c.b16 %v3703, %v3701
    %v3754 = vpack.c.b16 %v3704, %v3702
    %v3755 = vpack.c.b16 %v3707, %v3705
    %v3756 = vpack.c.b16 %v3708, %v3706
    %v3757 = vpack.c.b16 %v3711, %v3709
    %v3758 = vpack.c.b16 %v3712, %v3710
    %v3759 = vpack.c.b16 %v3715, %v3713
    %v3760 = vpack.c.b16 %v3716, %v3714
    %v3761 = vpack.c.b16 %v3719, %v3717
    %v3762 = vpack.c.b16 %v3720, %v3718
    %v3763 = vpack.c.b16 %v3723, %v3721
    %v3764 = vpack.c.b16 %v3724, %v3722
    %v3765 = vpack.c.b16 %v3727, %v3725
    %v3766 = vpack.c.b16 %v3728, %v3726
    %v3767 = vpack.c.b16 %v3731, %v3729
    %v3768 = vpack.c.b16 %v3732, %v3730
    %v3769 = vpack.c.b16 %v3735, %v3733
    %v3770 = vpack.c.b16 %v3736, %v3734
    %v3771 = vpack.c.b16 %v3739, %v3737
    %v3772 = vpack.c.b16 %v3740, %v3738
    %3805 = vmatprep.subr.bf16.mxu0 %v3742
    %3806 = vmatpush1.bf16.msra.mxu0 %v3741
    %3807 = vmatprep.subr.bf16.mxu0 %v3744
    %3808 = vmatpush1.bf16.msra.mxu0 %v3743
    %3809 = vmatprep.subr.bf16.mxu0 %v3746
    %3810 = vmatpush1.bf16.msra.mxu0 %v3745
    %3811 = vmatprep.subr.bf16.mxu0 %v3748
    %3812 = vmatpush1.bf16.msra.mxu0 %v3747
    %3813 = vmatprep.subr.bf16.mxu0 %v3750
    %3814 = vmatpush1.bf16.msra.mxu0 %v3749
    %3815 = vmatprep.subr.bf16.mxu0 %v3752
    %3816 = vmatpush1.bf16.msra.mxu0 %v3751
    %3817 = vmatprep.subr.bf16.mxu0 %v3754
    %3818 = vmatpush1.bf16.msra.mxu0 %v3753
    %3819 = vmatprep.subr.bf16.mxu0 %v3756
    %3820 = vmatpush1.bf16.msra.mxu0 %v3755
    %3821 = vmatprep.subr.bf16.mxu0 %v3758
    %3822 = vmatpush1.bf16.msra.mxu0 %v3757
    %3823 = vmatprep.subr.bf16.mxu0 %v3760
    %3824 = vmatpush1.bf16.msra.mxu0 %v3759
    %3825 = vmatprep.subr.bf16.mxu0 %v3762
    %3826 = vmatpush1.bf16.msra.mxu0 %v3761
    %3827 = vmatprep.subr.bf16.mxu0 %v3764
    %3828 = vmatpush1.bf16.msra.mxu0 %v3763
    %3829 = vmatprep.subr.bf16.mxu0 %v3766
    %3830 = vmatpush1.bf16.msra.mxu0 %v3765
    %3831 = vmatprep.subr.bf16.mxu0 %v3768
    %3832 = vmatpush1.bf16.msra.mxu0 %v3767
    %3833 = vmatprep.subr.bf16.mxu0 %v3770
    %3834 = vmatpush1.bf16.msra.mxu0 %v3769
    %3835 = vmatprep.subr.bf16.mxu0 %v3772
    %3836 = vmatpush1.bf16.msra.mxu0 %v3771
    %3837 = vmatprep.mubr.bf16.mxu0 %v3611
    %3838 = vmatmul.mubr.bf16.gmra.mrb[0].mxu0 %v3610
    %v3839 = vpop.f32.mrb[0].mxu0
    %v3840 = vadd.f32 0.0, %v3839
    %v3841 = vpop.f32.mrb[0].mxu0
    %v3842 = vadd.f32 0.0, %v3841
    %v3843 = vpop.f32.mrb[0].mxu0
    %v3844 = vadd.f32 0.0, %v3843
    %v3845 = vpop.f32.mrb[0].mxu0
    %v3846 = vadd.f32 0.0, %v3845
    %3847 = vdwg.mxu0
    %v3880 = vunpack.c.l.b16 %v3492
    %v3881 = vunpack.c.h.b16 %v3492
    %v3882 = vunpack.c.l.b16 %v3493
    %v3883 = vunpack.c.h.b16 %v3493
    %v3884 = vunpack.c.l.b16 %v3494
    %v3885 = vunpack.c.h.b16 %v3494
    %v3886 = vunpack.c.l.b16 %v3495
    %v3887 = vunpack.c.h.b16 %v3495
    %v3888 = vunpack.c.l.b16 %v3496
    %v3889 = vunpack.c.h.b16 %v3496
    %v3890 = vunpack.c.l.b16 %v3497
    %v3891 = vunpack.c.h.b16 %v3497
    %v3892 = vunpack.c.l.b16 %v3498
    %v3893 = vunpack.c.h.b16 %v3498
    %v3894 = vunpack.c.l.b16 %v3499
    %v3895 = vunpack.c.h.b16 %v3499
    %v3896 = vunpack.c.l.b16 %v3500
    %v3897 = vunpack.c.h.b16 %v3500
    %v3898 = vunpack.c.l.b16 %v3501
    %v3899 = vunpack.c.h.b16 %v3501
    %v3900 = vunpack.c.l.b16 %v3502
    %v3901 = vunpack.c.h.b16 %v3502
    %v3902 = vunpack.c.l.b16 %v3503
    %v3903 = vunpack.c.h.b16 %v3503
    %v3904 = vunpack.c.l.b16 %v3504
    %v3905 = vunpack.c.h.b16 %v3504
    %v3906 = vunpack.c.l.b16 %v3505
    %v3907 = vunpack.c.h.b16 %v3505
    %v3908 = vunpack.c.l.b16 %v3506
    %v3909 = vunpack.c.h.b16 %v3506
    %v3910 = vunpack.c.l.b16 %v3507
    %v3911 = vunpack.c.h.b16 %v3507
    %v3912 = vunpack.c.l.b16 %v3508
    %v3913 = vunpack.c.h.b16 %v3508
    %v3914 = vunpack.c.l.b16 %v3509
    %v3915 = vunpack.c.h.b16 %v3509
    %v3916 = vunpack.c.l.b16 %v3510
    %v3917 = vunpack.c.h.b16 %v3510
    %v3918 = vunpack.c.l.b16 %v3511
    %v3919 = vunpack.c.h.b16 %v3511
    %v3920 = vunpack.c.l.b16 %v3512
    %v3921 = vunpack.c.h.b16 %v3512
    %v3922 = vunpack.c.l.b16 %v3513
    %v3923 = vunpack.c.h.b16 %v3513
    %v3924 = vunpack.c.l.b16 %v3514
    %v3925 = vunpack.c.h.b16 %v3514
    %v3926 = vunpack.c.l.b16 %v3515
    %v3927 = vunpack.c.h.b16 %v3515
    %v3928 = vunpack.c.l.b16 %v3516
    %v3929 = vunpack.c.h.b16 %v3516
    %v3930 = vunpack.c.l.b16 %v3517
    %v3931 = vunpack.c.h.b16 %v3517
    %v3932 = vunpack.c.l.b16 %v3518
    %v3933 = vunpack.c.h.b16 %v3518
    %v3934 = vunpack.c.l.b16 %v3519
    %v3935 = vunpack.c.h.b16 %v3519
    %v3936 = vunpack.c.l.b16 %v3520
    %v3937 = vunpack.c.h.b16 %v3520
    %v3938 = vunpack.c.l.b16 %v3521
    %v3939 = vunpack.c.h.b16 %v3521
    %v3940 = vunpack.c.l.b16 %v3522
    %v3941 = vunpack.c.h.b16 %v3522
    %v3942 = vunpack.c.l.b16 %v3523
    %v3943 = vunpack.c.h.b16 %v3523
    %v3944 = vpack.c.b16 %v3882, %v3880
    %v3945 = vpack.c.b16 %v3883, %v3881
    %v3946 = vpack.c.b16 %v3886, %v3884
    %v3947 = vpack.c.b16 %v3887, %v3885
    %v3948 = vpack.c.b16 %v3890, %v3888
    %v3949 = vpack.c.b16 %v3891, %v3889
    %v3950 = vpack.c.b16 %v3894, %v3892
    %v3951 = vpack.c.b16 %v3895, %v3893
    %v3952 = vpack.c.b16 %v3898, %v3896
    %v3953 = vpack.c.b16 %v3899, %v3897
    %v3954 = vpack.c.b16 %v3902, %v3900
    %v3955 = vpack.c.b16 %v3903, %v3901
    %v3956 = vpack.c.b16 %v3906, %v3904
    %v3957 = vpack.c.b16 %v3907, %v3905
    %v3958 = vpack.c.b16 %v3910, %v3908
    %v3959 = vpack.c.b16 %v3911, %v3909
    %v3960 = vpack.c.b16 %v3914, %v3912
    %v3961 = vpack.c.b16 %v3915, %v3913
    %v3962 = vpack.c.b16 %v3918, %v3916
    %v3963 = vpack.c.b16 %v3919, %v3917
    %v3964 = vpack.c.b16 %v3922, %v3920
    %v3965 = vpack.c.b16 %v3923, %v3921
    %v3966 = vpack.c.b16 %v3926, %v3924
    %v3967 = vpack.c.b16 %v3927, %v3925
    %v3968 = vpack.c.b16 %v3930, %v3928
    %v3969 = vpack.c.b16 %v3931, %v3929
    %v3970 = vpack.c.b16 %v3934, %v3932
    %v3971 = vpack.c.b16 %v3935, %v3933
    %v3972 = vpack.c.b16 %v3938, %v3936
    %v3973 = vpack.c.b16 %v3939, %v3937
    %v3974 = vpack.c.b16 %v3942, %v3940
    %v3975 = vpack.c.b16 %v3943, %v3941
    %4008 = vmatprep.subr.bf16.mxu0 %v3945
    %4009 = vmatpush1.bf16.msra.mxu0 %v3944
    %4010 = vmatprep.subr.bf16.mxu0 %v3947
    %4011 = vmatpush1.bf16.msra.mxu0 %v3946
    %4012 = vmatprep.subr.bf16.mxu0 %v3949
    %4013 = vmatpush1.bf16.msra.mxu0 %v3948
    %4014 = vmatprep.subr.bf16.mxu0 %v3951
    %4015 = vmatpush1.bf16.msra.mxu0 %v3950
    %4016 = vmatprep.subr.bf16.mxu0 %v3953
    %4017 = vmatpush1.bf16.msra.mxu0 %v3952
    %4018 = vmatprep.subr.bf16.mxu0 %v3955
    %4019 = vmatpush1.bf16.msra.mxu0 %v3954
    %4020 = vmatprep.subr.bf16.mxu0 %v3957
    %4021 = vmatpush1.bf16.msra.mxu0 %v3956
    %4022 = vmatprep.subr.bf16.mxu0 %v3959
    %4023 = vmatpush1.bf16.msra.mxu0 %v3958
    %4024 = vmatprep.subr.bf16.mxu0 %v3961
    %4025 = vmatpush1.bf16.msra.mxu0 %v3960
    %4026 = vmatprep.subr.bf16.mxu0 %v3963
    %4027 = vmatpush1.bf16.msra.mxu0 %v3962
    %4028 = vmatprep.subr.bf16.mxu0 %v3965
    %4029 = vmatpush1.bf16.msra.mxu0 %v3964
    %4030 = vmatprep.subr.bf16.mxu0 %v3967
    %4031 = vmatpush1.bf16.msra.mxu0 %v3966
    %4032 = vmatprep.subr.bf16.mxu0 %v3969
    %4033 = vmatpush1.bf16.msra.mxu0 %v3968
    %4034 = vmatprep.subr.bf16.mxu0 %v3971
    %4035 = vmatpush1.bf16.msra.mxu0 %v3970
    %4036 = vmatprep.subr.bf16.mxu0 %v3973
    %4037 = vmatpush1.bf16.msra.mxu0 %v3972
    %4038 = vmatprep.subr.bf16.mxu0 %v3975
    %4039 = vmatpush1.bf16.msra.mxu0 %v3974
    %4040 = vmatprep.mubr.bf16.mxu0 %v3491
    %4041 = vmatmul.mubr.bf16.gmra.mrb[0].mxu0 %v3490
    %v4042 = vpop.f32.mrb[0].mxu0
    %v4043 = vadd.f32 %v3840, %v4042
    %v4044 = vpop.f32.mrb[0].mxu0
    %v4045 = vadd.f32 %v3842, %v4044
    %v4046 = vpop.f32.mrb[0].mxu0
    %v4047 = vadd.f32 %v3844, %v4046
    %v4048 = vpop.f32.mrb[0].mxu0
    %v4049 = vadd.f32 %v3846, %v4048
    %4050 = vdwg.mxu0
    %s4051 = scalar_lea.vmem %s15, 256
    %v4052 = vld [vmem:[%s4051] sm:$0xff]
    %v4053 = vld [vmem:[%s4051 + $0x8] sm:$0xff]
    %v4054 = vld [vmem:[%s4051 + $0x10] sm:$0xff]
    %v4055 = vld [vmem:[%s4051 + $0x18] sm:$0xff]
    %v4056 = vld [vmem:[%s4051 + $0x20] sm:$0xff]
    %v4057 = vld [vmem:[%s4051 + $0x28] sm:$0xff]
    %v4058 = vld [vmem:[%s4051 + $0x30] sm:$0xff]
    %v4059 = vld [vmem:[%s4051 + $0x38] sm:$0xff]
    %v4060 = vld [vmem:[%s4051 + $0x40] sm:$0xff]
    %v4061 = vld [vmem:[%s4051 + $0x48] sm:$0xff]
    %v4062 = vld [vmem:[%s4051 + $0x50] sm:$0xff]
    %v4063 = vld [vmem:[%s4051 + $0x58] sm:$0xff]
    %v4064 = vld [vmem:[%s4051 + $0x60] sm:$0xff]
    %v4065 = vld [vmem:[%s4051 + $0x68] sm:$0xff]
    %v4066 = vld [vmem:[%s4051 + $0x70] sm:$0xff]
    %v4067 = vld [vmem:[%s4051 + $0x78] sm:$0xff]
    %v4068 = vld [vmem:[%s4051 + $0x80] sm:$0xff]
    %v4069 = vld [vmem:[%s4051 + $0x88] sm:$0xff]
    %v4070 = vld [vmem:[%s4051 + $0x90] sm:$0xff]
    %v4071 = vld [vmem:[%s4051 + $0x98] sm:$0xff]
    %v4072 = vld [vmem:[%s4051 + $0xa0] sm:$0xff]
    %v4073 = vld [vmem:[%s4051 + $0xa8] sm:$0xff]
    %v4074 = vld [vmem:[%s4051 + $0xb0] sm:$0xff]
    %v4075 = vld [vmem:[%s4051 + $0xb8] sm:$0xff]
    %v4076 = vld [vmem:[%s4051 + $0xc0] sm:$0xff]
    %v4077 = vld [vmem:[%s4051 + $0xc8] sm:$0xff]
    %v4078 = vld [vmem:[%s4051 + $0xd0] sm:$0xff]
    %v4079 = vld [vmem:[%s4051 + $0xd8] sm:$0xff]
    %v4080 = vld [vmem:[%s4051 + $0xe0] sm:$0xff]
    %v4081 = vld [vmem:[%s4051 + $0xe8] sm:$0xff]
    %v4082 = vld [vmem:[%s4051 + $0xf0] sm:$0xff]
    %v4083 = vld [vmem:[%s4051 + $0xf8] sm:$0xff]
    %v4116 = vunpack.c.l.b16 %v4052
    %v4117 = vunpack.c.h.b16 %v4052
    %v4118 = vunpack.c.l.b16 %v4053
    %v4119 = vunpack.c.h.b16 %v4053
    %v4120 = vunpack.c.l.b16 %v4054
    %v4121 = vunpack.c.h.b16 %v4054
    %v4122 = vunpack.c.l.b16 %v4055
    %v4123 = vunpack.c.h.b16 %v4055
    %v4124 = vunpack.c.l.b16 %v4056
    %v4125 = vunpack.c.h.b16 %v4056
    %v4126 = vunpack.c.l.b16 %v4057
    %v4127 = vunpack.c.h.b16 %v4057
    %v4128 = vunpack.c.l.b16 %v4058
    %v4129 = vunpack.c.h.b16 %v4058
    %v4130 = vunpack.c.l.b16 %v4059
    %v4131 = vunpack.c.h.b16 %v4059
    %v4132 = vunpack.c.l.b16 %v4060
    %v4133 = vunpack.c.h.b16 %v4060
    %v4134 = vunpack.c.l.b16 %v4061
    %v4135 = vunpack.c.h.b16 %v4061
    %v4136 = vunpack.c.l.b16 %v4062
    %v4137 = vunpack.c.h.b16 %v4062
    %v4138 = vunpack.c.l.b16 %v4063
    %v4139 = vunpack.c.h.b16 %v4063
    %v4140 = vunpack.c.l.b16 %v4064
    %v4141 = vunpack.c.h.b16 %v4064
    %v4142 = vunpack.c.l.b16 %v4065
    %v4143 = vunpack.c.h.b16 %v4065
    %v4144 = vunpack.c.l.b16 %v4066
    %v4145 = vunpack.c.h.b16 %v4066
    %v4146 = vunpack.c.l.b16 %v4067
    %v4147 = vunpack.c.h.b16 %v4067
    %v4148 = vunpack.c.l.b16 %v4068
    %v4149 = vunpack.c.h.b16 %v4068
    %v4150 = vunpack.c.l.b16 %v4069
    %v4151 = vunpack.c.h.b16 %v4069
    %v4152 = vunpack.c.l.b16 %v4070
    %v4153 = vunpack.c.h.b16 %v4070
    %v4154 = vunpack.c.l.b16 %v4071
    %v4155 = vunpack.c.h.b16 %v4071
    %v4156 = vunpack.c.l.b16 %v4072
    %v4157 = vunpack.c.h.b16 %v4072
    %v4158 = vunpack.c.l.b16 %v4073
    %v4159 = vunpack.c.h.b16 %v4073
    %v4160 = vunpack.c.l.b16 %v4074
    %v4161 = vunpack.c.h.b16 %v4074
    %v4162 = vunpack.c.l.b16 %v4075
    %v4163 = vunpack.c.h.b16 %v4075
    %v4164 = vunpack.c.l.b16 %v4076
    %v4165 = vunpack.c.h.b16 %v4076
    %v4166 = vunpack.c.l.b16 %v4077
    %v4167 = vunpack.c.h.b16 %v4077
    %v4168 = vunpack.c.l.b16 %v4078
    %v4169 = vunpack.c.h.b16 %v4078
    %v4170 = vunpack.c.l.b16 %v4079
    %v4171 = vunpack.c.h.b16 %v4079
    %v4172 = vunpack.c.l.b16 %v4080
    %v4173 = vunpack.c.h.b16 %v4080
    %v4174 = vunpack.c.l.b16 %v4081
    %v4175 = vunpack.c.h.b16 %v4081
    %v4176 = vunpack.c.l.b16 %v4082
    %v4177 = vunpack.c.h.b16 %v4082
    %v4178 = vunpack.c.l.b16 %v4083
    %v4179 = vunpack.c.h.b16 %v4083
    %v4180 = vpack.c.b16 %v4118, %v4116
    %v4181 = vpack.c.b16 %v4119, %v4117
    %v4182 = vpack.c.b16 %v4122, %v4120
    %v4183 = vpack.c.b16 %v4123, %v4121
    %v4184 = vpack.c.b16 %v4126, %v4124
    %v4185 = vpack.c.b16 %v4127, %v4125
    %v4186 = vpack.c.b16 %v4130, %v4128
    %v4187 = vpack.c.b16 %v4131, %v4129
    %v4188 = vpack.c.b16 %v4134, %v4132
    %v4189 = vpack.c.b16 %v4135, %v4133
    %v4190 = vpack.c.b16 %v4138, %v4136
    %v4191 = vpack.c.b16 %v4139, %v4137
    %v4192 = vpack.c.b16 %v4142, %v4140
    %v4193 = vpack.c.b16 %v4143, %v4141
    %v4194 = vpack.c.b16 %v4146, %v4144
    %v4195 = vpack.c.b16 %v4147, %v4145
    %v4196 = vpack.c.b16 %v4150, %v4148
    %v4197 = vpack.c.b16 %v4151, %v4149
    %v4198 = vpack.c.b16 %v4154, %v4152
    %v4199 = vpack.c.b16 %v4155, %v4153
    %v4200 = vpack.c.b16 %v4158, %v4156
    %v4201 = vpack.c.b16 %v4159, %v4157
    %v4202 = vpack.c.b16 %v4162, %v4160
    %v4203 = vpack.c.b16 %v4163, %v4161
    %v4204 = vpack.c.b16 %v4166, %v4164
    %v4205 = vpack.c.b16 %v4167, %v4165
    %v4206 = vpack.c.b16 %v4170, %v4168
    %v4207 = vpack.c.b16 %v4171, %v4169
    %v4208 = vpack.c.b16 %v4174, %v4172
    %v4209 = vpack.c.b16 %v4175, %v4173
    %v4210 = vpack.c.b16 %v4178, %v4176
    %v4211 = vpack.c.b16 %v4179, %v4177
    %4244 = vmatprep.subr.bf16.mxu0 %v4181
    %4245 = vmatpush1.bf16.msra.mxu0 %v4180
    %4246 = vmatprep.subr.bf16.mxu0 %v4183
    %4247 = vmatpush1.bf16.msra.mxu0 %v4182
    %4248 = vmatprep.subr.bf16.mxu0 %v4185
    %4249 = vmatpush1.bf16.msra.mxu0 %v4184
    %4250 = vmatprep.subr.bf16.mxu0 %v4187
    %4251 = vmatpush1.bf16.msra.mxu0 %v4186
    %4252 = vmatprep.subr.bf16.mxu0 %v4189
    %4253 = vmatpush1.bf16.msra.mxu0 %v4188
    %4254 = vmatprep.subr.bf16.mxu0 %v4191
    %4255 = vmatpush1.bf16.msra.mxu0 %v4190
    %4256 = vmatprep.subr.bf16.mxu0 %v4193
    %4257 = vmatpush1.bf16.msra.mxu0 %v4192
    %4258 = vmatprep.subr.bf16.mxu0 %v4195
    %4259 = vmatpush1.bf16.msra.mxu0 %v4194
    %4260 = vmatprep.subr.bf16.mxu0 %v4197
    %4261 = vmatpush1.bf16.msra.mxu0 %v4196
    %4262 = vmatprep.subr.bf16.mxu0 %v4199
    %4263 = vmatpush1.bf16.msra.mxu0 %v4198
    %4264 = vmatprep.subr.bf16.mxu0 %v4201
    %4265 = vmatpush1.bf16.msra.mxu0 %v4200
    %4266 = vmatprep.subr.bf16.mxu0 %v4203
    %4267 = vmatpush1.bf16.msra.mxu0 %v4202
    %4268 = vmatprep.subr.bf16.mxu0 %v4205
    %4269 = vmatpush1.bf16.msra.mxu0 %v4204
    %4270 = vmatprep.subr.bf16.mxu0 %v4207
    %4271 = vmatpush1.bf16.msra.mxu0 %v4206
    %4272 = vmatprep.subr.bf16.mxu0 %v4209
    %4273 = vmatpush1.bf16.msra.mxu0 %v4208
    %4274 = vmatprep.subr.bf16.mxu0 %v4211
    %4275 = vmatpush1.bf16.msra.mxu0 %v4210
    %4276 = vmatprep.mubr.bf16.mxu0 %v3611
    %4277 = vmatmul.mubr.bf16.gmra.mrb[0].mxu0 %v3610
    %v4278 = vpop.f32.mrb[0].mxu0
    %v4279 = vadd.f32 0.0, %v4278
    %v4280 = vpop.f32.mrb[0].mxu0
    %v4281 = vadd.f32 0.0, %v4280
    %v4282 = vpop.f32.mrb[0].mxu0
    %v4283 = vadd.f32 0.0, %v4282
    %v4284 = vpop.f32.mrb[0].mxu0
    %v4285 = vadd.f32 0.0, %v4284
    %4286 = vdwg.mxu0
    %v4319 = vunpack.c.l.b16 %v3524
    %v4320 = vunpack.c.h.b16 %v3524
    %v4321 = vunpack.c.l.b16 %v3525
    %v4322 = vunpack.c.h.b16 %v3525
    %v4323 = vunpack.c.l.b16 %v3526
    %v4324 = vunpack.c.h.b16 %v3526
    %v4325 = vunpack.c.l.b16 %v3527
    %v4326 = vunpack.c.h.b16 %v3527
    %v4327 = vunpack.c.l.b16 %v3528
    %v4328 = vunpack.c.h.b16 %v3528
    %v4329 = vunpack.c.l.b16 %v3529
    %v4330 = vunpack.c.h.b16 %v3529
    %v4331 = vunpack.c.l.b16 %v3530
    %v4332 = vunpack.c.h.b16 %v3530
    %v4333 = vunpack.c.l.b16 %v3531
    %v4334 = vunpack.c.h.b16 %v3531
    %v4335 = vunpack.c.l.b16 %v3532
    %v4336 = vunpack.c.h.b16 %v3532
    %v4337 = vunpack.c.l.b16 %v3533
    %v4338 = vunpack.c.h.b16 %v3533
    %v4339 = vunpack.c.l.b16 %v3534
    %v4340 = vunpack.c.h.b16 %v3534
    %v4341 = vunpack.c.l.b16 %v3535
    %v4342 = vunpack.c.h.b16 %v3535
    %v4343 = vunpack.c.l.b16 %v3536
    %v4344 = vunpack.c.h.b16 %v3536
    %v4345 = vunpack.c.l.b16 %v3537
    %v4346 = vunpack.c.h.b16 %v3537
    %v4347 = vunpack.c.l.b16 %v3538
    %v4348 = vunpack.c.h.b16 %v3538
    %v4349 = vunpack.c.l.b16 %v3539
    %v4350 = vunpack.c.h.b16 %v3539
    %v4351 = vunpack.c.l.b16 %v3540
    %v4352 = vunpack.c.h.b16 %v3540
    %v4353 = vunpack.c.l.b16 %v3541
    %v4354 = vunpack.c.h.b16 %v3541
    %v4355 = vunpack.c.l.b16 %v3542
    %v4356 = vunpack.c.h.b16 %v3542
    %v4357 = vunpack.c.l.b16 %v3543
    %v4358 = vunpack.c.h.b16 %v3543
    %v4359 = vunpack.c.l.b16 %v3544
    %v4360 = vunpack.c.h.b16 %v3544
    %v4361 = vunpack.c.l.b16 %v3545
    %v4362 = vunpack.c.h.b16 %v3545
    %v4363 = vunpack.c.l.b16 %v3546
    %v4364 = vunpack.c.h.b16 %v3546
    %v4365 = vunpack.c.l.b16 %v3547
    %v4366 = vunpack.c.h.b16 %v3547
    %v4367 = vunpack.c.l.b16 %v3548
    %v4368 = vunpack.c.h.b16 %v3548
    %v4369 = vunpack.c.l.b16 %v3549
    %v4370 = vunpack.c.h.b16 %v3549
    %v4371 = vunpack.c.l.b16 %v3550
    %v4372 = vunpack.c.h.b16 %v3550
    %v4373 = vunpack.c.l.b16 %v3551
    %v4374 = vunpack.c.h.b16 %v3551
    %v4375 = vunpack.c.l.b16 %v3552
    %v4376 = vunpack.c.h.b16 %v3552
    %v4377 = vunpack.c.l.b16 %v3553
    %v4378 = vunpack.c.h.b16 %v3553
    %v4379 = vunpack.c.l.b16 %v3554
    %v4380 = vunpack.c.h.b16 %v3554
    %v4381 = vunpack.c.l.b16 %v3555
    %v4382 = vunpack.c.h.b16 %v3555
    %v4383 = vpack.c.b16 %v4321, %v4319
    %v4384 = vpack.c.b16 %v4322, %v4320
    %v4385 = vpack.c.b16 %v4325, %v4323
    %v4386 = vpack.c.b16 %v4326, %v4324
    %v4387 = vpack.c.b16 %v4329, %v4327
    %v4388 = vpack.c.b16 %v4330, %v4328
    %v4389 = vpack.c.b16 %v4333, %v4331
    %v4390 = vpack.c.b16 %v4334, %v4332
    %v4391 = vpack.c.b16 %v4337, %v4335
    %v4392 = vpack.c.b16 %v4338, %v4336
    %v4393 = vpack.c.b16 %v4341, %v4339
    %v4394 = vpack.c.b16 %v4342, %v4340
    %v4395 = vpack.c.b16 %v4345, %v4343
    %v4396 = vpack.c.b16 %v4346, %v4344
    %v4397 = vpack.c.b16 %v4349, %v4347
    %v4398 = vpack.c.b16 %v4350, %v4348
    %v4399 = vpack.c.b16 %v4353, %v4351
    %v4400 = vpack.c.b16 %v4354, %v4352
    %v4401 = vpack.c.b16 %v4357, %v4355
    %v4402 = vpack.c.b16 %v4358, %v4356
    %v4403 = vpack.c.b16 %v4361, %v4359
    %v4404 = vpack.c.b16 %v4362, %v4360
    %v4405 = vpack.c.b16 %v4365, %v4363
    %v4406 = vpack.c.b16 %v4366, %v4364
    %v4407 = vpack.c.b16 %v4369, %v4367
    %v4408 = vpack.c.b16 %v4370, %v4368
    %v4409 = vpack.c.b16 %v4373, %v4371
    %v4410 = vpack.c.b16 %v4374, %v4372
    %v4411 = vpack.c.b16 %v4377, %v4375
    %v4412 = vpack.c.b16 %v4378, %v4376
    %v4413 = vpack.c.b16 %v4381, %v4379
    %v4414 = vpack.c.b16 %v4382, %v4380
    %4447 = vmatprep.subr.bf16.mxu0 %v4384
    %4448 = vmatpush1.bf16.msra.mxu0 %v4383
    %4449 = vmatprep.subr.bf16.mxu0 %v4386
    %4450 = vmatpush1.bf16.msra.mxu0 %v4385
    %4451 = vmatprep.subr.bf16.mxu0 %v4388
    %4452 = vmatpush1.bf16.msra.mxu0 %v4387
    %4453 = vmatprep.subr.bf16.mxu0 %v4390
    %4454 = vmatpush1.bf16.msra.mxu0 %v4389
    %4455 = vmatprep.subr.bf16.mxu0 %v4392
    %4456 = vmatpush1.bf16.msra.mxu0 %v4391
    %4457 = vmatprep.subr.bf16.mxu0 %v4394
    %4458 = vmatpush1.bf16.msra.mxu0 %v4393
    %4459 = vmatprep.subr.bf16.mxu0 %v4396
    %4460 = vmatpush1.bf16.msra.mxu0 %v4395
    %4461 = vmatprep.subr.bf16.mxu0 %v4398
    %4462 = vmatpush1.bf16.msra.mxu0 %v4397
    %4463 = vmatprep.subr.bf16.mxu0 %v4400
    %4464 = vmatpush1.bf16.msra.mxu0 %v4399
    %4465 = vmatprep.subr.bf16.mxu0 %v4402
    %4466 = vmatpush1.bf16.msra.mxu0 %v4401
    %4467 = vmatprep.subr.bf16.mxu0 %v4404
    %4468 = vmatpush1.bf16.msra.mxu0 %v4403
    %4469 = vmatprep.subr.bf16.mxu0 %v4406
    %4470 = vmatpush1.bf16.msra.mxu0 %v4405
    %4471 = vmatprep.subr.bf16.mxu0 %v4408
    %4472 = vmatpush1.bf16.msra.mxu0 %v4407
    %4473 = vmatprep.subr.bf16.mxu0 %v4410
    %4474 = vmatpush1.bf16.msra.mxu0 %v4409
    %4475 = vmatprep.subr.bf16.mxu0 %v4412
    %4476 = vmatpush1.bf16.msra.mxu0 %v4411
    %4477 = vmatprep.subr.bf16.mxu0 %v4414
    %4478 = vmatpush1.bf16.msra.mxu0 %v4413
    %4479 = vmatprep.mubr.bf16.mxu0 %v3491
    %4480 = vmatmul.mubr.bf16.gmra.mrb[0].mxu0 %v3490
    %v4481 = vpop.f32.mrb[0].mxu0
    %v4482 = vadd.f32 %v4279, %v4481
    %v4483 = vpop.f32.mrb[0].mxu0
    %v4484 = vadd.f32 %v4281, %v4483
    %v4485 = vpop.f32.mrb[0].mxu0
    %v4486 = vadd.f32 %v4283, %v4485
    %v4487 = vpop.f32.mrb[0].mxu0
    %v4488 = vadd.f32 %v4285, %v4487
    %4489 = vdwg.mxu0
    %s4490 = scalar_lea.vmem %s12, 16
    %v4491 = vld [vmem:[%s4490] sm:$0xf]
    %v4492 = vld [vmem:[%s4490 + $0x4] sm:$0xf]
    %v4495 = vunpack.c.l.b16 %v4491
    %v4496 = vunpack.c.l.b16 %v4492
    %v4497 = vpack.c.b16 %v4496, %v4495
    %v4499 = vsel %vm3443, %v4497, 0
    %4501 = vmatprep.subr.bf16.mxu0 %v1656
    %4502 = vmatpush1.bf16.msra.mxu0 %v1655
    %4503 = vmatprep.subr.bf16.mxu0 0
    %4504 = vmatpush1.bf16.msra.mxu0 0
    %4505 = vmatprep.subr.bf16.mxu0 0
    %4506 = vmatpush1.bf16.msra.mxu0 0
    %4507 = vmatprep.subr.bf16.mxu0 0
    %4508 = vmatpush1.bf16.msra.mxu0 0
    %4509 = vmatprep.subr.bf16.mxu0 0
    %4510 = vmatpush1.bf16.msra.mxu0 0
    %4511 = vmatprep.subr.bf16.mxu0 0
    %4512 = vmatpush1.bf16.msra.mxu0 0
    %4513 = vmatprep.subr.bf16.mxu0 0
    %4514 = vmatpush1.bf16.msra.mxu0 0
    %4515 = vmatprep.subr.bf16.mxu0 0
    %4516 = vmatpush1.bf16.msra.mxu0 0
    %4517 = vmatprep.subr.bf16.mxu0 0
    %4518 = vmatpush1.bf16.msra.mxu0 0
    %4519 = vmatprep.subr.bf16.mxu0 0
    %4520 = vmatpush1.bf16.msra.mxu0 0
    %4521 = vmatprep.subr.bf16.mxu0 0
    %4522 = vmatpush1.bf16.msra.mxu0 0
    %4523 = vmatprep.subr.bf16.mxu0 0
    %4524 = vmatpush1.bf16.msra.mxu0 0
    %4525 = vmatprep.subr.bf16.mxu0 0
    %4526 = vmatpush1.bf16.msra.mxu0 0
    %4527 = vmatprep.subr.bf16.mxu0 0
    %4528 = vmatpush1.bf16.msra.mxu0 0
    %4529 = vmatprep.subr.bf16.mxu0 0
    %4530 = vmatpush1.bf16.msra.mxu0 0
    %4531 = vmatprep.subr.bf16.mxu0 0
    %4532 = vmatpush1.bf16.msra.mxu0 0
    %4533 = vmatprep.mubr.bf16.mxu0 0
    %4534 = vmatmul.mubr.bf16.gmra.mrb[0].mxu0 %v4499
    %v4535 = vpop.f32.mrb[0].mxu0
    %v4536 = vadd.f32 0.0, %v4535
    %v4537 = vpop.f32.mrb[0].mxu0
    %v4538 = vadd.f32 0.0, %v4537
    %v4539 = vpop.f32.mrb[0].mxu0
    %v4540 = vadd.f32 0.0, %v4539
    %v4541 = vpop.f32.mrb[0].mxu0
    %v4542 = vadd.f32 0.0, %v4541
    %4543 = vdwg.mxu0
    %v4544 = vpack.c.bf16 %v4540, %v4536
    %v4545 = vpack.c.bf16 %v4542, %v4538
    %s4546 = scalar_lea.vmem %s13, 512
    %v4547 = vld [vmem:[%s4546] sm:$0xff]
    %v4548 = vld [vmem:[%s4546 + $0x8] sm:$0xff]
    %v4549 = vld [vmem:[%s4546 + $0x10] sm:$0xff]
    %v4550 = vld [vmem:[%s4546 + $0x18] sm:$0xff]
    %v4551 = vld [vmem:[%s4546 + $0x20] sm:$0xff]
    %v4552 = vld [vmem:[%s4546 + $0x28] sm:$0xff]
    %v4553 = vld [vmem:[%s4546 + $0x30] sm:$0xff]
    %v4554 = vld [vmem:[%s4546 + $0x38] sm:$0xff]
    %v4555 = vld [vmem:[%s4546 + $0x40] sm:$0xff]
    %v4556 = vld [vmem:[%s4546 + $0x48] sm:$0xff]
    %v4557 = vld [vmem:[%s4546 + $0x50] sm:$0xff]
    %v4558 = vld [vmem:[%s4546 + $0x58] sm:$0xff]
    %v4559 = vld [vmem:[%s4546 + $0x60] sm:$0xff]
    %v4560 = vld [vmem:[%s4546 + $0x68] sm:$0xff]
    %v4561 = vld [vmem:[%s4546 + $0x70] sm:$0xff]
    %v4562 = vld [vmem:[%s4546 + $0x78] sm:$0xff]
    %v4563 = vld [vmem:[%s4546 + $0x80] sm:$0xff]
    %v4564 = vld [vmem:[%s4546 + $0x88] sm:$0xff]
    %v4565 = vld [vmem:[%s4546 + $0x90] sm:$0xff]
    %v4566 = vld [vmem:[%s4546 + $0x98] sm:$0xff]
    %v4567 = vld [vmem:[%s4546 + $0xa0] sm:$0xff]
    %v4568 = vld [vmem:[%s4546 + $0xa8] sm:$0xff]
    %v4569 = vld [vmem:[%s4546 + $0xb0] sm:$0xff]
    %v4570 = vld [vmem:[%s4546 + $0xb8] sm:$0xff]
    %v4571 = vld [vmem:[%s4546 + $0xc0] sm:$0xff]
    %v4572 = vld [vmem:[%s4546 + $0xc8] sm:$0xff]
    %v4573 = vld [vmem:[%s4546 + $0xd0] sm:$0xff]
    %v4574 = vld [vmem:[%s4546 + $0xd8] sm:$0xff]
    %v4575 = vld [vmem:[%s4546 + $0xe0] sm:$0xff]
    %v4576 = vld [vmem:[%s4546 + $0xe8] sm:$0xff]
    %v4577 = vld [vmem:[%s4546 + $0xf0] sm:$0xff]
    %v4578 = vld [vmem:[%s4546 + $0xf8] sm:$0xff]
    %v4611 = vunpack.c.l.b16 %v4547
    %v4612 = vunpack.c.h.b16 %v4547
    %v4613 = vunpack.c.l.b16 %v4548
    %v4614 = vunpack.c.h.b16 %v4548
    %v4615 = vunpack.c.l.b16 %v4549
    %v4616 = vunpack.c.h.b16 %v4549
    %v4617 = vunpack.c.l.b16 %v4550
    %v4618 = vunpack.c.h.b16 %v4550
    %v4619 = vunpack.c.l.b16 %v4551
    %v4620 = vunpack.c.h.b16 %v4551
    %v4621 = vunpack.c.l.b16 %v4552
    %v4622 = vunpack.c.h.b16 %v4552
    %v4623 = vunpack.c.l.b16 %v4553
    %v4624 = vunpack.c.h.b16 %v4553
    %v4625 = vunpack.c.l.b16 %v4554
    %v4626 = vunpack.c.h.b16 %v4554
    %v4627 = vunpack.c.l.b16 %v4555
    %v4628 = vunpack.c.h.b16 %v4555
    %v4629 = vunpack.c.l.b16 %v4556
    %v4630 = vunpack.c.h.b16 %v4556
    %v4631 = vunpack.c.l.b16 %v4557
    %v4632 = vunpack.c.h.b16 %v4557
    %v4633 = vunpack.c.l.b16 %v4558
    %v4634 = vunpack.c.h.b16 %v4558
    %v4635 = vunpack.c.l.b16 %v4559
    %v4636 = vunpack.c.h.b16 %v4559
    %v4637 = vunpack.c.l.b16 %v4560
    %v4638 = vunpack.c.h.b16 %v4560
    %v4639 = vunpack.c.l.b16 %v4561
    %v4640 = vunpack.c.h.b16 %v4561
    %v4641 = vunpack.c.l.b16 %v4562
    %v4642 = vunpack.c.h.b16 %v4562
    %v4643 = vunpack.c.l.b16 %v4563
    %v4644 = vunpack.c.h.b16 %v4563
    %v4645 = vunpack.c.l.b16 %v4564
    %v4646 = vunpack.c.h.b16 %v4564
    %v4647 = vunpack.c.l.b16 %v4565
    %v4648 = vunpack.c.h.b16 %v4565
    %v4649 = vunpack.c.l.b16 %v4566
    %v4650 = vunpack.c.h.b16 %v4566
    %v4651 = vunpack.c.l.b16 %v4567
    %v4652 = vunpack.c.h.b16 %v4567
    %v4653 = vunpack.c.l.b16 %v4568
    %v4654 = vunpack.c.h.b16 %v4568
    %v4655 = vunpack.c.l.b16 %v4569
    %v4656 = vunpack.c.h.b16 %v4569
    %v4657 = vunpack.c.l.b16 %v4570
    %v4658 = vunpack.c.h.b16 %v4570
    %v4659 = vunpack.c.l.b16 %v4571
    %v4660 = vunpack.c.h.b16 %v4571
    %v4661 = vunpack.c.l.b16 %v4572
    %v4662 = vunpack.c.h.b16 %v4572
    %v4663 = vunpack.c.l.b16 %v4573
    %v4664 = vunpack.c.h.b16 %v4573
    %v4665 = vunpack.c.l.b16 %v4574
    %v4666 = vunpack.c.h.b16 %v4574
    %v4667 = vunpack.c.l.b16 %v4575
    %v4668 = vunpack.c.h.b16 %v4575
    %v4669 = vunpack.c.l.b16 %v4576
    %v4670 = vunpack.c.h.b16 %v4576
    %v4671 = vunpack.c.l.b16 %v4577
    %v4672 = vunpack.c.h.b16 %v4577
    %v4673 = vunpack.c.l.b16 %v4578
    %v4674 = vunpack.c.h.b16 %v4578
    %v4675 = vpack.c.b16 %v4613, %v4611
    %v4676 = vpack.c.b16 %v4614, %v4612
    %v4677 = vpack.c.b16 %v4617, %v4615
    %v4678 = vpack.c.b16 %v4618, %v4616
    %v4679 = vpack.c.b16 %v4621, %v4619
    %v4680 = vpack.c.b16 %v4622, %v4620
    %v4681 = vpack.c.b16 %v4625, %v4623
    %v4682 = vpack.c.b16 %v4626, %v4624
    %v4683 = vpack.c.b16 %v4629, %v4627
    %v4684 = vpack.c.b16 %v4630, %v4628
    %v4685 = vpack.c.b16 %v4633, %v4631
    %v4686 = vpack.c.b16 %v4634, %v4632
    %v4687 = vpack.c.b16 %v4637, %v4635
    %v4688 = vpack.c.b16 %v4638, %v4636
    %v4689 = vpack.c.b16 %v4641, %v4639
    %v4690 = vpack.c.b16 %v4642, %v4640
    %v4691 = vpack.c.b16 %v4645, %v4643
    %v4692 = vpack.c.b16 %v4646, %v4644
    %v4693 = vpack.c.b16 %v4649, %v4647
    %v4694 = vpack.c.b16 %v4650, %v4648
    %v4695 = vpack.c.b16 %v4653, %v4651
    %v4696 = vpack.c.b16 %v4654, %v4652
    %v4697 = vpack.c.b16 %v4657, %v4655
    %v4698 = vpack.c.b16 %v4658, %v4656
    %v4699 = vpack.c.b16 %v4661, %v4659
    %v4700 = vpack.c.b16 %v4662, %v4660
    %v4701 = vpack.c.b16 %v4665, %v4663
    %v4702 = vpack.c.b16 %v4666, %v4664
    %v4703 = vpack.c.b16 %v4669, %v4667
    %v4704 = vpack.c.b16 %v4670, %v4668
    %v4705 = vpack.c.b16 %v4673, %v4671
    %v4706 = vpack.c.b16 %v4674, %v4672
    %4739 = vmatprep.subr.bf16.mxu0 %v4676
    %4740 = vmatpush1.bf16.msra.mxu0 %v4675
    %4741 = vmatprep.subr.bf16.mxu0 %v4678
    %4742 = vmatpush1.bf16.msra.mxu0 %v4677
    %4743 = vmatprep.subr.bf16.mxu0 %v4680
    %4744 = vmatpush1.bf16.msra.mxu0 %v4679
    %4745 = vmatprep.subr.bf16.mxu0 %v4682
    %4746 = vmatpush1.bf16.msra.mxu0 %v4681
    %4747 = vmatprep.subr.bf16.mxu0 %v4684
    %4748 = vmatpush1.bf16.msra.mxu0 %v4683
    %4749 = vmatprep.subr.bf16.mxu0 %v4686
    %4750 = vmatpush1.bf16.msra.mxu0 %v4685
    %4751 = vmatprep.subr.bf16.mxu0 %v4688
    %4752 = vmatpush1.bf16.msra.mxu0 %v4687
    %4753 = vmatprep.subr.bf16.mxu0 %v4690
    %4754 = vmatpush1.bf16.msra.mxu0 %v4689
    %4755 = vmatprep.subr.bf16.mxu0 %v4692
    %4756 = vmatpush1.bf16.msra.mxu0 %v4691
    %4757 = vmatprep.subr.bf16.mxu0 %v4694
    %4758 = vmatpush1.bf16.msra.mxu0 %v4693
    %4759 = vmatprep.subr.bf16.mxu0 %v4696
    %4760 = vmatpush1.bf16.msra.mxu0 %v4695
    %4761 = vmatprep.subr.bf16.mxu0 %v4698
    %4762 = vmatpush1.bf16.msra.mxu0 %v4697
    %4763 = vmatprep.subr.bf16.mxu0 %v4700
    %4764 = vmatpush1.bf16.msra.mxu0 %v4699
    %4765 = vmatprep.subr.bf16.mxu0 %v4702
    %4766 = vmatpush1.bf16.msra.mxu0 %v4701
    %4767 = vmatprep.subr.bf16.mxu0 %v4704
    %4768 = vmatpush1.bf16.msra.mxu0 %v4703
    %4769 = vmatprep.subr.bf16.mxu0 %v4706
    %4770 = vmatpush1.bf16.msra.mxu0 %v4705
    %4771 = vmatprep.mubr.bf16.mxu0 %v4545
    %4772 = vmatmul.mubr.bf16.gmra.mrb[0].mxu0 %v4544
    %v4773 = vpop.f32.mrb[0].mxu0
    %v4774 = vadd.f32 0.0, %v4773
    %v4775 = vpop.f32.mrb[0].mxu0
    %v4776 = vadd.f32 0.0, %v4775
    %v4777 = vpop.f32.mrb[0].mxu0
    %v4778 = vadd.f32 0.0, %v4777
    %v4779 = vpop.f32.mrb[0].mxu0
    %v4780 = vadd.f32 0.0, %v4779
    %4781 = vdwg.mxu0
    %v4782 = vadd.f32 %v4043, %v4774
    %v4783 = vadd.f32 %v4045, %v4776
    %v4784 = vadd.f32 %v4047, %v4778
    %v4785 = vadd.f32 %v4049, %v4780
    %s4786 = scalar_lea.vmem %s15, 512
    %v4787 = vld [vmem:[%s4786] sm:$0xff]
    %v4788 = vld [vmem:[%s4786 + $0x8] sm:$0xff]
    %v4789 = vld [vmem:[%s4786 + $0x10] sm:$0xff]
    %v4790 = vld [vmem:[%s4786 + $0x18] sm:$0xff]
    %v4791 = vld [vmem:[%s4786 + $0x20] sm:$0xff]
    %v4792 = vld [vmem:[%s4786 + $0x28] sm:$0xff]
    %v4793 = vld [vmem:[%s4786 + $0x30] sm:$0xff]
    %v4794 = vld [vmem:[%s4786 + $0x38] sm:$0xff]
    %v4795 = vld [vmem:[%s4786 + $0x40] sm:$0xff]
    %v4796 = vld [vmem:[%s4786 + $0x48] sm:$0xff]
    %v4797 = vld [vmem:[%s4786 + $0x50] sm:$0xff]
    %v4798 = vld [vmem:[%s4786 + $0x58] sm:$0xff]
    %v4799 = vld [vmem:[%s4786 + $0x60] sm:$0xff]
    %v4800 = vld [vmem:[%s4786 + $0x68] sm:$0xff]
    %v4801 = vld [vmem:[%s4786 + $0x70] sm:$0xff]
    %v4802 = vld [vmem:[%s4786 + $0x78] sm:$0xff]
    %v4803 = vld [vmem:[%s4786 + $0x80] sm:$0xff]
    %v4804 = vld [vmem:[%s4786 + $0x88] sm:$0xff]
    %v4805 = vld [vmem:[%s4786 + $0x90] sm:$0xff]
    %v4806 = vld [vmem:[%s4786 + $0x98] sm:$0xff]
    %v4807 = vld [vmem:[%s4786 + $0xa0] sm:$0xff]
    %v4808 = vld [vmem:[%s4786 + $0xa8] sm:$0xff]
    %v4809 = vld [vmem:[%s4786 + $0xb0] sm:$0xff]
    %v4810 = vld [vmem:[%s4786 + $0xb8] sm:$0xff]
    %v4811 = vld [vmem:[%s4786 + $0xc0] sm:$0xff]
    %v4812 = vld [vmem:[%s4786 + $0xc8] sm:$0xff]
    %v4813 = vld [vmem:[%s4786 + $0xd0] sm:$0xff]
    %v4814 = vld [vmem:[%s4786 + $0xd8] sm:$0xff]
    %v4815 = vld [vmem:[%s4786 + $0xe0] sm:$0xff]
    %v4816 = vld [vmem:[%s4786 + $0xe8] sm:$0xff]
    %v4817 = vld [vmem:[%s4786 + $0xf0] sm:$0xff]
    %v4818 = vld [vmem:[%s4786 + $0xf8] sm:$0xff]
    %v4851 = vunpack.c.l.b16 %v4787
    %v4852 = vunpack.c.h.b16 %v4787
    %v4853 = vunpack.c.l.b16 %v4788
    %v4854 = vunpack.c.h.b16 %v4788
    %v4855 = vunpack.c.l.b16 %v4789
    %v4856 = vunpack.c.h.b16 %v4789
    %v4857 = vunpack.c.l.b16 %v4790
    %v4858 = vunpack.c.h.b16 %v4790
    %v4859 = vunpack.c.l.b16 %v4791
    %v4860 = vunpack.c.h.b16 %v4791
    %v4861 = vunpack.c.l.b16 %v4792
    %v4862 = vunpack.c.h.b16 %v4792
    %v4863 = vunpack.c.l.b16 %v4793
    %v4864 = vunpack.c.h.b16 %v4793
    %v4865 = vunpack.c.l.b16 %v4794
    %v4866 = vunpack.c.h.b16 %v4794
    %v4867 = vunpack.c.l.b16 %v4795
    %v4868 = vunpack.c.h.b16 %v4795
    %v4869 = vunpack.c.l.b16 %v4796
    %v4870 = vunpack.c.h.b16 %v4796
    %v4871 = vunpack.c.l.b16 %v4797
    %v4872 = vunpack.c.h.b16 %v4797
    %v4873 = vunpack.c.l.b16 %v4798
    %v4874 = vunpack.c.h.b16 %v4798
    %v4875 = vunpack.c.l.b16 %v4799
    %v4876 = vunpack.c.h.b16 %v4799
    %v4877 = vunpack.c.l.b16 %v4800
    %v4878 = vunpack.c.h.b16 %v4800
    %v4879 = vunpack.c.l.b16 %v4801
    %v4880 = vunpack.c.h.b16 %v4801
    %v4881 = vunpack.c.l.b16 %v4802
    %v4882 = vunpack.c.h.b16 %v4802
    %v4883 = vunpack.c.l.b16 %v4803
    %v4884 = vunpack.c.h.b16 %v4803
    %v4885 = vunpack.c.l.b16 %v4804
    %v4886 = vunpack.c.h.b16 %v4804
    %v4887 = vunpack.c.l.b16 %v4805
    %v4888 = vunpack.c.h.b16 %v4805
    %v4889 = vunpack.c.l.b16 %v4806
    %v4890 = vunpack.c.h.b16 %v4806
    %v4891 = vunpack.c.l.b16 %v4807
    %v4892 = vunpack.c.h.b16 %v4807
    %v4893 = vunpack.c.l.b16 %v4808
    %v4894 = vunpack.c.h.b16 %v4808
    %v4895 = vunpack.c.l.b16 %v4809
    %v4896 = vunpack.c.h.b16 %v4809
    %v4897 = vunpack.c.l.b16 %v4810
    %v4898 = vunpack.c.h.b16 %v4810
    %v4899 = vunpack.c.l.b16 %v4811
    %v4900 = vunpack.c.h.b16 %v4811
    %v4901 = vunpack.c.l.b16 %v4812
    %v4902 = vunpack.c.h.b16 %v4812
    %v4903 = vunpack.c.l.b16 %v4813
    %v4904 = vunpack.c.h.b16 %v4813
    %v4905 = vunpack.c.l.b16 %v4814
    %v4906 = vunpack.c.h.b16 %v4814
    %v4907 = vunpack.c.l.b16 %v4815
    %v4908 = vunpack.c.h.b16 %v4815
    %v4909 = vunpack.c.l.b16 %v4816
    %v4910 = vunpack.c.h.b16 %v4816
    %v4911 = vunpack.c.l.b16 %v4817
    %v4912 = vunpack.c.h.b16 %v4817
    %v4913 = vunpack.c.l.b16 %v4818
    %v4914 = vunpack.c.h.b16 %v4818
    %v4915 = vpack.c.b16 %v4853, %v4851
    %v4916 = vpack.c.b16 %v4854, %v4852
    %v4917 = vpack.c.b16 %v4857, %v4855
    %v4918 = vpack.c.b16 %v4858, %v4856
    %v4919 = vpack.c.b16 %v4861, %v4859
    %v4920 = vpack.c.b16 %v4862, %v4860
    %v4921 = vpack.c.b16 %v4865, %v4863
    %v4922 = vpack.c.b16 %v4866, %v4864
    %v4923 = vpack.c.b16 %v4869, %v4867
    %v4924 = vpack.c.b16 %v4870, %v4868
    %v4925 = vpack.c.b16 %v4873, %v4871
    %v4926 = vpack.c.b16 %v4874, %v4872
    %v4927 = vpack.c.b16 %v4877, %v4875
    %v4928 = vpack.c.b16 %v4878, %v4876
    %v4929 = vpack.c.b16 %v4881, %v4879
    %v4930 = vpack.c.b16 %v4882, %v4880
    %v4931 = vpack.c.b16 %v4885, %v4883
    %v4932 = vpack.c.b16 %v4886, %v4884
    %v4933 = vpack.c.b16 %v4889, %v4887
    %v4934 = vpack.c.b16 %v4890, %v4888
    %v4935 = vpack.c.b16 %v4893, %v4891
    %v4936 = vpack.c.b16 %v4894, %v4892
    %v4937 = vpack.c.b16 %v4897, %v4895
    %v4938 = vpack.c.b16 %v4898, %v4896
    %v4939 = vpack.c.b16 %v4901, %v4899
    %v4940 = vpack.c.b16 %v4902, %v4900
    %v4941 = vpack.c.b16 %v4905, %v4903
    %v4942 = vpack.c.b16 %v4906, %v4904
    %v4943 = vpack.c.b16 %v4909, %v4907
    %v4944 = vpack.c.b16 %v4910, %v4908
    %v4945 = vpack.c.b16 %v4913, %v4911
    %v4946 = vpack.c.b16 %v4914, %v4912
    %4979 = vmatprep.subr.bf16.mxu0 %v4916
    %4980 = vmatpush1.bf16.msra.mxu0 %v4915
    %4981 = vmatprep.subr.bf16.mxu0 %v4918
    %4982 = vmatpush1.bf16.msra.mxu0 %v4917
    %4983 = vmatprep.subr.bf16.mxu0 %v4920
    %4984 = vmatpush1.bf16.msra.mxu0 %v4919
    %4985 = vmatprep.subr.bf16.mxu0 %v4922
    %4986 = vmatpush1.bf16.msra.mxu0 %v4921
    %4987 = vmatprep.subr.bf16.mxu0 %v4924
    %4988 = vmatpush1.bf16.msra.mxu0 %v4923
    %4989 = vmatprep.subr.bf16.mxu0 %v4926
    %4990 = vmatpush1.bf16.msra.mxu0 %v4925
    %4991 = vmatprep.subr.bf16.mxu0 %v4928
    %4992 = vmatpush1.bf16.msra.mxu0 %v4927
    %4993 = vmatprep.subr.bf16.mxu0 %v4930
    %4994 = vmatpush1.bf16.msra.mxu0 %v4929
    %4995 = vmatprep.subr.bf16.mxu0 %v4932
    %4996 = vmatpush1.bf16.msra.mxu0 %v4931
    %4997 = vmatprep.subr.bf16.mxu0 %v4934
    %4998 = vmatpush1.bf16.msra.mxu0 %v4933
    %4999 = vmatprep.subr.bf16.mxu0 %v4936
    %5000 = vmatpush1.bf16.msra.mxu0 %v4935
    %5001 = vmatprep.subr.bf16.mxu0 %v4938
    %5002 = vmatpush1.bf16.msra.mxu0 %v4937
    %5003 = vmatprep.subr.bf16.mxu0 %v4940
    %5004 = vmatpush1.bf16.msra.mxu0 %v4939
    %5005 = vmatprep.subr.bf16.mxu0 %v4942
    %5006 = vmatpush1.bf16.msra.mxu0 %v4941
    %5007 = vmatprep.subr.bf16.mxu0 %v4944
    %5008 = vmatpush1.bf16.msra.mxu0 %v4943
    %5009 = vmatprep.subr.bf16.mxu0 %v4946
    %5010 = vmatpush1.bf16.msra.mxu0 %v4945
    %5011 = vmatprep.mubr.bf16.mxu0 %v4545
    %5012 = vmatmul.mubr.bf16.gmra.mrb[0].mxu0 %v4544
    %v5013 = vpop.f32.mrb[0].mxu0
    %v5014 = vadd.f32 0.0, %v5013
    %v5015 = vpop.f32.mrb[0].mxu0
    %v5016 = vadd.f32 0.0, %v5015
    %v5017 = vpop.f32.mrb[0].mxu0
    %v5018 = vadd.f32 0.0, %v5017
    %v5019 = vpop.f32.mrb[0].mxu0
    %v5020 = vadd.f32 0.0, %v5019
    %5021 = vdwg.mxu0
    %v5022 = vadd.f32 %v4482, %v5014
    %v5023 = vadd.f32 %v4484, %v5016
    %v5024 = vadd.f32 %v4486, %v5018
    %v5025 = vadd.f32 %v4488, %v5020
    %v5026 = vld [vmem:[%s14] sm:$0x3]
    %v5028 = vlaneseq
    %v5029 = vshrl.u32 %v5028, 7
    %v5030 = vsub.s32 0, %v5029
    %v5031 = vrot.slane %v5026, %v5030
    %v5032 = vlaneseq
    %v5033 = vshrl.u32 %v5032, 7
    %v5034 = vsub.s32 1, %v5033
    %v5035 = vrot.slane %v5026, %v5034
    %v5038 = vadd.f32 %v4782, %v5031
    %v5039 = vadd.f32 %v4783, %v5035
    %v5040 = vadd.f32 %v4784, %v5031
    %v5041 = vadd.f32 %v4785, %v5035
    %v5042 = vld [vmem:[%s16] sm:$0x3]
    %v5044 = vlaneseq
    %v5045 = vshrl.u32 %v5044, 7
    %v5046 = vsub.s32 0, %v5045
    %v5047 = vrot.slane %v5042, %v5046
    %v5048 = vlaneseq
    %v5049 = vshrl.u32 %v5048, 7
    %v5050 = vsub.s32 1, %v5049
    %v5051 = vrot.slane %v5042, %v5050
    %v5054 = vadd.f32 %v5022, %v5047
    %v5055 = vadd.f32 %v5023, %v5051
    %v5056 = vadd.f32 %v5024, %v5047
    %v5057 = vadd.f32 %v5025, %v5051
    %5058 = vst [vmem:[%s22] sm:$0xff] %v5038
    %5059 = vst.msk [vmem:[%s22 + $0x8] sm:$0xff] %vm3443, %v5039
    %5060 = vst [vmem:[%s22 + $0x10] sm:$0xff] %v5040
    %5061 = vst.msk [vmem:[%s22 + $0x18] sm:$0xff] %vm3443, %v5041
    %5062 = vst [vmem:[%s23] sm:$0xff] %v5054
    %5063 = vst.msk [vmem:[%s23 + $0x8] sm:$0xff] %vm118, %v5055
    %5064 = vst [vmem:[%s23 + $0x10] sm:$0xff] %v5056
    %5065 = vst.msk [vmem:[%s23 + $0x18] sm:$0xff] %vm118, %v5057
    %v5066 = vld [vmem:[%s17] sm:$0x1]
    %v5068 = vsel %vm3443, %v5066, 0
    %5070 = vmatprep.subr.bf16.mxu0 %v1656
    %5071 = vmatpush1.bf16.msra.mxu0 %v1655
    %5072 = vmatprep.subr.bf16.mxu0 0
    %5073 = vmatpush1.bf16.msra.mxu0 0
    %5074 = vmatprep.subr.bf16.mxu0 0
    %5075 = vmatpush1.bf16.msra.mxu0 0
    %5076 = vmatprep.subr.bf16.mxu0 0
    %5077 = vmatpush1.bf16.msra.mxu0 0
    %5078 = vmatprep.subr.bf16.mxu0 0
    %5079 = vmatpush1.bf16.msra.mxu0 0
    %5080 = vmatprep.subr.bf16.mxu0 0
    %5081 = vmatpush1.bf16.msra.mxu0 0
    %5082 = vmatprep.subr.bf16.mxu0 0
    %5083 = vmatpush1.bf16.msra.mxu0 0
    %5084 = vmatprep.subr.bf16.mxu0 0
    %5085 = vmatpush1.bf16.msra.mxu0 0
    %5086 = vmatprep.subr.bf16.mxu0 0
    %5087 = vmatpush1.bf16.msra.mxu0 0
    %5088 = vmatprep.subr.bf16.mxu0 0
    %5089 = vmatpush1.bf16.msra.mxu0 0
    %5090 = vmatprep.subr.bf16.mxu0 0
    %5091 = vmatpush1.bf16.msra.mxu0 0
    %5092 = vmatprep.subr.bf16.mxu0 0
    %5093 = vmatpush1.bf16.msra.mxu0 0
    %5094 = vmatprep.subr.bf16.mxu0 0
    %5095 = vmatpush1.bf16.msra.mxu0 0
    %5096 = vmatprep.subr.bf16.mxu0 0
    %5097 = vmatpush1.bf16.msra.mxu0 0
    %5098 = vmatprep.subr.bf16.mxu0 0
    %5099 = vmatpush1.bf16.msra.mxu0 0
    %5100 = vmatprep.subr.bf16.mxu0 0
    %5101 = vmatpush1.bf16.msra.mxu0 0
    %5102 = vmatprep.mubr.bf16.mxu0 0
    %5103 = vmatmul.mubr.bf16.gmra.mrb[0].mxu0 %v5068
    %v5104 = vpop.f32.mrb[0].mxu0
    %v5105 = vadd.f32 0.0, %v5104
    %v5106 = vpop.f32.mrb[0].mxu0
    %v5107 = vadd.f32 0.0, %v5106
    %v5108 = vpop.f32.mrb[0].mxu0
    %v5109 = vpop.f32.mrb[0].mxu0
    %5110 = vdwg.mxu0
    %v5111 = vpack.c.bf16 %v5105, %v5105
    %v5112 = vpack.c.bf16 %v5107, %v5107
    %v5113 = vld [vmem:[%s18] sm:$0xf]
    %v5114 = vld [vmem:[%s18 + $0x4] sm:$0xf]
    %v5115 = vld [vmem:[%s18 + $0x8] sm:$0xf]
    %v5116 = vld [vmem:[%s18 + $0xc] sm:$0xf]
    %v5117 = vld [vmem:[%s18 + $0x10] sm:$0xf]
    %v5118 = vld [vmem:[%s18 + $0x14] sm:$0xf]
    %v5119 = vld [vmem:[%s18 + $0x18] sm:$0xf]
    %v5120 = vld [vmem:[%s18 + $0x1c] sm:$0xf]
    %v5121 = vld [vmem:[%s18 + $0x20] sm:$0xf]
    %v5122 = vld [vmem:[%s18 + $0x24] sm:$0xf]
    %v5123 = vld [vmem:[%s18 + $0x28] sm:$0xf]
    %v5124 = vld [vmem:[%s18 + $0x2c] sm:$0xf]
    %v5125 = vld [vmem:[%s18 + $0x30] sm:$0xf]
    %v5126 = vld [vmem:[%s18 + $0x34] sm:$0xf]
    %v5127 = vld [vmem:[%s18 + $0x38] sm:$0xf]
    %v5128 = vld [vmem:[%s18 + $0x3c] sm:$0xf]
    %v5129 = vld [vmem:[%s18 + $0x40] sm:$0xf]
    %v5130 = vld [vmem:[%s18 + $0x44] sm:$0xf]
    %v5131 = vld [vmem:[%s18 + $0x48] sm:$0xf]
    %v5132 = vld [vmem:[%s18 + $0x4c] sm:$0xf]
    %v5133 = vld [vmem:[%s18 + $0x50] sm:$0xf]
    %v5134 = vld [vmem:[%s18 + $0x54] sm:$0xf]
    %v5135 = vld [vmem:[%s18 + $0x58] sm:$0xf]
    %v5136 = vld [vmem:[%s18 + $0x5c] sm:$0xf]
    %v5137 = vld [vmem:[%s18 + $0x60] sm:$0xf]
    %v5138 = vld [vmem:[%s18 + $0x64] sm:$0xf]
    %v5139 = vld [vmem:[%s18 + $0x68] sm:$0xf]
    %v5140 = vld [vmem:[%s18 + $0x6c] sm:$0xf]
    %v5141 = vld [vmem:[%s18 + $0x70] sm:$0xf]
    %v5142 = vld [vmem:[%s18 + $0x74] sm:$0xf]
    %v5143 = vld [vmem:[%s18 + $0x78] sm:$0xf]
    %v5144 = vld [vmem:[%s18 + $0x7c] sm:$0xf]
    %v5145 = vld [vmem:[%s19] sm:$0x1]
    %v5147 = vlaneseq
    %v5148 = vshrl.u32 %v5147, 7
    %v5149 = vsub.s32 0, %v5148
    %v5150 = vrot.slane %v5145, %v5149
    %v5184 = vunpack.c.l.b16 %v5113
    %v5185 = vunpack.c.l.b16 %v5114
    %v5186 = vunpack.c.l.b16 %v5115
    %v5187 = vunpack.c.l.b16 %v5116
    %v5188 = vunpack.c.l.b16 %v5117
    %v5189 = vunpack.c.l.b16 %v5118
    %v5190 = vunpack.c.l.b16 %v5119
    %v5191 = vunpack.c.l.b16 %v5120
    %v5192 = vunpack.c.l.b16 %v5121
    %v5193 = vunpack.c.l.b16 %v5122
    %v5194 = vunpack.c.l.b16 %v5123
    %v5195 = vunpack.c.l.b16 %v5124
    %v5196 = vunpack.c.l.b16 %v5125
    %v5197 = vunpack.c.l.b16 %v5126
    %v5198 = vunpack.c.l.b16 %v5127
    %v5199 = vunpack.c.l.b16 %v5128
    %v5200 = vunpack.c.l.b16 %v5129
    %v5201 = vunpack.c.l.b16 %v5130
    %v5202 = vunpack.c.l.b16 %v5131
    %v5203 = vunpack.c.l.b16 %v5132
    %v5204 = vunpack.c.l.b16 %v5133
    %v5205 = vunpack.c.l.b16 %v5134
    %v5206 = vunpack.c.l.b16 %v5135
    %v5207 = vunpack.c.l.b16 %v5136
    %v5208 = vunpack.c.l.b16 %v5137
    %v5209 = vunpack.c.l.b16 %v5138
    %v5210 = vunpack.c.l.b16 %v5139
    %v5211 = vunpack.c.l.b16 %v5140
    %v5212 = vunpack.c.l.b16 %v5141
    %v5213 = vunpack.c.l.b16 %v5142
    %v5214 = vunpack.c.l.b16 %v5143
    %v5215 = vunpack.c.l.b16 %v5144
    %v5216 = vpack.c.b16 %v5185, %v5184
    %v5217 = vpack.c.b16 %v5187, %v5186
    %v5218 = vpack.c.b16 %v5189, %v5188
    %v5219 = vpack.c.b16 %v5191, %v5190
    %v5220 = vpack.c.b16 %v5193, %v5192
    %v5221 = vpack.c.b16 %v5195, %v5194
    %v5222 = vpack.c.b16 %v5197, %v5196
    %v5223 = vpack.c.b16 %v5199, %v5198
    %v5224 = vpack.c.b16 %v5201, %v5200
    %v5225 = vpack.c.b16 %v5203, %v5202
    %v5226 = vpack.c.b16 %v5205, %v5204
    %v5227 = vpack.c.b16 %v5207, %v5206
    %v5228 = vpack.c.b16 %v5209, %v5208
    %v5229 = vpack.c.b16 %v5211, %v5210
    %v5230 = vpack.c.b16 %v5213, %v5212
    %v5231 = vpack.c.b16 %v5215, %v5214
    %5248 = vmatprep.subr.bf16.mxu0 0
    %5249 = vmatpush1.bf16.msra.mxu0 %v5216
    %5250 = vmatprep.subr.bf16.mxu0 0
    %5251 = vmatpush1.bf16.msra.mxu0 %v5217
    %5252 = vmatprep.subr.bf16.mxu0 0
    %5253 = vmatpush1.bf16.msra.mxu0 %v5218
    %5254 = vmatprep.subr.bf16.mxu0 0
    %5255 = vmatpush1.bf16.msra.mxu0 %v5219
    %5256 = vmatprep.subr.bf16.mxu0 0
    %5257 = vmatpush1.bf16.msra.mxu0 %v5220
    %5258 = vmatprep.subr.bf16.mxu0 0
    %5259 = vmatpush1.bf16.msra.mxu0 %v5221
    %5260 = vmatprep.subr.bf16.mxu0 0
    %5261 = vmatpush1.bf16.msra.mxu0 %v5222
    %5262 = vmatprep.subr.bf16.mxu0 0
    %5263 = vmatpush1.bf16.msra.mxu0 %v5223
    %5264 = vmatprep.subr.bf16.mxu0 0
    %5265 = vmatpush1.bf16.msra.mxu0 %v5224
    %5266 = vmatprep.subr.bf16.mxu0 0
    %5267 = vmatpush1.bf16.msra.mxu0 %v5225
    %5268 = vmatprep.subr.bf16.mxu0 0
    %5269 = vmatpush1.bf16.msra.mxu0 %v5226
    %5270 = vmatprep.subr.bf16.mxu0 0
    %5271 = vmatpush1.bf16.msra.mxu0 %v5227
    %5272 = vmatprep.subr.bf16.mxu0 0
    %5273 = vmatpush1.bf16.msra.mxu0 %v5228
    %5274 = vmatprep.subr.bf16.mxu0 0
    %5275 = vmatpush1.bf16.msra.mxu0 %v5229
    %5276 = vmatprep.subr.bf16.mxu0 0
    %5277 = vmatpush1.bf16.msra.mxu0 %v5230
    %5278 = vmatprep.subr.bf16.mxu0 0
    %5279 = vmatpush1.bf16.msra.mxu0 %v5231
    %5280 = vmatprep.mubr.bf16.mxu0 %v5112
    %5281 = vmatmul.mubr.bf16.gmra.mrb[0].mxu0 %v5111
    %v5282 = vpop.f32.mrb[0].mxu0
    %v5283 = vadd.f32 %v5150, %v5282
    %v5284 = vpop.f32.mrb[0].mxu0
    %v5285 = vpop.f32.mrb[0].mxu0
    %v5286 = vpop.f32.mrb[0].mxu0
    %5287 = vdwg.mxu0
    %vm5288 = vcmask 9216
    %5289 = vst.msk [vmem:[#allocation2] sm:$0x3] %vm5288, %v5283
    // Predicated region
    $region82: #{cfssd_forward.1} parent=1 // pred_check
      _
    $region83: #{cfssd_forward.1} parent=1 // pred_check_branch
      %5291 = sbr.rel (0) target = $region85
    $region84: #{cfssd_forward.1} parent=1 // pred_region
      _
    $region85: #{cfssd_forward.1} parent=1 // pred_fallthru
      _
    // Predicated region
    $region86: #{cfssd_forward.1} parent=1 // pred_check
      _
    $region87: #{cfssd_forward.1} parent=1 // pred_check_branch
      %5293 = sbr.rel (0) target = $region89
    $region88: #{cfssd_forward.1} parent=1 // pred_region
      _
    $region89: #{cfssd_forward.1} parent=1 // pred_fallthru
      _
    // Predicated region
    $region90: #{cfssd_forward.1} parent=1 // pred_check
      _
    $region91: #{cfssd_forward.1} parent=1 // pred_check_branch
      %5295 = sbr.rel (0) target = $region93
    $region92: #{cfssd_forward.1} parent=1 // pred_region
      _
    $region93: #{cfssd_forward.1} parent=1 // pred_fallthru
      _
    // Predicated region
    $region94: #{cfssd_forward.1} parent=1 // pred_check
      _
    $region95: #{cfssd_forward.1} parent=1 // pred_check_branch
      %5297 = sbr.rel (0) target = $region97
    $region96: #{cfssd_forward.1} parent=1 // pred_region
      _
    $region97: #{cfssd_forward.1} parent=1 // pred_fallthru
      _
    // Predicated region
    $region98: #{cfssd_forward.1} parent=1 // pred_check
      _
    $region99: #{cfssd_forward.1} parent=1 // pred_check_branch
      %5299 = sbr.rel (0) target = $region101
    $region100: #{cfssd_forward.1} parent=1 // pred_region
      %s5301 = ssub.s32 32, 32
      %5302 = vsyncadd [#allocation3], %s5301
      %s5304 = sshll.u32 [#allocation2], 4
      %s5305 = int_to_ptr.vmem [resolvable:$true] %s5304
      %5307 = dma.vmem_to_hbm [thread:$0]  %s5305, 32, %s24, [#allocation3]
    $region101: #{cfssd_forward.1} parent=1 // pred_fallthru
      _
    // Predicated region
    $region102: #{cfssd_forward.1} parent=1 // pred_check
      _
    $region103: #{cfssd_forward.1} parent=1 // pred_check_branch
      %5309 = sbr.rel (0) target = $region105
    $region104: #{cfssd_forward.1} parent=1 // pred_region
      _
    $region105: #{cfssd_forward.1} parent=1 // pred_fallthru
      _
    // Predicated region
    $region106: #{cfssd_forward.1} parent=1 // pred_check
      _
    $region107: #{cfssd_forward.1} parent=1 // pred_check_branch
      %5311 = sbr.rel (0) target = $region109
    $region108: #{cfssd_forward.1} parent=1 // pred_region
      _
    $region109: #{cfssd_forward.1} parent=1 // pred_fallthru
      _
    // Predicated region
    $region110: #{cfssd_forward.1} parent=1 // pred_check
      _
    $region111: #{cfssd_forward.1} parent=1 // pred_check_branch
      %5313 = sbr.rel (0) target = $region113
    $region112: #{cfssd_forward.1} parent=1 // pred_region
      _
    $region113: #{cfssd_forward.1} parent=1 // pred_fallthru
      _
    // Predicated region
    $region114: #{cfssd_forward.1} parent=1 // pred_check
      _
    $region115: #{cfssd_forward.1} parent=1 // pred_check_branch
      %5315 = sbr.rel (0) target = $region117
    $region116: #{cfssd_forward.1} parent=1 // pred_region
      _
    $region117: #{cfssd_forward.1} parent=1 // pred_fallthru
      _
    // Predicated region
    $region118: #{cfssd_forward.1} parent=1 // pred_check
      _
    $region119: #{cfssd_forward.1} parent=1 // pred_check_branch
      %5317 = sbr.rel (0) target = $region121
    $region120: #{cfssd_forward.1} parent=1 // pred_region
      %5318 = dma.done [#allocation3], 32
    $region121: #{cfssd_forward.1} parent=1 // pred_fallthru
      _
    %5319 = vsyncpa [#allocation3], 1

</llo_original>
